<compile_context>
chip_gen: v5e
topology: v5e:2x2
jax: 0.10.0
libtpu: 0.0.40
codegen_flags: <defaults>
</compile_context>

<pallas_src>
import functools

import numpy as np

import jax
import jax.numpy as jnp
from jax.experimental import pallas as pl
from jax.experimental.pallas import tpu as pltpu

LEAKY_SLOPE = 0.1
BN_EPS = 1e-5


# -----------------------------------------------------------------------------
# Fused Pallas kernel: all conv blocks + FC head for ONE sample per grid step.
# -----------------------------------------------------------------------------
def ribcage_fused_kernel(*refs, conv_dims, n_fc):
    """refs = [x, (Wconv, shift) * n_conv, (Wfc, bfc) * n_fc, out, yh_scr, act_scr].

    x:      (1, H0, W0*C0)        f32, planar [row, width*channel] layout
    Wconv:  (k, W*Cin, wc*Cout)   bf16 block-Toeplitz planar weights
    shift:  (1, wc*Cout)          f32 folded BN shift, tiled over width
    Wfc0:   (hp_last, wp*C, f0)   bf16 (flatten folded / pre-split by row)
    out:    (1, 1, 1)             f32 sigmoid output
    """
    n_conv = len(conv_dims)
    x_ref = refs[0]
    conv_refs = refs[1:1 + 2 * n_conv]
    fc_refs = refs[1 + 2 * n_conv:1 + 2 * n_conv + 2 * n_fc]
    o_ref = refs[1 + 2 * n_conv + 2 * n_fc]
    yh_ref, act_ref = refs[-2], refs[-1]

    act = x_ref[0].astype(jnp.float32)                       # (H0, W0*C0)

    for l, (H, W, Cin, Cout, k, hc, wc, hp, wp) in enumerate(conv_dims):
        w_ref = conv_refs[2 * l]
        s_ref = conv_refs[2 * l + 1]

        # ---- Conv2d(stride=1, pad=1, bias=False): k planar matmuls ---------
        # Width zero-padding is folded into the Toeplitz weights; height
        # padding is one explicit zero row above and below.
        zr = jnp.zeros((1, W * Cin), jnp.float32)
        a = jnp.concatenate([zr, act, zr], axis=0)            # (H+2, W*Cin)
        y = jnp.dot(a[0:hc, :].astype(jnp.bfloat16), w_ref[0],
                    preferred_element_type=jnp.float32)
        for ki in range(1, k):
            y = y + jnp.dot(a[ki:ki + hc, :].astype(jnp.bfloat16), w_ref[ki],
                            preferred_element_type=jnp.float32)

        # ---- BatchNorm(eval) shift + LeakyReLU (f32 epilogue; v5e-safe) ----
        y = y + s_ref[...]
        y = jnp.where(y > 0, y, LEAKY_SLOPE * y)              # (hc, wc*Cout)

        # ---- MaxPool2d(kernel=2, stride=2, padding=1) ----------------------
        # pooled (i, j) covers conv rows {2i-1, 2i} / cols {2j-1, 2j};
        # out-of-range taps are dropped (torch pads with -inf).
        # Height: row-pair maxima written straight into the yh scratch.
        for i in range(hp):
            r0, r1 = 2 * i - 1, 2 * i
            if r0 < 0:
                row = y[r1:r1 + 1, :]
            elif r1 >= hc:
                row = y[r0:r0 + 1, :]
            else:
                row = jnp.maximum(y[r0:r0 + 1, :], y[r1:r1 + 1, :])
            yh_ref[i:i + 1, 0:wc * Cout] = row
        # Width: channel-block maxima via scratch-ref loads/stores (keeps all
        # minor-dim addressing on refs; no value-level lane reshuffles).
        for j in range(wp):
            c0, c1 = 2 * j - 1, 2 * j
            if c0 < 0:
                blk = yh_ref[0:hp, c1 * Cout:(c1 + 1) * Cout]
            elif c1 >= wc:
                blk = yh_ref[0:hp, c0 * Cout:(c0 + 1) * Cout]
            else:
                blk = jnp.maximum(yh_ref[0:hp, c0 * Cout:(c0 + 1) * Cout],
                                  yh_ref[0:hp, c1 * Cout:(c1 + 1) * Cout])
            act_ref[0:hp, j * Cout:(j + 1) * Cout] = blk
        act = act_ref[0:hp, 0:wp * Cout]                      # (hp, wp*Cout)

    # ---- FC head: fc0 folds the NHWC flatten (weights pre-split by row) ----
    hp_last = conv_dims[-1][7]
    fw0_ref, fb0_ref = fc_refs[0], fc_refs[1]
    h = fb0_ref[...]                                          # (1, f0) f32
    for r in range(hp_last):
        h = h + jnp.dot(act[r:r + 1, :].astype(jnp.bfloat16), fw0_ref[r],
                        preferred_element_type=jnp.float32)
    if n_fc > 1:
        h = jnp.where(h > 0, h, LEAKY_SLOPE * h)
    else:
        h = jax.nn.sigmoid(h)
    for i in range(1, n_fc):
        fw = fc_refs[2 * i][...]
        fb = fc_refs[2 * i + 1][...]
        h = jnp.dot(h.astype(jnp.bfloat16), fw,
                    preferred_element_type=jnp.float32) + fb
        if i + 1 < n_fc:
            h = jnp.where(h > 0, h, LEAKY_SLOPE * h)
        else:
            h = jax.nn.sigmoid(h)
    o_ref[0] = h


# -----------------------------------------------------------------------------
# Wrapper: one pallas_call for the whole network, grid over batch.
# -----------------------------------------------------------------------------
def _resident_spec(arr):
    nd = arr.ndim
    return pl.BlockSpec(arr.shape, lambda i: (0,) * nd)


def ribcage_forward(prepped, image_nchw, mask_nchw):
    conv_dims = prepped["conv_dims"]
    conv_ws, conv_shifts = prepped["conv_ws"], prepped["conv_shifts"]
    fc_ws, fc_bs = prepped["fc_ws"], prepped["fc_bs"]
    n_fc = len(fc_ws)

    n = image_nchw.shape[0]
    # NCHW (PyTorch interface) -> NHWC -> planar (row, width*channel) rows.
    x_l = jnp.transpose(image_nchw, (0, 2, 3, 1))
    x_r = jnp.transpose(mask_nchw, (0, 2, 3, 1))
    x = jnp.concatenate([x_l, x_r], axis=-1)                  # (n, H, W, 2*cin)
    H, W, C0 = x.shape[1], x.shape[2], x.shape[3]
    x = x.reshape(n, H, W * C0).astype(jnp.float32)

    args = [x]
    in_specs = [pl.BlockSpec((1, H, W * C0), lambda i: (i, 0, 0))]
    for wmat, s in zip(conv_ws, conv_shifts):
        args += [wmat, s]
        in_specs += [_resident_spec(wmat), _resident_spec(s)]
    for wmat, b in zip(fc_ws, fc_bs):
        args += [wmat, b]
        in_specs += [_resident_spec(wmat), _resident_spec(b)]

    # Scratch sized for the largest layer.
    yh_rows = max(d[7] for d in conv_dims)
    yh_cols = max(d[6] * d[3] for d in conv_dims)
    act_cols = max(d[8] * d[3] for d in conv_dims)
    scratch_shapes = [pltpu.VMEM((yh_rows, yh_cols), jnp.float32),
                      pltpu.VMEM((yh_rows, act_cols), jnp.float32)]

    # Advisory cost estimate (MXU flops + operand bytes).
    flops = 0
    for (H_, W_, Cin_, Cout_, k_, hc_, wc_, hp_, wp_) in conv_dims:
        flops += 2 * k_ * hc_ * (W_ * Cin_) * (wc_ * Cout_)
    flops += 2 * sum(int(np.prod(wm.shape)) for wm in fc_ws)
    flops *= n
    bytes_accessed = sum(int(np.prod(a.shape)) * a.dtype.itemsize for a in args)
    bytes_accessed += n * 4

    out = pl.pallas_call(
        functools.partial(ribcage_fused_kernel, conv_dims=conv_dims, n_fc=n_fc),
        out_shape=jax.ShapeDtypeStruct((n, 1, 1), jnp.float32),
        grid=(n,),
        in_specs=in_specs,
        out_specs=pl.BlockSpec((1, 1, 1), lambda i: (i, 0, 0)),
        scratch_shapes=scratch_shapes,
        compiler_params=pltpu.CompilerParams(
            dimension_semantics=("parallel",),        # batch across v7x cores
            vmem_limit_bytes=32 * 1024 * 1024),
        cost_estimate=pl.CostEstimate(flops=int(flops),
                                      transcendentals=int(n),
                                      bytes_accessed=int(bytes_accessed)),
    )(*args)
    return out.reshape(n, 1)


# -----------------------------------------------------------------------------
# Parameter preparation (folding / Toeplitz packing / bf16 cast), done once.
# -----------------------------------------------------------------------------
def prepare_params(params, in_channels, input_image_shape, conv2d_kernel_sizes):
    conv_ws, conv_shifts, conv_dims = [], [], []
    cin = in_channels
    h, w = input_image_shape
    for idx, layer in enumerate(params["conv_layers"]):
        k = int(conv2d_kernel_sizes[idx])
        left, right, spine = layer["left"], layer["right"], layer["spine"]
        cout = int(left["w"].shape[-1])
        cin_tot = (2 if idx == 0 else 3) * cin
        cout_tot = 3 * cout

        def bn_fold(blk):
            scale = np.asarray(blk["gamma"]) / np.sqrt(np.asarray(blk["var"]) + BN_EPS)
            shift = np.asarray(blk["beta"]) - np.asarray(blk["mean"]) * scale
            return scale, shift

        (s_l, t_l), (s_r, t_r), (s_s, t_s) = bn_fold(left), bn_fold(right), bn_fold(spine)

        # Block-structured weight: cols [0:Cout] read only the left channel
        # block, [Cout:2Cout] only the right block, [2Cout:3Cout] all (spine).
        w_pack = np.zeros((k, k, cin_tot, cout_tot), np.float32)
        w_pack[:, :, 0:cin, 0:cout] = np.asarray(left["w"])
        w_pack[:, :, cin:2 * cin, cout:2 * cout] = np.asarray(right["w"])
        w_pack[:, :, :, 2 * cout:] = np.asarray(spine["w"])
        scale = np.concatenate([s_l, s_r, s_s])
        shift = np.concatenate([t_l, t_r, t_s])
        w_pack = w_pack * scale[None, None, None, :]          # fold BN scale

        hc, wc = h - k + 3, w - k + 3                          # conv out (pad=1)
        hp, wp = hc // 2 + 1, wc // 2 + 1                      # maxpool(2,2,pad=1)

        # Planar block-Toeplitz weights, one matrix per kernel row ki; the
        # width zero-padding (pad=1) is folded in by dropping out-of-range taps.
        wt = np.zeros((k, w, cin_tot, wc, cout_tot), np.float32)
        for j in range(wc):
            for kj in range(k):
                jw = j + kj - 1
                if 0 <= jw < w:
                    wt[:, jw, :, j, :] = w_pack[:, kj, :, :]
        wt = wt.reshape(k, w * cin_tot, wc * cout_tot)

        conv_ws.append(jnp.asarray(wt, jnp.bfloat16))
        conv_shifts.append(jnp.asarray(
            np.tile(shift, wc).reshape(1, wc * cout_tot), jnp.float32))
        conv_dims.append((h, w, cin_tot, cout_tot, k, hc, wc, hp, wp))

        cin = cout
        h, w = hp, wp

    c_last = 3 * cin
    hp_last, wp_last = h, w
    flat = c_last * hp_last * wp_last

    fc_ws, fc_bs = [], []
    for i, fc in enumerate(params["fc_layers"]):
        wmat = np.asarray(fc["w"], np.float32)
        if i == 0:
            assert wmat.shape[0] == flat
            f0 = wmat.shape[1]
            # torch NCHW flatten (c, h, w) -> planar NHWC flatten (h, w, c),
            # then split rows by pooled height so the kernel never reshapes.
            wmat = (wmat.reshape(c_last, hp_last, wp_last, f0)
                        .transpose(1, 2, 0, 3)
                        .reshape(hp_last, wp_last * c_last, f0))
        fc_ws.append(jnp.asarray(wmat, jnp.bfloat16))
        fc_bs.append(jnp.asarray(np.asarray(fc["b"], np.float32).reshape(1, -1)))

    return {"conv_ws": conv_ws, "conv_shifts": conv_shifts,
            "conv_dims": tuple(conv_dims), "fc_ws": fc_ws, "fc_bs": fc_bs}


# -----------------------------------------------------------------------------
# Deterministic synthetic parameters (mirrors the module's shapes).
# -----------------------------------------------------------------------------
def _init_conv_block(key, cin, cout, k):
    kw, kg, kb, km, kv = jax.random.split(key, 5)
    fan_in = float(k * k * cin)
    return {
        "w": jax.random.normal(kw, (k, k, cin, cout), jnp.float32) / jnp.sqrt(fan_in),
        "gamma": 1.0 + 0.1 * jax.random.normal(kg, (cout,), jnp.float32),
        "beta": 0.1 * jax.random.normal(kb, (cout,), jnp.float32),
        "mean": 0.1 * jax.random.normal(km, (cout,), jnp.float32),
        "var": 1.0 + 0.1 * jax.random.uniform(kv, (cout,), jnp.float32),
    }


def _init_fc(key, fin, fout):
    kw, kb = jax.random.split(key)
    return {
        "w": jax.random.normal(kw, (fin, fout), jnp.float32) / jnp.sqrt(float(fin)),
        "b": 0.01 * jax.random.normal(kb, (1, fout), jnp.float32),
    }


def init_ribcage(key, in_channels, input_image_shape, conv2d_out_channels,
                 conv2d_kernel_sizes, fc_out_features):
    conv_layers = []
    in_ch = in_channels
    for idx, (oc, k) in enumerate(zip(conv2d_out_channels, conv2d_kernel_sizes)):
        key, kl, kr, ks = jax.random.split(key, 4)
        spine_in = 2 * in_ch if idx == 0 else 3 * in_ch
        conv_layers.append({
            "left": _init_conv_block(kl, in_ch, oc, k),
            "right": _init_conv_block(kr, in_ch, oc, k),
            "spine": _init_conv_block(ks, spine_in, oc, k),
        })
        in_ch = oc

    # flat_channels computed analytically (torch does a dummy forward instead).
    h, w = input_image_shape
    for k in conv2d_kernel_sizes:
        h = (h + 2 - k + 1) // 2 + 1
        w = (w + 2 - k + 1) // 2 + 1
    flat_channels = 3 * conv2d_out_channels[-1] * h * w

    fc_layers = []
    fin = flat_channels
    for fout in fc_out_features:
        key, kf = jax.random.split(key)
        fc_layers.append(_init_fc(kf, fin, fout))
        fin = fout
    key, kf = jax.random.split(key)
    fc_layers.append(_init_fc(kf, fin, 1))                    # final Linear -> 1

    return {"conv_layers": conv_layers, "fc_layers": fc_layers}


# -----------------------------------------------------------------------------
if __name__ == "__main__":
    key = jax.random.PRNGKey(0)
    kp, kimg, kmask = jax.random.split(key, 3)

    # Small, forward-consistent configuration.
    batch = 2
    in_channels = 2
    image_hw = (16, 16)
    conv2d_out_channels = (8, 8, 16)
    conv2d_kernel_sizes = (5, 5, 5)
    fc_out_features = (32, 64)

    params = init_ribcage(kp, in_channels, image_hw, conv2d_out_channels,
                          conv2d_kernel_sizes, fc_out_features)
    prepped = prepare_params(params, in_channels, image_hw, conv2d_kernel_sizes)

    image = jax.random.normal(kimg, (batch, in_channels, *image_hw), jnp.float32)
    mask = (jax.random.uniform(kmask, (batch, in_channels, *image_hw)) > 0.5
            ).astype(jnp.float32)

    fwd = jax.jit(functools.partial(ribcage_forward, prepped))
    out = jax.block_until_ready(fwd(image, mask))

    assert out.shape == (batch, 1), out.shape
    assert bool(jnp.all(jnp.isfinite(out)))
    assert bool(jnp.all((out >= 0.0) & (out <= 1.0)))
    print("KERNEL_OK")
</pallas_src>

<mosaic_0001>
module attributes {stable_mosaic.version = 11 : i64} {
  func.func @ribcage_fused_kernel(%arg0: i32, %arg1: memref<1x16x64xf32, #tpu.memory_space<vmem>>, %arg2: memref<5x64x336xbf16, #tpu.memory_space<vmem>>, %arg3: memref<1x336xf32, #tpu.memory_space<vmem>>, %arg4: memref<5x192x144xbf16, #tpu.memory_space<vmem>>, %arg5: memref<1x144xf32, #tpu.memory_space<vmem>>, %arg6: memref<5x96x96xbf16, #tpu.memory_space<vmem>>, %arg7: memref<1x96xf32, #tpu.memory_space<vmem>>, %arg8: memref<2x96x32xbf16, #tpu.memory_space<vmem>>, %arg9: memref<1x32xf32, #tpu.memory_space<vmem>>, %arg10: memref<32x64xbf16, #tpu.memory_space<vmem>>, %arg11: memref<1x64xf32, #tpu.memory_space<vmem>>, %arg12: memref<64x1xbf16, #tpu.memory_space<vmem>>, %arg13: memref<1x1xf32, #tpu.memory_space<vmem>>, %arg14: memref<1x1x1xf32, #tpu.memory_space<vmem>>, %arg15: memref<8x336xf32, #tpu.memory_space<vmem>>, %arg16: memref<8x192xf32, #tpu.memory_space<vmem>>) attributes {dimension_semantics = [#tpu.dimension_semantics<parallel>], iteration_bounds = array<i64: 2>, scalar_prefetch = 0 : i64, scratch_operands = 2 : i64, tpu.core_type = #tpu.core_type<tc>, window_params = [{transform_indices = @transform_0, window_bounds = array<i64: 1, 16, 64>}, {pipeline_mode = #tpu.pipeline_mode<synchronous>, transform_indices = @transform_1, window_bounds = array<i64: 5, 64, 336>}, {pipeline_mode = #tpu.pipeline_mode<synchronous>, transform_indices = @transform_2, window_bounds = array<i64: 1, 336>}, {pipeline_mode = #tpu.pipeline_mode<synchronous>, transform_indices = @transform_3, window_bounds = array<i64: 5, 192, 144>}, {pipeline_mode = #tpu.pipeline_mode<synchronous>, transform_indices = @transform_4, window_bounds = array<i64: 1, 144>}, {pipeline_mode = #tpu.pipeline_mode<synchronous>, transform_indices = @transform_5, window_bounds = array<i64: 5, 96, 96>}, {pipeline_mode = #tpu.pipeline_mode<synchronous>, transform_indices = @transform_6, window_bounds = array<i64: 1, 96>}, {pipeline_mode = #tpu.pipeline_mode<synchronous>, transform_indices = @transform_7, window_bounds = array<i64: 2, 96, 32>}, {pipeline_mode = #tpu.pipeline_mode<synchronous>, transform_indices = @transform_8, window_bounds = array<i64: 1, 32>}, {pipeline_mode = #tpu.pipeline_mode<synchronous>, transform_indices = @transform_9, window_bounds = array<i64: 32, 64>}, {pipeline_mode = #tpu.pipeline_mode<synchronous>, transform_indices = @transform_10, window_bounds = array<i64: 1, 64>}, {pipeline_mode = #tpu.pipeline_mode<synchronous>, transform_indices = @transform_11, window_bounds = array<i64: 64, 1>}, {pipeline_mode = #tpu.pipeline_mode<synchronous>, transform_indices = @transform_12, window_bounds = array<i64: 1, 1>}, {transform_indices = @transform_13, window_bounds = array<i64: 1, 1, 1>}]} {
    %c0 = arith.constant 0 : index
    %c0_0 = arith.constant 0 : index
    %c0_1 = arith.constant 0 : index
    %0 = vector.load %arg1[%c0, %c0_0, %c0_1] : memref<1x16x64xf32, #tpu.memory_space<vmem>>, vector<1x16x64xf32>
    %1 = vector.shape_cast %0 : vector<1x16x64xf32> to vector<16x64xf32>
    %cst = arith.constant 0.000000e+00 : f32
    %2 = vector.broadcast %cst : f32 to vector<1x64xf32>
    %3 = tpu.concatenate %2, %1, %2 in 0 : vector<1x64xf32>, vector<16x64xf32>, vector<1x64xf32> -> vector<18x64xf32>
    %4 = vector.extract_strided_slice %3 {offsets = [0, 0], sizes = [14, 64], strides = [1, 1]} : vector<18x64xf32> to vector<14x64xf32>
    %5 = arith.truncf %4 : vector<14x64xf32> to vector<14x64xbf16>
    %c0_2 = arith.constant 0 : index
    %c0_3 = arith.constant 0 : index
    %c0_4 = arith.constant 0 : index
    %6 = vector.load %arg2[%c0_2, %c0_3, %c0_4] : memref<5x64x336xbf16, #tpu.memory_space<vmem>>, vector<1x64x336xbf16>
    %7 = vector.shape_cast %6 : vector<1x64x336xbf16> to vector<64x336xbf16>
    %cst_5 = arith.constant dense<0.000000e+00> : vector<14x336xf32>
    %8 = tpu.matmul %5, %7, %cst_5 {dimension_numbers = #tpu.dot_dimension_numbers<[1], [0], [0], [1], [0, 0, 1, 1], [], []>} : vector<14x64xbf16>, vector<64x336xbf16>, vector<14x336xf32> -> vector<14x336xf32>
    %9 = vector.extract_strided_slice %3 {offsets = [1, 0], sizes = [14, 64], strides = [1, 1]} : vector<18x64xf32> to vector<14x64xf32>
    %10 = arith.truncf %9 : vector<14x64xf32> to vector<14x64xbf16>
    %c1 = arith.constant 1 : index
    %c0_6 = arith.constant 0 : index
    %c0_7 = arith.constant 0 : index
    %11 = vector.load %arg2[%c1, %c0_6, %c0_7] : memref<5x64x336xbf16, #tpu.memory_space<vmem>>, vector<1x64x336xbf16>
    %12 = vector.shape_cast %11 : vector<1x64x336xbf16> to vector<64x336xbf16>
    %cst_8 = arith.constant dense<0.000000e+00> : vector<14x336xf32>
    %13 = tpu.matmul %10, %12, %cst_8 {dimension_numbers = #tpu.dot_dimension_numbers<[1], [0], [0], [1], [0, 0, 1, 1], [], []>} : vector<14x64xbf16>, vector<64x336xbf16>, vector<14x336xf32> -> vector<14x336xf32>
    %14 = arith.addf %8, %13 : vector<14x336xf32>
    %15 = vector.extract_strided_slice %3 {offsets = [2, 0], sizes = [14, 64], strides = [1, 1]} : vector<18x64xf32> to vector<14x64xf32>
    %16 = arith.truncf %15 : vector<14x64xf32> to vector<14x64xbf16>
    %c2 = arith.constant 2 : index
    %c0_9 = arith.constant 0 : index
    %c0_10 = arith.constant 0 : index
    %17 = vector.load %arg2[%c2, %c0_9, %c0_10] : memref<5x64x336xbf16, #tpu.memory_space<vmem>>, vector<1x64x336xbf16>
    %18 = vector.shape_cast %17 : vector<1x64x336xbf16> to vector<64x336xbf16>
    %cst_11 = arith.constant dense<0.000000e+00> : vector<14x336xf32>
    %19 = tpu.matmul %16, %18, %cst_11 {dimension_numbers = #tpu.dot_dimension_numbers<[1], [0], [0], [1], [0, 0, 1, 1], [], []>} : vector<14x64xbf16>, vector<64x336xbf16>, vector<14x336xf32> -> vector<14x336xf32>
    %20 = arith.addf %14, %19 : vector<14x336xf32>
    %21 = vector.extract_strided_slice %3 {offsets = [3, 0], sizes = [14, 64], strides = [1, 1]} : vector<18x64xf32> to vector<14x64xf32>
    %22 = arith.truncf %21 : vector<14x64xf32> to vector<14x64xbf16>
    %c3 = arith.constant 3 : index
    %c0_12 = arith.constant 0 : index
    %c0_13 = arith.constant 0 : index
    %23 = vector.load %arg2[%c3, %c0_12, %c0_13] : memref<5x64x336xbf16, #tpu.memory_space<vmem>>, vector<1x64x336xbf16>
    %24 = vector.shape_cast %23 : vector<1x64x336xbf16> to vector<64x336xbf16>
    %cst_14 = arith.constant dense<0.000000e+00> : vector<14x336xf32>
    %25 = tpu.matmul %22, %24, %cst_14 {dimension_numbers = #tpu.dot_dimension_numbers<[1], [0], [0], [1], [0, 0, 1, 1], [], []>} : vector<14x64xbf16>, vector<64x336xbf16>, vector<14x336xf32> -> vector<14x336xf32>
    %26 = arith.addf %20, %25 : vector<14x336xf32>
    %27 = vector.extract_strided_slice %3 {offsets = [4, 0], sizes = [14, 64], strides = [1, 1]} : vector<18x64xf32> to vector<14x64xf32>
    %28 = arith.truncf %27 : vector<14x64xf32> to vector<14x64xbf16>
    %c4 = arith.constant 4 : index
    %c0_15 = arith.constant 0 : index
    %c0_16 = arith.constant 0 : index
    %29 = vector.load %arg2[%c4, %c0_15, %c0_16] : memref<5x64x336xbf16, #tpu.memory_space<vmem>>, vector<1x64x336xbf16>
    %30 = vector.shape_cast %29 : vector<1x64x336xbf16> to vector<64x336xbf16>
    %cst_17 = arith.constant dense<0.000000e+00> : vector<14x336xf32>
    %31 = tpu.matmul %28, %30, %cst_17 {dimension_numbers = #tpu.dot_dimension_numbers<[1], [0], [0], [1], [0, 0, 1, 1], [], []>} : vector<14x64xbf16>, vector<64x336xbf16>, vector<14x336xf32> -> vector<14x336xf32>
    %32 = arith.addf %26, %31 : vector<14x336xf32>
    %c0_18 = arith.constant 0 : index
    %c0_19 = arith.constant 0 : index
    %33 = vector.load %arg3[%c0_18, %c0_19] : memref<1x336xf32, #tpu.memory_space<vmem>>, vector<1x336xf32>
    %34 = vector.broadcast %33 : vector<1x336xf32> to vector<14x336xf32>
    %35 = arith.addf %32, %34 : vector<14x336xf32>
    %cst_20 = arith.constant 0.000000e+00 : f32
    %36 = vector.broadcast %cst_20 : f32 to vector<14x336xf32>
    %37 = arith.cmpf ogt, %35, %36 : vector<14x336xf32>
    %cst_21 = arith.constant 1.000000e-01 : f32
    %38 = vector.broadcast %cst_21 : f32 to vector<14x336xf32>
    %39 = arith.mulf %38, %35 : vector<14x336xf32>
    %40 = arith.select %37, %35, %39 : vector<14x336xi1>, vector<14x336xf32>
    %41 = vector.extract_strided_slice %40 {offsets = [0, 0], sizes = [1, 336], strides = [1, 1]} : vector<14x336xf32> to vector<1x336xf32>
    %c0_22 = arith.constant 0 : index
    %c0_23 = arith.constant 0 : index
    %42 = vector.load %arg15[%c0_22, %c0_23] : memref<8x336xf32, #tpu.memory_space<vmem>>, vector<1x336xf32>
    tpu.vector_store %arg15[%c0_22, %c0_23], %41 {strides = array<i32>} : memref<8x336xf32, #tpu.memory_space<vmem>>, vector<1x336xf32>,
    %43 = vector.extract_strided_slice %40 {offsets = [1, 0], sizes = [1, 336], strides = [1, 1]} : vector<14x336xf32> to vector<1x336xf32>
    %44 = vector.extract_strided_slice %40 {offsets = [2, 0], sizes = [1, 336], strides = [1, 1]} : vector<14x336xf32> to vector<1x336xf32>
    %45 = arith.maximumf %43, %44 : vector<1x336xf32>
    %c1_24 = arith.constant 1 : index
    %c0_25 = arith.constant 0 : index
    %46 = vector.load %arg15[%c1_24, %c0_25] : memref<8x336xf32, #tpu.memory_space<vmem>>, vector<1x336xf32>
    tpu.vector_store %arg15[%c1_24, %c0_25], %45 {strides = array<i32>} : memref<8x336xf32, #tpu.memory_space<vmem>>, vector<1x336xf32>,
    %47 = vector.extract_strided_slice %40 {offsets = [3, 0], sizes = [1, 336], strides = [1, 1]} : vector<14x336xf32> to vector<1x336xf32>
    %48 = vector.extract_strided_slice %40 {offsets = [4, 0], sizes = [1, 336], strides = [1, 1]} : vector<14x336xf32> to vector<1x336xf32>
    %49 = arith.maximumf %47, %48 : vector<1x336xf32>
    %c2_26 = arith.constant 2 : index
    %c0_27 = arith.constant 0 : index
    %50 = vector.load %arg15[%c2_26, %c0_27] : memref<8x336xf32, #tpu.memory_space<vmem>>, vector<1x336xf32>
    tpu.vector_store %arg15[%c2_26, %c0_27], %49 {strides = array<i32>} : memref<8x336xf32, #tpu.memory_space<vmem>>, vector<1x336xf32>,
    %51 = vector.extract_strided_slice %40 {offsets = [5, 0], sizes = [1, 336], strides = [1, 1]} : vector<14x336xf32> to vector<1x336xf32>
    %52 = vector.extract_strided_slice %40 {offsets = [6, 0], sizes = [1, 336], strides = [1, 1]} : vector<14x336xf32> to vector<1x336xf32>
    %53 = arith.maximumf %51, %52 : vector<1x336xf32>
    %c3_28 = arith.constant 3 : index
    %c0_29 = arith.constant 0 : index
    %54 = vector.load %arg15[%c3_28, %c0_29] : memref<8x336xf32, #tpu.memory_space<vmem>>, vector<1x336xf32>
    tpu.vector_store %arg15[%c3_28, %c0_29], %53 {strides = array<i32>} : memref<8x336xf32, #tpu.memory_space<vmem>>, vector<1x336xf32>,
    %55 = vector.extract_strided_slice %40 {offsets = [7, 0], sizes = [1, 336], strides = [1, 1]} : vector<14x336xf32> to vector<1x336xf32>
    %56 = vector.extract_strided_slice %40 {offsets = [8, 0], sizes = [1, 336], strides = [1, 1]} : vector<14x336xf32> to vector<1x336xf32>
    %57 = arith.maximumf %55, %56 : vector<1x336xf32>
    %c4_30 = arith.constant 4 : index
    %c0_31 = arith.constant 0 : index
    %58 = vector.load %arg15[%c4_30, %c0_31] : memref<8x336xf32, #tpu.memory_space<vmem>>, vector<1x336xf32>
    tpu.vector_store %arg15[%c4_30, %c0_31], %57 {strides = array<i32>} : memref<8x336xf32, #tpu.memory_space<vmem>>, vector<1x336xf32>,
    %59 = vector.extract_strided_slice %40 {offsets = [9, 0], sizes = [1, 336], strides = [1, 1]} : vector<14x336xf32> to vector<1x336xf32>
    %60 = vector.extract_strided_slice %40 {offsets = [10, 0], sizes = [1, 336], strides = [1, 1]} : vector<14x336xf32> to vector<1x336xf32>
    %61 = arith.maximumf %59, %60 : vector<1x336xf32>
    %c5 = arith.constant 5 : index
    %c0_32 = arith.constant 0 : index
    %62 = vector.load %arg15[%c5, %c0_32] : memref<8x336xf32, #tpu.memory_space<vmem>>, vector<1x336xf32>
    tpu.vector_store %arg15[%c5, %c0_32], %61 {strides = array<i32>} : memref<8x336xf32, #tpu.memory_space<vmem>>, vector<1x336xf32>,
    %63 = vector.extract_strided_slice %40 {offsets = [11, 0], sizes = [1, 336], strides = [1, 1]} : vector<14x336xf32> to vector<1x336xf32>
    %64 = vector.extract_strided_slice %40 {offsets = [12, 0], sizes = [1, 336], strides = [1, 1]} : vector<14x336xf32> to vector<1x336xf32>
    %65 = arith.maximumf %63, %64 : vector<1x336xf32>
    %c6 = arith.constant 6 : index
    %c0_33 = arith.constant 0 : index
    %66 = vector.load %arg15[%c6, %c0_33] : memref<8x336xf32, #tpu.memory_space<vmem>>, vector<1x336xf32>
    tpu.vector_store %arg15[%c6, %c0_33], %65 {strides = array<i32>} : memref<8x336xf32, #tpu.memory_space<vmem>>, vector<1x336xf32>,
    %67 = vector.extract_strided_slice %40 {offsets = [13, 0], sizes = [1, 336], strides = [1, 1]} : vector<14x336xf32> to vector<1x336xf32>
    %c7 = arith.constant 7 : index
    %c0_34 = arith.constant 0 : index
    %68 = vector.load %arg15[%c7, %c0_34] : memref<8x336xf32, #tpu.memory_space<vmem>>, vector<1x336xf32>
    tpu.vector_store %arg15[%c7, %c0_34], %67 {strides = array<i32>} : memref<8x336xf32, #tpu.memory_space<vmem>>, vector<1x336xf32>,
    %c0_35 = arith.constant 0 : index
    %c0_36 = arith.constant 0 : index
    %69 = vector.load %arg15[%c0_35, %c0_36] : memref<8x336xf32, #tpu.memory_space<vmem>>, vector<8x24xf32>
    %c0_37 = arith.constant 0 : index
    %c0_38 = arith.constant 0 : index
    %70 = vector.load %arg16[%c0_37, %c0_38] : memref<8x192xf32, #tpu.memory_space<vmem>>, vector<8x24xf32>
    tpu.vector_store %arg16[%c0_37, %c0_38], %69 {strides = array<i32>} : memref<8x192xf32, #tpu.memory_space<vmem>>, vector<8x24xf32>,
    %c0_39 = arith.constant 0 : index
    %c24 = arith.constant 24 : index
    %71 = vector.load %arg15[%c0_39, %c24] : memref<8x336xf32, #tpu.memory_space<vmem>>, vector<8x24xf32>
    %c0_40 = arith.constant 0 : index
    %c48 = arith.constant 48 : index
    %72 = vector.load %arg15[%c0_40, %c48] : memref<8x336xf32, #tpu.memory_space<vmem>>, vector<8x24xf32>
    %73 = arith.maximumf %71, %72 : vector<8x24xf32>
    %c0_41 = arith.constant 0 : index
    %c24_42 = arith.constant 24 : index
    %74 = vector.load %arg16[%c0_41, %c24_42] : memref<8x192xf32, #tpu.memory_space<vmem>>, vector<8x24xf32>
    tpu.vector_store %arg16[%c0_41, %c24_42], %73 {strides = array<i32>} : memref<8x192xf32, #tpu.memory_space<vmem>>, vector<8x24xf32>,
    %c0_43 = arith.constant 0 : index
    %c72 = arith.constant 72 : index
    %75 = vector.load %arg15[%c0_43, %c72] : memref<8x336xf32, #tpu.memory_space<vmem>>, vector<8x24xf32>
    %c0_44 = arith.constant 0 : index
    %c96 = arith.constant 96 : index
    %76 = vector.load %arg15[%c0_44, %c96] : memref<8x336xf32, #tpu.memory_space<vmem>>, vector<8x24xf32>
    %77 = arith.maximumf %75, %76 : vector<8x24xf32>
    %c0_45 = arith.constant 0 : index
    %c48_46 = arith.constant 48 : index
    %78 = vector.load %arg16[%c0_45, %c48_46] : memref<8x192xf32, #tpu.memory_space<vmem>>, vector<8x24xf32>
    tpu.vector_store %arg16[%c0_45, %c48_46], %77 {strides = array<i32>} : memref<8x192xf32, #tpu.memory_space<vmem>>, vector<8x24xf32>,
    %c0_47 = arith.constant 0 : index
    %c120 = arith.constant 120 : index
    %79 = vector.load %arg15[%c0_47, %c120] : memref<8x336xf32, #tpu.memory_space<vmem>>, vector<8x24xf32>
    %c0_48 = arith.constant 0 : index
    %c144 = arith.constant 144 : index
    %80 = vector.load %arg15[%c0_48, %c144] : memref<8x336xf32, #tpu.memory_space<vmem>>, vector<8x24xf32>
    %81 = arith.maximumf %79, %80 : vector<8x24xf32>
    %c0_49 = arith.constant 0 : index
    %c72_50 = arith.constant 72 : index
    %82 = vector.load %arg16[%c0_49, %c72_50] : memref<8x192xf32, #tpu.memory_space<vmem>>, vector<8x24xf32>
    tpu.vector_store %arg16[%c0_49, %c72_50], %81 {strides = array<i32>} : memref<8x192xf32, #tpu.memory_space<vmem>>, vector<8x24xf32>,
    %c0_51 = arith.constant 0 : index
    %c168 = arith.constant 168 : index
    %83 = vector.load %arg15[%c0_51, %c168] : memref<8x336xf32, #tpu.memory_space<vmem>>, vector<8x24xf32>
    %c0_52 = arith.constant 0 : index
    %c192 = arith.constant 192 : index
    %84 = vector.load %arg15[%c0_52, %c192] : memref<8x336xf32, #tpu.memory_space<vmem>>, vector<8x24xf32>
    %85 = arith.maximumf %83, %84 : vector<8x24xf32>
    %c0_53 = arith.constant 0 : index
    %c96_54 = arith.constant 96 : index
    %86 = vector.load %arg16[%c0_53, %c96_54] : memref<8x192xf32, #tpu.memory_space<vmem>>, vector<8x24xf32>
    tpu.vector_store %arg16[%c0_53, %c96_54], %85 {strides = array<i32>} : memref<8x192xf32, #tpu.memory_space<vmem>>, vector<8x24xf32>,
    %c0_55 = arith.constant 0 : index
    %c216 = arith.constant 216 : index
    %87 = vector.load %arg15[%c0_55, %c216] : memref<8x336xf32, #tpu.memory_space<vmem>>, vector<8x24xf32>
    %c0_56 = arith.constant 0 : index
    %c240 = arith.constant 240 : index
    %88 = vector.load %arg15[%c0_56, %c240] : memref<8x336xf32, #tpu.memory_space<vmem>>, vector<8x24xf32>
    %89 = arith.maximumf %87, %88 : vector<8x24xf32>
    %c0_57 = arith.constant 0 : index
    %c120_58 = arith.constant 120 : index
    %90 = vector.load %arg16[%c0_57, %c120_58] : memref<8x192xf32, #tpu.memory_space<vmem>>, vector<8x24xf32>
    tpu.vector_store %arg16[%c0_57, %c120_58], %89 {strides = array<i32>} : memref<8x192xf32, #tpu.memory_space<vmem>>, vector<8x24xf32>,
    %c0_59 = arith.constant 0 : index
    %c264 = arith.constant 264 : index
    %91 = vector.load %arg15[%c0_59, %c264] : memref<8x336xf32, #tpu.memory_space<vmem>>, vector<8x24xf32>
    %c0_60 = arith.constant 0 : index
    %c288 = arith.constant 288 : index
    %92 = vector.load %arg15[%c0_60, %c288] : memref<8x336xf32, #tpu.memory_space<vmem>>, vector<8x24xf32>
    %93 = arith.maximumf %91, %92 : vector<8x24xf32>
    %c0_61 = arith.constant 0 : index
    %c144_62 = arith.constant 144 : index
    %94 = vector.load %arg16[%c0_61, %c144_62] : memref<8x192xf32, #tpu.memory_space<vmem>>, vector<8x24xf32>
    tpu.vector_store %arg16[%c0_61, %c144_62], %93 {strides = array<i32>} : memref<8x192xf32, #tpu.memory_space<vmem>>, vector<8x24xf32>,
    %c0_63 = arith.constant 0 : index
    %c312 = arith.constant 312 : index
    %95 = vector.load %arg15[%c0_63, %c312] : memref<8x336xf32, #tpu.memory_space<vmem>>, vector<8x24xf32>
    %c0_64 = arith.constant 0 : index
    %c168_65 = arith.constant 168 : index
    %96 = vector.load %arg16[%c0_64, %c168_65] : memref<8x192xf32, #tpu.memory_space<vmem>>, vector<8x24xf32>
    tpu.vector_store %arg16[%c0_64, %c168_65], %95 {strides = array<i32>} : memref<8x192xf32, #tpu.memory_space<vmem>>, vector<8x24xf32>,
    %c0_66 = arith.constant 0 : index
    %c0_67 = arith.constant 0 : index
    %97 = vector.load %arg16[%c0_66, %c0_67] : memref<8x192xf32, #tpu.memory_space<vmem>>, vector<8x192xf32>
    %cst_68 = arith.constant 0.000000e+00 : f32
    %98 = vector.broadcast %cst_68 : f32 to vector<1x192xf32>
    %99 = tpu.concatenate %98, %97, %98 in 0 : vector<1x192xf32>, vector<8x192xf32>, vector<1x192xf32> -> vector<10x192xf32>
    %100 = vector.extract_strided_slice %99 {offsets = [0, 0], sizes = [6, 192], strides = [1, 1]} : vector<10x192xf32> to vector<6x192xf32>
    %101 = arith.truncf %100 : vector<6x192xf32> to vector<6x192xbf16>
    %c0_69 = arith.constant 0 : index
    %c0_70 = arith.constant 0 : index
    %c0_71 = arith.constant 0 : index
    %102 = vector.load %arg4[%c0_69, %c0_70, %c0_71] : memref<5x192x144xbf16, #tpu.memory_space<vmem>>, vector<1x192x144xbf16>
    %103 = vector.shape_cast %102 : vector<1x192x144xbf16> to vector<192x144xbf16>
    %cst_72 = arith.constant dense<0.000000e+00> : vector<6x144xf32>
    %104 = tpu.matmul %101, %103, %cst_72 {dimension_numbers = #tpu.dot_dimension_numbers<[1], [0], [0], [1], [0, 0, 1, 1], [], []>} : vector<6x192xbf16>, vector<192x144xbf16>, vector<6x144xf32> -> vector<6x144xf32>
    %105 = vector.extract_strided_slice %99 {offsets = [1, 0], sizes = [6, 192], strides = [1, 1]} : vector<10x192xf32> to vector<6x192xf32>
    %106 = arith.truncf %105 : vector<6x192xf32> to vector<6x192xbf16>
    %c1_73 = arith.constant 1 : index
    %c0_74 = arith.constant 0 : index
    %c0_75 = arith.constant 0 : index
    %107 = vector.load %arg4[%c1_73, %c0_74, %c0_75] : memref<5x192x144xbf16, #tpu.memory_space<vmem>>, vector<1x192x144xbf16>
    %108 = vector.shape_cast %107 : vector<1x192x144xbf16> to vector<192x144xbf16>
    %cst_76 = arith.constant dense<0.000000e+00> : vector<6x144xf32>
    %109 = tpu.matmul %106, %108, %cst_76 {dimension_numbers = #tpu.dot_dimension_numbers<[1], [0], [0], [1], [0, 0, 1, 1], [], []>} : vector<6x192xbf16>, vector<192x144xbf16>, vector<6x144xf32> -> vector<6x144xf32>
    %110 = arith.addf %104, %109 : vector<6x144xf32>
    %111 = vector.extract_strided_slice %99 {offsets = [2, 0], sizes = [6, 192], strides = [1, 1]} : vector<10x192xf32> to vector<6x192xf32>
    %112 = arith.truncf %111 : vector<6x192xf32> to vector<6x192xbf16>
    %c2_77 = arith.constant 2 : index
    %c0_78 = arith.constant 0 : index
    %c0_79 = arith.constant 0 : index
    %113 = vector.load %arg4[%c2_77, %c0_78, %c0_79] : memref<5x192x144xbf16, #tpu.memory_space<vmem>>, vector<1x192x144xbf16>
    %114 = vector.shape_cast %113 : vector<1x192x144xbf16> to vector<192x144xbf16>
    %cst_80 = arith.constant dense<0.000000e+00> : vector<6x144xf32>
    %115 = tpu.matmul %112, %114, %cst_80 {dimension_numbers = #tpu.dot_dimension_numbers<[1], [0], [0], [1], [0, 0, 1, 1], [], []>} : vector<6x192xbf16>, vector<192x144xbf16>, vector<6x144xf32> -> vector<6x144xf32>
    %116 = arith.addf %110, %115 : vector<6x144xf32>
    %117 = vector.extract_strided_slice %99 {offsets = [3, 0], sizes = [6, 192], strides = [1, 1]} : vector<10x192xf32> to vector<6x192xf32>
    %118 = arith.truncf %117 : vector<6x192xf32> to vector<6x192xbf16>
    %c3_81 = arith.constant 3 : index
    %c0_82 = arith.constant 0 : index
    %c0_83 = arith.constant 0 : index
    %119 = vector.load %arg4[%c3_81, %c0_82, %c0_83] : memref<5x192x144xbf16, #tpu.memory_space<vmem>>, vector<1x192x144xbf16>
    %120 = vector.shape_cast %119 : vector<1x192x144xbf16> to vector<192x144xbf16>
    %cst_84 = arith.constant dense<0.000000e+00> : vector<6x144xf32>
    %121 = tpu.matmul %118, %120, %cst_84 {dimension_numbers = #tpu.dot_dimension_numbers<[1], [0], [0], [1], [0, 0, 1, 1], [], []>} : vector<6x192xbf16>, vector<192x144xbf16>, vector<6x144xf32> -> vector<6x144xf32>
    %122 = arith.addf %116, %121 : vector<6x144xf32>
    %123 = vector.extract_strided_slice %99 {offsets = [4, 0], sizes = [6, 192], strides = [1, 1]} : vector<10x192xf32> to vector<6x192xf32>
    %124 = arith.truncf %123 : vector<6x192xf32> to vector<6x192xbf16>
    %c4_85 = arith.constant 4 : index
    %c0_86 = arith.constant 0 : index
    %c0_87 = arith.constant 0 : index
    %125 = vector.load %arg4[%c4_85, %c0_86, %c0_87] : memref<5x192x144xbf16, #tpu.memory_space<vmem>>, vector<1x192x144xbf16>
    %126 = vector.shape_cast %125 : vector<1x192x144xbf16> to vector<192x144xbf16>
    %cst_88 = arith.constant dense<0.000000e+00> : vector<6x144xf32>
    %127 = tpu.matmul %124, %126, %cst_88 {dimension_numbers = #tpu.dot_dimension_numbers<[1], [0], [0], [1], [0, 0, 1, 1], [], []>} : vector<6x192xbf16>, vector<192x144xbf16>, vector<6x144xf32> -> vector<6x144xf32>
    %128 = arith.addf %122, %127 : vector<6x144xf32>
    %c0_89 = arith.constant 0 : index
    %c0_90 = arith.constant 0 : index
    %129 = vector.load %arg5[%c0_89, %c0_90] : memref<1x144xf32, #tpu.memory_space<vmem>>, vector<1x144xf32>
    %130 = vector.broadcast %129 : vector<1x144xf32> to vector<6x144xf32>
    %131 = arith.addf %128, %130 : vector<6x144xf32>
    %cst_91 = arith.constant 0.000000e+00 : f32
    %132 = vector.broadcast %cst_91 : f32 to vector<6x144xf32>
    %133 = arith.cmpf ogt, %131, %132 : vector<6x144xf32>
    %cst_92 = arith.constant 1.000000e-01 : f32
    %134 = vector.broadcast %cst_92 : f32 to vector<6x144xf32>
    %135 = arith.mulf %134, %131 : vector<6x144xf32>
    %136 = arith.select %133, %131, %135 : vector<6x144xi1>, vector<6x144xf32>
    %137 = vector.extract_strided_slice %136 {offsets = [0, 0], sizes = [1, 144], strides = [1, 1]} : vector<6x144xf32> to vector<1x144xf32>
    %c0_93 = arith.constant 0 : index
    %c0_94 = arith.constant 0 : index
    %138 = vector.load %arg15[%c0_93, %c0_94] : memref<8x336xf32, #tpu.memory_space<vmem>>, vector<1x144xf32>
    tpu.vector_store %arg15[%c0_93, %c0_94], %137 {strides = array<i32>} : memref<8x336xf32, #tpu.memory_space<vmem>>, vector<1x144xf32>,
    %139 = vector.extract_strided_slice %136 {offsets = [1, 0], sizes = [1, 144], strides = [1, 1]} : vector<6x144xf32> to vector<1x144xf32>
    %140 = vector.extract_strided_slice %136 {offsets = [2, 0], sizes = [1, 144], strides = [1, 1]} : vector<6x144xf32> to vector<1x144xf32>
    %141 = arith.maximumf %139, %140 : vector<1x144xf32>
    %c1_95 = arith.constant 1 : index
    %c0_96 = arith.constant 0 : index
    %142 = vector.load %arg15[%c1_95, %c0_96] : memref<8x336xf32, #tpu.memory_space<vmem>>, vector<1x144xf32>
    tpu.vector_store %arg15[%c1_95, %c0_96], %141 {strides = array<i32>} : memref<8x336xf32, #tpu.memory_space<vmem>>, vector<1x144xf32>,
    %143 = vector.extract_strided_slice %136 {offsets = [3, 0], sizes = [1, 144], strides = [1, 1]} : vector<6x144xf32> to vector<1x144xf32>
    %144 = vector.extract_strided_slice %136 {offsets = [4, 0], sizes = [1, 144], strides = [1, 1]} : vector<6x144xf32> to vector<1x144xf32>
    %145 = arith.maximumf %143, %144 : vector<1x144xf32>
    %c2_97 = arith.constant 2 : index
    %c0_98 = arith.constant 0 : index
    %146 = vector.load %arg15[%c2_97, %c0_98] : memref<8x336xf32, #tpu.memory_space<vmem>>, vector<1x144xf32>
    tpu.vector_store %arg15[%c2_97, %c0_98], %145 {strides = array<i32>} : memref<8x336xf32, #tpu.memory_space<vmem>>, vector<1x144xf32>,
    %147 = vector.extract_strided_slice %136 {offsets = [5, 0], sizes = [1, 144], strides = [1, 1]} : vector<6x144xf32> to vector<1x144xf32>
    %c3_99 = arith.constant 3 : index
    %c0_100 = arith.constant 0 : index
    %148 = vector.load %arg15[%c3_99, %c0_100] : memref<8x336xf32, #tpu.memory_space<vmem>>, vector<1x144xf32>
    tpu.vector_store %arg15[%c3_99, %c0_100], %147 {strides = array<i32>} : memref<8x336xf32, #tpu.memory_space<vmem>>, vector<1x144xf32>,
    %c0_101 = arith.constant 0 : index
    %c0_102 = arith.constant 0 : index
    %149 = vector.load %arg15[%c0_101, %c0_102] : memref<8x336xf32, #tpu.memory_space<vmem>>, vector<4x24xf32>
    %c0_103 = arith.constant 0 : index
    %c0_104 = arith.constant 0 : index
    %150 = vector.load %arg16[%c0_103, %c0_104] : memref<8x192xf32, #tpu.memory_space<vmem>>, vector<4x24xf32>
    tpu.vector_store %arg16[%c0_103, %c0_104], %149 {strides = array<i32>} : memref<8x192xf32, #tpu.memory_space<vmem>>, vector<4x24xf32>,
    %c0_105 = arith.constant 0 : index
    %c24_106 = arith.constant 24 : index
    %151 = vector.load %arg15[%c0_105, %c24_106] : memref<8x336xf32, #tpu.memory_space<vmem>>, vector<4x24xf32>
    %c0_107 = arith.constant 0 : index
    %c48_108 = arith.constant 48 : index
    %152 = vector.load %arg15[%c0_107, %c48_108] : memref<8x336xf32, #tpu.memory_space<vmem>>, vector<4x24xf32>
    %153 = arith.maximumf %151, %152 : vector<4x24xf32>
    %c0_109 = arith.constant 0 : index
    %c24_110 = arith.constant 24 : index
    %154 = vector.load %arg16[%c0_109, %c24_110] : memref<8x192xf32, #tpu.memory_space<vmem>>, vector<4x24xf32>
    tpu.vector_store %arg16[%c0_109, %c24_110], %153 {strides = array<i32>} : memref<8x192xf32, #tpu.memory_space<vmem>>, vector<4x24xf32>,
    %c0_111 = arith.constant 0 : index
    %c72_112 = arith.constant 72 : index
    %155 = vector.load %arg15[%c0_111, %c72_112] : memref<8x336xf32, #tpu.memory_space<vmem>>, vector<4x24xf32>
    %c0_113 = arith.constant 0 : index
    %c96_114 = arith.constant 96 : index
    %156 = vector.load %arg15[%c0_113, %c96_114] : memref<8x336xf32, #tpu.memory_space<vmem>>, vector<4x24xf32>
    %157 = arith.maximumf %155, %156 : vector<4x24xf32>
    %c0_115 = arith.constant 0 : index
    %c48_116 = arith.constant 48 : index
    %158 = vector.load %arg16[%c0_115, %c48_116] : memref<8x192xf32, #tpu.memory_space<vmem>>, vector<4x24xf32>
    tpu.vector_store %arg16[%c0_115, %c48_116], %157 {strides = array<i32>} : memref<8x192xf32, #tpu.memory_space<vmem>>, vector<4x24xf32>,
    %c0_117 = arith.constant 0 : index
    %c120_118 = arith.constant 120 : index
    %159 = vector.load %arg15[%c0_117, %c120_118] : memref<8x336xf32, #tpu.memory_space<vmem>>, vector<4x24xf32>
    %c0_119 = arith.constant 0 : index
    %c72_120 = arith.constant 72 : index
    %160 = vector.load %arg16[%c0_119, %c72_120] : memref<8x192xf32, #tpu.memory_space<vmem>>, vector<4x24xf32>
    tpu.vector_store %arg16[%c0_119, %c72_120], %159 {strides = array<i32>} : memref<8x192xf32, #tpu.memory_space<vmem>>, vector<4x24xf32>,
    %c0_121 = arith.constant 0 : index
    %c0_122 = arith.constant 0 : index
    %161 = vector.load %arg16[%c0_121, %c0_122] : memref<8x192xf32, #tpu.memory_space<vmem>>, vector<4x96xf32>
    %cst_123 = arith.constant 0.000000e+00 : f32
    %162 = vector.broadcast %cst_123 : f32 to vector<1x96xf32>
    %163 = tpu.concatenate %162, %161, %162 in 0 : vector<1x96xf32>, vector<4x96xf32>, vector<1x96xf32> -> vector<6x96xf32>
    %164 = vector.extract_strided_slice %163 {offsets = [0, 0], sizes = [2, 96], strides = [1, 1]} : vector<6x96xf32> to vector<2x96xf32>
    %165 = arith.truncf %164 : vector<2x96xf32> to vector<2x96xbf16>
    %c0_124 = arith.constant 0 : index
    %c0_125 = arith.constant 0 : index
    %c0_126 = arith.constant 0 : index
    %166 = vector.load %arg6[%c0_124, %c0_125, %c0_126] : memref<5x96x96xbf16, #tpu.memory_space<vmem>>, vector<1x96x96xbf16>
    %167 = vector.shape_cast %166 : vector<1x96x96xbf16> to vector<96x96xbf16>
    %cst_127 = arith.constant dense<0.000000e+00> : vector<2x96xf32>
    %168 = tpu.matmul %165, %167, %cst_127 {dimension_numbers = #tpu.dot_dimension_numbers<[1], [0], [0], [1], [0, 0, 1, 1], [], []>} : vector<2x96xbf16>, vector<96x96xbf16>, vector<2x96xf32> -> vector<2x96xf32>
    %169 = vector.extract_strided_slice %163 {offsets = [1, 0], sizes = [2, 96], strides = [1, 1]} : vector<6x96xf32> to vector<2x96xf32>
    %170 = arith.truncf %169 : vector<2x96xf32> to vector<2x96xbf16>
    %c1_128 = arith.constant 1 : index
    %c0_129 = arith.constant 0 : index
    %c0_130 = arith.constant 0 : index
    %171 = vector.load %arg6[%c1_128, %c0_129, %c0_130] : memref<5x96x96xbf16, #tpu.memory_space<vmem>>, vector<1x96x96xbf16>
    %172 = vector.shape_cast %171 : vector<1x96x96xbf16> to vector<96x96xbf16>
    %cst_131 = arith.constant dense<0.000000e+00> : vector<2x96xf32>
    %173 = tpu.matmul %170, %172, %cst_131 {dimension_numbers = #tpu.dot_dimension_numbers<[1], [0], [0], [1], [0, 0, 1, 1], [], []>} : vector<2x96xbf16>, vector<96x96xbf16>, vector<2x96xf32> -> vector<2x96xf32>
    %174 = arith.addf %168, %173 : vector<2x96xf32>
    %175 = vector.extract_strided_slice %163 {offsets = [2, 0], sizes = [2, 96], strides = [1, 1]} : vector<6x96xf32> to vector<2x96xf32>
    %176 = arith.truncf %175 : vector<2x96xf32> to vector<2x96xbf16>
    %c2_132 = arith.constant 2 : index
    %c0_133 = arith.constant 0 : index
    %c0_134 = arith.constant 0 : index
    %177 = vector.load %arg6[%c2_132, %c0_133, %c0_134] : memref<5x96x96xbf16, #tpu.memory_space<vmem>>, vector<1x96x96xbf16>
    %178 = vector.shape_cast %177 : vector<1x96x96xbf16> to vector<96x96xbf16>
    %cst_135 = arith.constant dense<0.000000e+00> : vector<2x96xf32>
    %179 = tpu.matmul %176, %178, %cst_135 {dimension_numbers = #tpu.dot_dimension_numbers<[1], [0], [0], [1], [0, 0, 1, 1], [], []>} : vector<2x96xbf16>, vector<96x96xbf16>, vector<2x96xf32> -> vector<2x96xf32>
    %180 = arith.addf %174, %179 : vector<2x96xf32>
    %181 = vector.extract_strided_slice %163 {offsets = [3, 0], sizes = [2, 96], strides = [1, 1]} : vector<6x96xf32> to vector<2x96xf32>
    %182 = arith.truncf %181 : vector<2x96xf32> to vector<2x96xbf16>
    %c3_136 = arith.constant 3 : index
    %c0_137 = arith.constant 0 : index
    %c0_138 = arith.constant 0 : index
    %183 = vector.load %arg6[%c3_136, %c0_137, %c0_138] : memref<5x96x96xbf16, #tpu.memory_space<vmem>>, vector<1x96x96xbf16>
    %184 = vector.shape_cast %183 : vector<1x96x96xbf16> to vector<96x96xbf16>
    %cst_139 = arith.constant dense<0.000000e+00> : vector<2x96xf32>
    %185 = tpu.matmul %182, %184, %cst_139 {dimension_numbers = #tpu.dot_dimension_numbers<[1], [0], [0], [1], [0, 0, 1, 1], [], []>} : vector<2x96xbf16>, vector<96x96xbf16>, vector<2x96xf32> -> vector<2x96xf32>
    %186 = arith.addf %180, %185 : vector<2x96xf32>
    %187 = vector.extract_strided_slice %163 {offsets = [4, 0], sizes = [2, 96], strides = [1, 1]} : vector<6x96xf32> to vector<2x96xf32>
    %188 = arith.truncf %187 : vector<2x96xf32> to vector<2x96xbf16>
    %c4_140 = arith.constant 4 : index
    %c0_141 = arith.constant 0 : index
    %c0_142 = arith.constant 0 : index
    %189 = vector.load %arg6[%c4_140, %c0_141, %c0_142] : memref<5x96x96xbf16, #tpu.memory_space<vmem>>, vector<1x96x96xbf16>
    %190 = vector.shape_cast %189 : vector<1x96x96xbf16> to vector<96x96xbf16>
    %cst_143 = arith.constant dense<0.000000e+00> : vector<2x96xf32>
    %191 = tpu.matmul %188, %190, %cst_143 {dimension_numbers = #tpu.dot_dimension_numbers<[1], [0], [0], [1], [0, 0, 1, 1], [], []>} : vector<2x96xbf16>, vector<96x96xbf16>, vector<2x96xf32> -> vector<2x96xf32>
    %192 = arith.addf %186, %191 : vector<2x96xf32>
    %c0_144 = arith.constant 0 : index
    %c0_145 = arith.constant 0 : index
    %193 = vector.load %arg7[%c0_144, %c0_145] : memref<1x96xf32, #tpu.memory_space<vmem>>, vector<1x96xf32>
    %194 = vector.broadcast %193 : vector<1x96xf32> to vector<2x96xf32>
    %195 = arith.addf %192, %194 : vector<2x96xf32>
    %cst_146 = arith.constant 0.000000e+00 : f32
    %196 = vector.broadcast %cst_146 : f32 to vector<2x96xf32>
    %197 = arith.cmpf ogt, %195, %196 : vector<2x96xf32>
    %cst_147 = arith.constant 1.000000e-01 : f32
    %198 = vector.broadcast %cst_147 : f32 to vector<2x96xf32>
    %199 = arith.mulf %198, %195 : vector<2x96xf32>
    %200 = arith.select %197, %195, %199 : vector<2x96xi1>, vector<2x96xf32>
    %201 = vector.extract_strided_slice %200 {offsets = [0, 0], sizes = [1, 96], strides = [1, 1]} : vector<2x96xf32> to vector<1x96xf32>
    %c0_148 = arith.constant 0 : index
    %c0_149 = arith.constant 0 : index
    %202 = vector.load %arg15[%c0_148, %c0_149] : memref<8x336xf32, #tpu.memory_space<vmem>>, vector<1x96xf32>
    tpu.vector_store %arg15[%c0_148, %c0_149], %201 {strides = array<i32>} : memref<8x336xf32, #tpu.memory_space<vmem>>, vector<1x96xf32>,
    %203 = vector.extract_strided_slice %200 {offsets = [1, 0], sizes = [1, 96], strides = [1, 1]} : vector<2x96xf32> to vector<1x96xf32>
    %c1_150 = arith.constant 1 : index
    %c0_151 = arith.constant 0 : index
    %204 = vector.load %arg15[%c1_150, %c0_151] : memref<8x336xf32, #tpu.memory_space<vmem>>, vector<1x96xf32>
    tpu.vector_store %arg15[%c1_150, %c0_151], %203 {strides = array<i32>} : memref<8x336xf32, #tpu.memory_space<vmem>>, vector<1x96xf32>,
    %c0_152 = arith.constant 0 : index
    %c0_153 = arith.constant 0 : index
    %205 = vector.load %arg15[%c0_152, %c0_153] : memref<8x336xf32, #tpu.memory_space<vmem>>, vector<2x48xf32>
    %c0_154 = arith.constant 0 : index
    %c0_155 = arith.constant 0 : index
    %206 = vector.load %arg16[%c0_154, %c0_155] : memref<8x192xf32, #tpu.memory_space<vmem>>, vector<2x48xf32>
    tpu.vector_store %arg16[%c0_154, %c0_155], %205 {strides = array<i32>} : memref<8x192xf32, #tpu.memory_space<vmem>>, vector<2x48xf32>,
    %c0_156 = arith.constant 0 : index
    %c48_157 = arith.constant 48 : index
    %207 = vector.load %arg15[%c0_156, %c48_157] : memref<8x336xf32, #tpu.memory_space<vmem>>, vector<2x48xf32>
    %c0_158 = arith.constant 0 : index
    %c48_159 = arith.constant 48 : index
    %208 = vector.load %arg16[%c0_158, %c48_159] : memref<8x192xf32, #tpu.memory_space<vmem>>, vector<2x48xf32>
    tpu.vector_store %arg16[%c0_158, %c48_159], %207 {strides = array<i32>} : memref<8x192xf32, #tpu.memory_space<vmem>>, vector<2x48xf32>,
    %c0_160 = arith.constant 0 : index
    %c0_161 = arith.constant 0 : index
    %209 = vector.load %arg16[%c0_160, %c0_161] : memref<8x192xf32, #tpu.memory_space<vmem>>, vector<2x96xf32>
    %c0_162 = arith.constant 0 : index
    %c0_163 = arith.constant 0 : index
    %210 = vector.load %arg9[%c0_162, %c0_163] : memref<1x32xf32, #tpu.memory_space<vmem>>, vector<1x32xf32>
    %211 = vector.extract_strided_slice %209 {offsets = [0, 0], sizes = [1, 96], strides = [1, 1]} : vector<2x96xf32> to vector<1x96xf32>
    %212 = arith.truncf %211 : vector<1x96xf32> to vector<1x96xbf16>
    %c0_164 = arith.constant 0 : index
    %c0_165 = arith.constant 0 : index
    %c0_166 = arith.constant 0 : index
    %213 = vector.load %arg8[%c0_164, %c0_165, %c0_166] : memref<2x96x32xbf16, #tpu.memory_space<vmem>>, vector<1x96x32xbf16>
    %214 = vector.shape_cast %213 : vector<1x96x32xbf16> to vector<96x32xbf16>
    %cst_167 = arith.constant dense<0.000000e+00> : vector<1x32xf32>
    %215 = tpu.matmul %212, %214, %cst_167 {dimension_numbers = #tpu.dot_dimension_numbers<[1], [0], [0], [1], [0, 0, 1, 1], [], []>} : vector<1x96xbf16>, vector<96x32xbf16>, vector<1x32xf32> -> vector<1x32xf32>
    %216 = arith.addf %210, %215 : vector<1x32xf32>
    %217 = vector.extract_strided_slice %209 {offsets = [1, 0], sizes = [1, 96], strides = [1, 1]} : vector<2x96xf32> to vector<1x96xf32>
    %218 = arith.truncf %217 : vector<1x96xf32> to vector<1x96xbf16>
    %c1_168 = arith.constant 1 : index
    %c0_169 = arith.constant 0 : index
    %c0_170 = arith.constant 0 : index
    %219 = vector.load %arg8[%c1_168, %c0_169, %c0_170] : memref<2x96x32xbf16, #tpu.memory_space<vmem>>, vector<1x96x32xbf16>
    %220 = vector.shape_cast %219 : vector<1x96x32xbf16> to vector<96x32xbf16>
    %cst_171 = arith.constant dense<0.000000e+00> : vector<1x32xf32>
    %221 = tpu.matmul %218, %220, %cst_171 {dimension_numbers = #tpu.dot_dimension_numbers<[1], [0], [0], [1], [0, 0, 1, 1], [], []>} : vector<1x96xbf16>, vector<96x32xbf16>, vector<1x32xf32> -> vector<1x32xf32>
    %222 = arith.addf %216, %221 : vector<1x32xf32>
    %cst_172 = arith.constant 0.000000e+00 : f32
    %223 = vector.broadcast %cst_172 : f32 to vector<1x32xf32>
    %224 = arith.cmpf ogt, %222, %223 : vector<1x32xf32>
    %cst_173 = arith.constant 1.000000e-01 : f32
    %225 = vector.broadcast %cst_173 : f32 to vector<1x32xf32>
    %226 = arith.mulf %225, %222 : vector<1x32xf32>
    %227 = arith.select %224, %222, %226 : vector<1x32xi1>, vector<1x32xf32>
    %c0_174 = arith.constant 0 : index
    %c0_175 = arith.constant 0 : index
    %228 = vector.load %arg10[%c0_174, %c0_175] : memref<32x64xbf16, #tpu.memory_space<vmem>>, vector<32x64xbf16>
    %c0_176 = arith.constant 0 : index
    %c0_177 = arith.constant 0 : index
    %229 = vector.load %arg11[%c0_176, %c0_177] : memref<1x64xf32, #tpu.memory_space<vmem>>, vector<1x64xf32>
    %230 = arith.truncf %227 : vector<1x32xf32> to vector<1x32xbf16>
    %cst_178 = arith.constant dense<0.000000e+00> : vector<1x64xf32>
    %231 = tpu.matmul %230, %228, %cst_178 {dimension_numbers = #tpu.dot_dimension_numbers<[1], [0], [0], [1], [0, 0, 1, 1], [], []>} : vector<1x32xbf16>, vector<32x64xbf16>, vector<1x64xf32> -> vector<1x64xf32>
    %232 = arith.addf %231, %229 : vector<1x64xf32>
    %cst_179 = arith.constant 0.000000e+00 : f32
    %233 = vector.broadcast %cst_179 : f32 to vector<1x64xf32>
    %234 = arith.cmpf ogt, %232, %233 : vector<1x64xf32>
    %cst_180 = arith.constant 1.000000e-01 : f32
    %235 = vector.broadcast %cst_180 : f32 to vector<1x64xf32>
    %236 = arith.mulf %235, %232 : vector<1x64xf32>
    %237 = arith.select %234, %232, %236 : vector<1x64xi1>, vector<1x64xf32>
    %c0_181 = arith.constant 0 : index
    %c0_182 = arith.constant 0 : index
    %238 = vector.load %arg12[%c0_181, %c0_182] : memref<64x1xbf16, #tpu.memory_space<vmem>>, vector<64x1xbf16>
    %c0_183 = arith.constant 0 : index
    %c0_184 = arith.constant 0 : index
    %239 = vector.load %arg13[%c0_183, %c0_184] : memref<1x1xf32, #tpu.memory_space<vmem>>, vector<1x1xf32>
    %240 = arith.truncf %237 : vector<1x64xf32> to vector<1x64xbf16>
    %cst_185 = arith.constant dense<0.000000e+00> : vector<1x1xf32>
    %241 = tpu.matmul %240, %238, %cst_185 {dimension_numbers = #tpu.dot_dimension_numbers<[1], [0], [0], [1], [0, 0, 1, 1], [], []>} : vector<1x64xbf16>, vector<64x1xbf16>, vector<1x1xf32> -> vector<1x1xf32>
    %242 = arith.addf %241, %239 : vector<1x1xf32>
    %243 = arith.negf %242 : vector<1x1xf32>
    %244 = math.exp %243 : vector<1x1xf32>
    %cst_186 = arith.constant 1.000000e+00 : f32
    %245 = vector.broadcast %cst_186 : f32 to vector<1x1xf32>
    %246 = arith.addf %245, %244 : vector<1x1xf32>
    %247 = arith.divf %245, %246 : vector<1x1xf32>
    %c0_187 = arith.constant 0 : index
    %c0_188 = arith.constant 0 : index
    %c0_189 = arith.constant 0 : index
    %248 = vector.load %arg14[%c0_187, %c0_188, %c0_189] : memref<1x1x1xf32, #tpu.memory_space<vmem>>, vector<1x1x1xf32>
    %249 = vector.shape_cast %248 : vector<1x1x1xf32> to vector<1x1xf32>
    %250 = vector.shape_cast %247 : vector<1x1xf32> to vector<1x1x1xf32>
    tpu.vector_store %arg14[%c0_187, %c0_188, %c0_189], %250 {strides = array<i32>} : memref<1x1x1xf32, #tpu.memory_space<vmem>>, vector<1x1x1xf32>,
    return
  }
  func.func @transform_0(%arg0: i32) -> (i32, i32, i32) {
    %c0_i32 = arith.constant 0 : i32
    %c0_i32_0 = arith.constant 0 : i32
    %c0_i32_1 = arith.constant 0 : i32
    return %arg0, %c0_i32, %c0_i32_0 : i32, i32, i32
  }
  func.func @transform_1(%arg0: i32) -> (i32, i32, i32) {
    %c0_i32 = arith.constant 0 : i32
    %c0_i32_0 = arith.constant 0 : i32
    %c0_i32_1 = arith.constant 0 : i32
    %c0_i32_2 = arith.constant 0 : i32
    return %c0_i32, %c0_i32_0, %c0_i32_1 : i32, i32, i32
  }
  func.func @transform_2(%arg0: i32) -> (i32, i32) {
    %c0_i32 = arith.constant 0 : i32
    %c0_i32_0 = arith.constant 0 : i32
    %c0_i32_1 = arith.constant 0 : i32
    return %c0_i32, %c0_i32_0 : i32, i32
  }
  func.func @transform_3(%arg0: i32) -> (i32, i32, i32) {
    %c0_i32 = arith.constant 0 : i32
    %c0_i32_0 = arith.constant 0 : i32
    %c0_i32_1 = arith.constant 0 : i32
    %c0_i32_2 = arith.constant 0 : i32
    return %c0_i32, %c0_i32_0, %c0_i32_1 : i32, i32, i32
  }
  func.func @transform_4(%arg0: i32) -> (i32, i32) {
    %c0_i32 = arith.constant 0 : i32
    %c0_i32_0 = arith.constant 0 : i32
    %c0_i32_1 = arith.constant 0 : i32
    return %c0_i32, %c0_i32_0 : i32, i32
  }
  func.func @transform_5(%arg0: i32) -> (i32, i32, i32) {
    %c0_i32 = arith.constant 0 : i32
    %c0_i32_0 = arith.constant 0 : i32
    %c0_i32_1 = arith.constant 0 : i32
    %c0_i32_2 = arith.constant 0 : i32
    return %c0_i32, %c0_i32_0, %c0_i32_1 : i32, i32, i32
  }
  func.func @transform_6(%arg0: i32) -> (i32, i32) {
    %c0_i32 = arith.constant 0 : i32
    %c0_i32_0 = arith.constant 0 : i32
    %c0_i32_1 = arith.constant 0 : i32
    return %c0_i32, %c0_i32_0 : i32, i32
  }
  func.func @transform_7(%arg0: i32) -> (i32, i32, i32) {
    %c0_i32 = arith.constant 0 : i32
    %c0_i32_0 = arith.constant 0 : i32
    %c0_i32_1 = arith.constant 0 : i32
    %c0_i32_2 = arith.constant 0 : i32
    return %c0_i32, %c0_i32_0, %c0_i32_1 : i32, i32, i32
  }
  func.func @transform_8(%arg0: i32) -> (i32, i32) {
    %c0_i32 = arith.constant 0 : i32
    %c0_i32_0 = arith.constant 0 : i32
    %c0_i32_1 = arith.constant 0 : i32
    return %c0_i32, %c0_i32_0 : i32, i32
  }
  func.func @transform_9(%arg0: i32) -> (i32, i32) {
    %c0_i32 = arith.constant 0 : i32
    %c0_i32_0 = arith.constant 0 : i32
    %c0_i32_1 = arith.constant 0 : i32
    return %c0_i32, %c0_i32_0 : i32, i32
  }
  func.func @transform_10(%arg0: i32) -> (i32, i32) {
    %c0_i32 = arith.constant 0 : i32
    %c0_i32_0 = arith.constant 0 : i32
    %c0_i32_1 = arith.constant 0 : i32
    return %c0_i32, %c0_i32_0 : i32, i32
  }
  func.func @transform_11(%arg0: i32) -> (i32, i32) {
    %c0_i32 = arith.constant 0 : i32
    %c0_i32_0 = arith.constant 0 : i32
    %c0_i32_1 = arith.constant 0 : i32
    return %c0_i32, %c0_i32_0 : i32, i32
  }
  func.func @transform_12(%arg0: i32) -> (i32, i32) {
    %c0_i32 = arith.constant 0 : i32
    %c0_i32_0 = arith.constant 0 : i32
    %c0_i32_1 = arith.constant 0 : i32
    return %c0_i32, %c0_i32_0 : i32, i32
  }
  func.func @transform_13(%arg0: i32) -> (i32, i32, i32) {
    %c0_i32 = arith.constant 0 : i32
    %c0_i32_0 = arith.constant 0 : i32
    %c0_i32_1 = arith.constant 0 : i32
    return %arg0, %c0_i32, %c0_i32_0 : i32, i32, i32
  }
}

</mosaic_0001>

<llo_original>
// kernel: ribcage_forward.1
$region0: #{ribcage_forward.1}
  #allocation0 [shape = 'u32[]', space=smem, size = 0x4, offset = 0x4, fixed_abs, tag = 'smem constant byte address 0x4 - core index']
  #allocation1 [shape = 'u32[72,128]{1,0:T(1,128)}', space=vmem, size = 0x9000, scoped, tag = 'internal scratch']
  #allocation2 [shape = 'f32[8,336]{1,0:T(8,128)}', space=vmem, size = 0x3000, scoped, tag = 'scratch operand']
  #allocation3 [shape = 'f32[8,192]{1,0:T(8,128)}', space=vmem, size = 0x2000, scoped, tag = 'scratch operand']
  #allocation4 [shape = 'f32[1,1]{1,0:T(1,128)S(1)}', space=vmem, size = 0x200, scoped, tag = 'scoped memory for ribcage_forward.1']
  %s0 = inlined_call_operand.vmem [shape: f32[2,16,64], index: 0, kind: input, shape index: {}]
  %s1 = inlined_call_operand.vmem [shape: bf16[5,64,336], index: 1, kind: input, shape index: {}]
  %s2 = inlined_call_operand.vmem [shape: f32[1,336], index: 2, kind: input, shape index: {}]
  %s3 = inlined_call_operand.hbm [shape: bf16[5,192,144], index: 3, kind: input, shape index: {}]
  %s4 = inlined_call_operand.vmem [shape: f32[1,144], index: 4, kind: input, shape index: {}]
  %s5 = inlined_call_operand.hbm [shape: bf16[5,96,96], index: 5, kind: input, shape index: {}]
  %s6 = inlined_call_operand.vmem [shape: f32[1,96], index: 6, kind: input, shape index: {}]
  %s7 = inlined_call_operand.vmem [shape: bf16[2,96,32], index: 7, kind: input, shape index: {}]
  %s8 = inlined_call_operand.vmem [shape: f32[1,32], index: 8, kind: input, shape index: {}]
  %s9 = inlined_call_operand.vmem [shape: bf16[32,64], index: 9, kind: input, shape index: {}]
  %s10 = inlined_call_operand.vmem [shape: f32[1,64], index: 10, kind: input, shape index: {}]
  %s11 = inlined_call_operand.vmem [shape: bf16[64,1], index: 11, kind: input, shape index: {}]
  %s12 = inlined_call_operand.<no memory space> [shape: f32[1,1], index: 12, kind: input, shape index: {}]
  %s13 = inlined_call_operand.vmem [shape: f32[2,1,1], index: 13, kind: output, shape index: {}]
  %s14 = sld [smem:[#allocation0]]
  $region93: #{ribcage_forward.1} parent=0
    _
  %s16 = ssub.s32 1, %s14
  %s17 = scalar_select 0, %s16, %s14
  %v18 = vstv %s12
  %19 = vst [vmem:[#allocation4] sm:$0x1] %v18
  $region1: #{ribcage_forward.1} parent=0
    #allocation5 [shape = 'u8[491520]{0}', space=vmem, size = 0x78000, scoped, tag = 'input window, operand 3, single buffered']
    #allocation6 [shape = 's32[2]{0}', space=sflag, size = 0x8, scoped, tag = 'scoped memory for ribcage_forward.1']
    #allocation7 [shape = 'u8[122880]{0}', space=vmem, size = 0x1e000, scoped, tag = 'input window, operand 5, single buffered']
    #allocation8 [shape = 's32[1]{0}', space=sflag, size = 0x4, scoped, tag = 'scoped memory for ribcage_forward.1']
    %20 = vsyncpa [#allocation6], 0
    %21 = vsyncpa [#allocation8], 0
    loop: start=0, step=1, limit=4
    $region2: #{ribcage_forward.1} parent=1 // loop_pre_header
      _
    $region3: #{ribcage_forward.1} parent=1 // loop_header
      %s23 = sphi 0, %s27
      %p24 = scmp.ge.s32.totalorder %s23, 4
      %s33 = sphi 0, %s35
      %s36 = sphi 0, %s33
      %s37 = sphi 0, %s36
      %s53 = sphi 0, %s37
      %s57 = sphi 0, %s57
      %s59 = sphi 0, %s57
      %s60 = sphi 0, %s59
      %s74 = sphi 0, %s60
      %s78 = sphi 0, %s78
      %s80 = sphi 0, %s78
      %s81 = sphi 0, %s80
      %s95 = sphi 0, %s81
      %s99 = sphi 0, %s99
      %s101 = sphi 0, %s99
      %s102 = sphi 0, %s101
      %s116 = sphi 0, %s102
      %s120 = sphi 0, %s120
      %s122 = sphi 0, %s120
      %s123 = sphi 0, %s122
      %s137 = sphi 0, %s123
      %s141 = sphi 0, %s141
      %s143 = sphi 0, %s141
      %s144 = sphi 0, %s143
      %s158 = sphi 0, %s144
      %s162 = sphi 0, %s162
      %s164 = sphi 0, %s162
      %s165 = sphi 0, %s164
      %s179 = sphi 0, %s165
      %s183 = sphi 0, %s183
      %s185 = sphi 0, %s183
      %s186 = sphi 0, %s185
      %s200 = sphi 0, %s186
      %s204 = sphi 0, %s204
      %s206 = sphi 0, %s204
      %s207 = sphi 0, %s206
      %s221 = sphi 0, %s207
      %s225 = sphi 0, %s225
      %s227 = sphi 0, %s225
      %s228 = sphi 0, %s227
      %s242 = sphi 0, %s228
      %s246 = sphi 0, %s246
      %s248 = sphi 0, %s246
      %s249 = sphi 0, %s248
      %s263 = sphi 0, %s249
      %s267 = sphi 0, %s267
      %s269 = sphi 0, %s267
      %s270 = sphi 0, %s269
      %s284 = sphi 0, %s270
      %s288 = sphi 0, %s288
      %s290 = sphi 0, %s288
      %s291 = sphi 0, %s290
      %s305 = sphi 0, %s291
      %s311 = sphi 0, %s313
      %s314 = sphi 0, %s311
      %s315 = sphi 0, %s314
      %s331 = sphi 0, %s315
    $region4: #{ribcage_forward.1} parent=1 // loop_header_branch
      %26 = sbr.rel (%p24) target = $region8
    $region5: #{ribcage_forward.1} parent=1 // loop_body
      %s28 = ssub.s32 %s23, 1
      %s29 = ssub.s32 %s23, 2
      %s30 = sadd.s32 %s23, 1
      %s31 = ssub.s32 %s23, %s30
      %p32 = scmp.eq.s32.totalorder %s31, 0
      %s34 = sadd.s32 %s33, 1
      %s35 = scalar_select %p32, %s33, %s34
      %p38 = pneg %p32
      %p39 = scmp.eq.s32.totalorder %s23, 1
      %p40 = por %p38, %p39
      %p41 = scmp.ne.s32.totalorder %s33, %s36
      %p42 = scmp.eq.s32.totalorder %s23, 0
      %p43 = por %p41, %p42
      %p44 = scmp.ne.s32.totalorder %s33, %s36
      %p45 = scmp.eq.s32.totalorder %s28, 1
      %p46 = por %p44, %p45
      %p47 = scmp.ne.s32.totalorder %s36, %s37
      %p48 = scmp.eq.s32.totalorder %s28, 0
      %p49 = por %p47, %p48
      %p50 = scmp.ne.s32.totalorder %s36, %s37
      %p51 = scmp.eq.s32.totalorder %s29, 1
      %p52 = por %p50, %p51
      %p54 = scmp.ne.s32.totalorder %s37, %s53
      %p55 = scmp.eq.s32.totalorder %s29, 0
      %p56 = por %p54, %p55
      %s58 = sadd.s32 %s57, 1
      %p61 = scmp.eq.s32.totalorder %s23, 1
      %p62 = scmp.ne.s32.totalorder %s57, %s59
      %p63 = scmp.eq.s32.totalorder %s23, 0
      %p64 = por %p62, %p63
      %p65 = scmp.ne.s32.totalorder %s57, %s59
      %p66 = scmp.eq.s32.totalorder %s28, 1
      %p67 = por %p65, %p66
      %p68 = scmp.ne.s32.totalorder %s59, %s60
      %p69 = scmp.eq.s32.totalorder %s28, 0
      %p70 = por %p68, %p69
      %p71 = scmp.ne.s32.totalorder %s59, %s60
      %p72 = scmp.eq.s32.totalorder %s29, 1
      %p73 = por %p71, %p72
      %p75 = scmp.ne.s32.totalorder %s60, %s74
      %p76 = scmp.eq.s32.totalorder %s29, 0
      %p77 = por %p75, %p76
      %s79 = sadd.s32 %s78, 1
      %p82 = scmp.eq.s32.totalorder %s23, 1
      %p83 = scmp.ne.s32.totalorder %s78, %s80
      %p84 = scmp.eq.s32.totalorder %s23, 0
      %p85 = por %p83, %p84
      %p86 = scmp.ne.s32.totalorder %s78, %s80
      %p87 = scmp.eq.s32.totalorder %s28, 1
      %p88 = por %p86, %p87
      %p89 = scmp.ne.s32.totalorder %s80, %s81
      %p90 = scmp.eq.s32.totalorder %s28, 0
      %p91 = por %p89, %p90
      %p92 = scmp.ne.s32.totalorder %s80, %s81
      %p93 = scmp.eq.s32.totalorder %s29, 1
      %p94 = por %p92, %p93
      %p96 = scmp.ne.s32.totalorder %s81, %s95
      %p97 = scmp.eq.s32.totalorder %s29, 0
      %p98 = por %p96, %p97
      %s100 = sadd.s32 %s99, 1
      %p103 = scmp.eq.s32.totalorder %s23, 1
      %p104 = scmp.ne.s32.totalorder %s99, %s101
      %p105 = scmp.eq.s32.totalorder %s23, 0
      %p106 = por %p104, %p105
      %p107 = scmp.ne.s32.totalorder %s99, %s101
      %p108 = scmp.eq.s32.totalorder %s28, 1
      %p109 = por %p107, %p108
      %p110 = scmp.ne.s32.totalorder %s101, %s102
      %p111 = scmp.eq.s32.totalorder %s28, 0
      %p112 = por %p110, %p111
      %p113 = scmp.ne.s32.totalorder %s101, %s102
      %p114 = scmp.eq.s32.totalorder %s29, 1
      %p115 = por %p113, %p114
      %p117 = scmp.ne.s32.totalorder %s102, %s116
      %p118 = scmp.eq.s32.totalorder %s29, 0
      %p119 = por %p117, %p118
      %s121 = sadd.s32 %s120, 1
      %p124 = scmp.eq.s32.totalorder %s23, 1
      %p125 = scmp.ne.s32.totalorder %s120, %s122
      %p126 = scmp.eq.s32.totalorder %s23, 0
      %p127 = por %p125, %p126
      %p128 = scmp.ne.s32.totalorder %s120, %s122
      %p129 = scmp.eq.s32.totalorder %s28, 1
      %p130 = por %p128, %p129
      %p131 = scmp.ne.s32.totalorder %s122, %s123
      %p132 = scmp.eq.s32.totalorder %s28, 0
      %p133 = por %p131, %p132
      %p134 = scmp.ne.s32.totalorder %s122, %s123
      %p135 = scmp.eq.s32.totalorder %s29, 1
      %p136 = por %p134, %p135
      %p138 = scmp.ne.s32.totalorder %s123, %s137
      %p139 = scmp.eq.s32.totalorder %s29, 0
      %p140 = por %p138, %p139
      %s142 = sadd.s32 %s141, 1
      %p145 = scmp.eq.s32.totalorder %s23, 1
      %p146 = scmp.ne.s32.totalorder %s141, %s143
      %p147 = scmp.eq.s32.totalorder %s23, 0
      %p148 = por %p146, %p147
      %p149 = scmp.ne.s32.totalorder %s141, %s143
      %p150 = scmp.eq.s32.totalorder %s28, 1
      %p151 = por %p149, %p150
      %p152 = scmp.ne.s32.totalorder %s143, %s144
      %p153 = scmp.eq.s32.totalorder %s28, 0
      %p154 = por %p152, %p153
      %p155 = scmp.ne.s32.totalorder %s143, %s144
      %p156 = scmp.eq.s32.totalorder %s29, 1
      %p157 = por %p155, %p156
      %p159 = scmp.ne.s32.totalorder %s144, %s158
      %p160 = scmp.eq.s32.totalorder %s29, 0
      %p161 = por %p159, %p160
      %s163 = sadd.s32 %s162, 1
      %p166 = scmp.eq.s32.totalorder %s23, 1
      %p167 = scmp.ne.s32.totalorder %s162, %s164
      %p168 = scmp.eq.s32.totalorder %s23, 0
      %p169 = por %p167, %p168
      %p170 = scmp.ne.s32.totalorder %s162, %s164
      %p171 = scmp.eq.s32.totalorder %s28, 1
      %p172 = por %p170, %p171
      %p173 = scmp.ne.s32.totalorder %s164, %s165
      %p174 = scmp.eq.s32.totalorder %s28, 0
      %p175 = por %p173, %p174
      %p176 = scmp.ne.s32.totalorder %s164, %s165
      %p177 = scmp.eq.s32.totalorder %s29, 1
      %p178 = por %p176, %p177
      %p180 = scmp.ne.s32.totalorder %s165, %s179
      %p181 = scmp.eq.s32.totalorder %s29, 0
      %p182 = por %p180, %p181
      %s184 = sadd.s32 %s183, 1
      %p187 = scmp.eq.s32.totalorder %s23, 1
      %p188 = scmp.ne.s32.totalorder %s183, %s185
      %p189 = scmp.eq.s32.totalorder %s23, 0
      %p190 = por %p188, %p189
      %p191 = scmp.ne.s32.totalorder %s183, %s185
      %p192 = scmp.eq.s32.totalorder %s28, 1
      %p193 = por %p191, %p192
      %p194 = scmp.ne.s32.totalorder %s185, %s186
      %p195 = scmp.eq.s32.totalorder %s28, 0
      %p196 = por %p194, %p195
      %p197 = scmp.ne.s32.totalorder %s185, %s186
      %p198 = scmp.eq.s32.totalorder %s29, 1
      %p199 = por %p197, %p198
      %p201 = scmp.ne.s32.totalorder %s186, %s200
      %p202 = scmp.eq.s32.totalorder %s29, 0
      %p203 = por %p201, %p202
      %s205 = sadd.s32 %s204, 1
      %p208 = scmp.eq.s32.totalorder %s23, 1
      %p209 = scmp.ne.s32.totalorder %s204, %s206
      %p210 = scmp.eq.s32.totalorder %s23, 0
      %p211 = por %p209, %p210
      %p212 = scmp.ne.s32.totalorder %s204, %s206
      %p213 = scmp.eq.s32.totalorder %s28, 1
      %p214 = por %p212, %p213
      %p215 = scmp.ne.s32.totalorder %s206, %s207
      %p216 = scmp.eq.s32.totalorder %s28, 0
      %p217 = por %p215, %p216
      %p218 = scmp.ne.s32.totalorder %s206, %s207
      %p219 = scmp.eq.s32.totalorder %s29, 1
      %p220 = por %p218, %p219
      %p222 = scmp.ne.s32.totalorder %s207, %s221
      %p223 = scmp.eq.s32.totalorder %s29, 0
      %p224 = por %p222, %p223
      %s226 = sadd.s32 %s225, 1
      %p229 = scmp.eq.s32.totalorder %s23, 1
      %p230 = scmp.ne.s32.totalorder %s225, %s227
      %p231 = scmp.eq.s32.totalorder %s23, 0
      %p232 = por %p230, %p231
      %p233 = scmp.ne.s32.totalorder %s225, %s227
      %p234 = scmp.eq.s32.totalorder %s28, 1
      %p235 = por %p233, %p234
      %p236 = scmp.ne.s32.totalorder %s227, %s228
      %p237 = scmp.eq.s32.totalorder %s28, 0
      %p238 = por %p236, %p237
      %p239 = scmp.ne.s32.totalorder %s227, %s228
      %p240 = scmp.eq.s32.totalorder %s29, 1
      %p241 = por %p239, %p240
      %p243 = scmp.ne.s32.totalorder %s228, %s242
      %p244 = scmp.eq.s32.totalorder %s29, 0
      %p245 = por %p243, %p244
      %s247 = sadd.s32 %s246, 1
      %p250 = scmp.eq.s32.totalorder %s23, 1
      %p251 = scmp.ne.s32.totalorder %s246, %s248
      %p252 = scmp.eq.s32.totalorder %s23, 0
      %p253 = por %p251, %p252
      %p254 = scmp.ne.s32.totalorder %s246, %s248
      %p255 = scmp.eq.s32.totalorder %s28, 1
      %p256 = por %p254, %p255
      %p257 = scmp.ne.s32.totalorder %s248, %s249
      %p258 = scmp.eq.s32.totalorder %s28, 0
      %p259 = por %p257, %p258
      %p260 = scmp.ne.s32.totalorder %s248, %s249
      %p261 = scmp.eq.s32.totalorder %s29, 1
      %p262 = por %p260, %p261
      %p264 = scmp.ne.s32.totalorder %s249, %s263
      %p265 = scmp.eq.s32.totalorder %s29, 0
      %p266 = por %p264, %p265
      %s268 = sadd.s32 %s267, 1
      %p271 = scmp.eq.s32.totalorder %s23, 1
      %p272 = scmp.ne.s32.totalorder %s267, %s269
      %p273 = scmp.eq.s32.totalorder %s23, 0
      %p274 = por %p272, %p273
      %p275 = scmp.ne.s32.totalorder %s267, %s269
      %p276 = scmp.eq.s32.totalorder %s28, 1
      %p277 = por %p275, %p276
      %p278 = scmp.ne.s32.totalorder %s269, %s270
      %p279 = scmp.eq.s32.totalorder %s28, 0
      %p280 = por %p278, %p279
      %p281 = scmp.ne.s32.totalorder %s269, %s270
      %p282 = scmp.eq.s32.totalorder %s29, 1
      %p283 = por %p281, %p282
      %p285 = scmp.ne.s32.totalorder %s270, %s284
      %p286 = scmp.eq.s32.totalorder %s29, 0
      %p287 = por %p285, %p286
      %s289 = sadd.s32 %s288, 1
      %p292 = scmp.eq.s32.totalorder %s23, 1
      %p293 = scmp.ne.s32.totalorder %s288, %s290
      %p294 = scmp.eq.s32.totalorder %s23, 0
      %p295 = por %p293, %p294
      %p296 = scmp.ne.s32.totalorder %s288, %s290
      %p297 = scmp.eq.s32.totalorder %s28, 1
      %p298 = por %p296, %p297
      %p299 = scmp.ne.s32.totalorder %s290, %s291
      %p300 = scmp.eq.s32.totalorder %s28, 0
      %p301 = por %p299, %p300
      %p302 = scmp.ne.s32.totalorder %s290, %s291
      %p303 = scmp.eq.s32.totalorder %s29, 1
      %p304 = por %p302, %p303
      %p306 = scmp.ne.s32.totalorder %s291, %s305
      %p307 = scmp.eq.s32.totalorder %s29, 0
      %p308 = por %p306, %p307
      %s309 = ssub.s32 %s23, %s30
      %p310 = scmp.eq.s32.totalorder %s309, 0
      %s312 = sadd.s32 %s311, 1
      %s313 = scalar_select %p310, %s311, %s312
      %p316 = pneg %p310
      %p317 = scmp.eq.s32.totalorder %s23, 1
      %p318 = por %p316, %p317
      %p319 = scmp.ne.s32.totalorder %s311, %s314
      %p320 = scmp.eq.s32.totalorder %s23, 0
      %p321 = por %p319, %p320
      %p322 = scmp.ne.s32.totalorder %s311, %s314
      %p323 = scmp.eq.s32.totalorder %s28, 1
      %p324 = por %p322, %p323
      %p325 = scmp.ne.s32.totalorder %s314, %s315
      %p326 = scmp.eq.s32.totalorder %s28, 0
      %p327 = por %p325, %p326
      %p328 = scmp.ne.s32.totalorder %s314, %s315
      %p329 = scmp.eq.s32.totalorder %s29, 1
      %p330 = por %p328, %p329
      %p332 = scmp.ne.s32.totalorder %s315, %s331
      %p333 = scmp.eq.s32.totalorder %s29, 0
      %p334 = por %p332, %p333
      %p335 = scmp.le.s32.totalorder 1, %s23
      %p336 = scmp.lt.s32.totalorder %s23, 3
      %p337 = pnand %p335, %p336
      %p338 = pneg %p337
      // Predicated region
      $region9: #{ribcage_forward.1} parent=5 // pred_check
        _
      $region10: #{ribcage_forward.1} parent=5 // pred_check_branch
        %340 = sbr.rel (%p337) target = $region12
      $region11: #{ribcage_forward.1} parent=5 // pred_region
        %s341 = ssub.s32 %s23, 1
        // Predicated region
        $region13: #{ribcage_forward.1} parent=11 // pred_check
          %p342 = pneg %p70
        $region14: #{ribcage_forward.1} parent=11 // pred_check_branch
          %344 = sbr.rel (%p342) target = $region16
        $region15: #{ribcage_forward.1} parent=11 // pred_region
          _
        $region16: #{ribcage_forward.1} parent=11 // pred_fallthru
          _
        // Predicated region
        $region17: #{ribcage_forward.1} parent=11 // pred_check
          %p345 = pneg %p91
        $region18: #{ribcage_forward.1} parent=11 // pred_check_branch
          %347 = sbr.rel (%p345) target = $region20
        $region19: #{ribcage_forward.1} parent=11 // pred_region
          _
        $region20: #{ribcage_forward.1} parent=11 // pred_fallthru
          _
        // Predicated region
        $region21: #{ribcage_forward.1} parent=11 // pred_check
          %p348 = pneg %p112
        $region22: #{ribcage_forward.1} parent=11 // pred_check_branch
          %350 = sbr.rel (%p348) target = $region24
        $region23: #{ribcage_forward.1} parent=11 // pred_region
          %352 = vsyncadd [#allocation6], 0
          %s353 = sshll.u32 %s3, 4
          %s354 = int_to_ptr.hbm [resolvable:$true] %s353
          %s355 = sshll.u32 [#allocation5], 4
          %s356 = int_to_ptr.vmem [resolvable:$true] %s355
          %361 = dma.hbm_to_vmem [thread:$0]  %s354, 15360, %s356, [#allocation6], 128, 128, 8
        $region24: #{ribcage_forward.1} parent=11 // pred_fallthru
          _
        // Predicated region
        $region25: #{ribcage_forward.1} parent=11 // pred_check
          %p362 = pneg %p133
        $region26: #{ribcage_forward.1} parent=11 // pred_check_branch
          %364 = sbr.rel (%p362) target = $region28
        $region27: #{ribcage_forward.1} parent=11 // pred_region
          _
        $region28: #{ribcage_forward.1} parent=11 // pred_fallthru
          _
        // Predicated region
        $region29: #{ribcage_forward.1} parent=11 // pred_check
          %p365 = pneg %p154
        $region30: #{ribcage_forward.1} parent=11 // pred_check_branch
          %367 = sbr.rel (%p365) target = $region32
        $region31: #{ribcage_forward.1} parent=11 // pred_region
          %369 = vsyncadd [#allocation8], 0
          %s370 = sshll.u32 %s5, 4
          %s371 = int_to_ptr.hbm [resolvable:$true] %s370
          %s372 = sshll.u32 [#allocation7], 4
          %s373 = int_to_ptr.vmem [resolvable:$true] %s372
          %378 = dma.hbm_to_vmem [thread:$0]  %s371, 3840, %s373, [#allocation8], 64, 64, 4
        $region32: #{ribcage_forward.1} parent=11 // pred_fallthru
          _
        // Predicated region
        $region33: #{ribcage_forward.1} parent=11 // pred_check
          %p379 = pneg %p175
        $region34: #{ribcage_forward.1} parent=11 // pred_check_branch
          %381 = sbr.rel (%p379) target = $region36
        $region35: #{ribcage_forward.1} parent=11 // pred_region
          _
        $region36: #{ribcage_forward.1} parent=11 // pred_fallthru
          _
        // Predicated region
        $region37: #{ribcage_forward.1} parent=11 // pred_check
          %p382 = pneg %p196
        $region38: #{ribcage_forward.1} parent=11 // pred_check_branch
          %384 = sbr.rel (%p382) target = $region40
        $region39: #{ribcage_forward.1} parent=11 // pred_region
          _
        $region40: #{ribcage_forward.1} parent=11 // pred_fallthru
          _
        // Predicated region
        $region41: #{ribcage_forward.1} parent=11 // pred_check
          %p385 = pneg %p217
        $region42: #{ribcage_forward.1} parent=11 // pred_check_branch
          %387 = sbr.rel (%p385) target = $region44
        $region43: #{ribcage_forward.1} parent=11 // pred_region
          _
        $region44: #{ribcage_forward.1} parent=11 // pred_fallthru
          _
        // Predicated region
        $region45: #{ribcage_forward.1} parent=11 // pred_check
          %p388 = pneg %p238
        $region46: #{ribcage_forward.1} parent=11 // pred_check_branch
          %390 = sbr.rel (%p388) target = $region48
        $region47: #{ribcage_forward.1} parent=11 // pred_region
          _
        $region48: #{ribcage_forward.1} parent=11 // pred_fallthru
          _
        // Predicated region
        $region49: #{ribcage_forward.1} parent=11 // pred_check
          %p391 = pneg %p259
        $region50: #{ribcage_forward.1} parent=11 // pred_check_branch
          %393 = sbr.rel (%p391) target = $region52
        $region51: #{ribcage_forward.1} parent=11 // pred_region
          _
        $region52: #{ribcage_forward.1} parent=11 // pred_fallthru
          _
        // Predicated region
        $region53: #{ribcage_forward.1} parent=11 // pred_check
          %p394 = pneg %p280
        $region54: #{ribcage_forward.1} parent=11 // pred_check_branch
          %396 = sbr.rel (%p394) target = $region56
        $region55: #{ribcage_forward.1} parent=11 // pred_region
          _
        $region56: #{ribcage_forward.1} parent=11 // pred_fallthru
          _
        // Predicated region
        $region57: #{ribcage_forward.1} parent=11 // pred_check
          %p397 = pneg %p301
        $region58: #{ribcage_forward.1} parent=11 // pred_check_branch
          %399 = sbr.rel (%p397) target = $region60
        $region59: #{ribcage_forward.1} parent=11 // pred_region
          _
        $region60: #{ribcage_forward.1} parent=11 // pred_fallthru
          _
      $region12: #{ribcage_forward.1} parent=5 // pred_fallthru
        _
      %p400 = scmp.lt.s32.totalorder %s23, 2
      // Predicated region
      $region61: #{ribcage_forward.1} parent=5 // pred_check
        %p401 = pneg %p400
      $region62: #{ribcage_forward.1} parent=5 // pred_check_branch
        %403 = sbr.rel (%p401) target = $region64
      $region63: #{ribcage_forward.1} parent=5 // pred_region
        // Predicated region
        $region65: #{ribcage_forward.1} parent=63 // pred_check
          %p404 = pneg %p43
        $region66: #{ribcage_forward.1} parent=63 // pred_check_branch
          %406 = sbr.rel (%p404) target = $region68
        $region67: #{ribcage_forward.1} parent=63 // pred_region
          %p407 = scmp.lt.s32.totalorder %s23, 1
          %s408 = scalar_select %p407, %s23, 1
          %s409 = smul.addr %s408, 2
          %s410 = smul.addr %s409, 8
          %s411 = scalar_lea.vmem %s0, %s410
        $region68: #{ribcage_forward.1} parent=63 // pred_fallthru
          _
      $region64: #{ribcage_forward.1} parent=5 // pred_fallthru
        _
      %p412 = scmp.le.s32.totalorder 1, %s23
      %p413 = scmp.lt.s32.totalorder %s23, 3
      %p414 = pnand %p412, %p413
      %p415 = pneg %p414
      // Predicated region
      $region69: #{ribcage_forward.1} parent=5 // pred_check
        _
      $region70: #{ribcage_forward.1} parent=5 // pred_check_branch
        %417 = sbr.rel (%p414) target = $region72
      $region71: #{ribcage_forward.1} parent=5 // pred_region
        %s418 = ssub.s32 %s23, 1
        // Predicated region
        $region73: #{ribcage_forward.1} parent=71 // pred_check
          %p419 = pneg %p112
        $region74: #{ribcage_forward.1} parent=71 // pred_check_branch
          %421 = sbr.rel (%p419) target = $region76
        $region75: #{ribcage_forward.1} parent=71 // pred_region
          %423 = dma.done [#allocation6], 15360
        $region76: #{ribcage_forward.1} parent=71 // pred_fallthru
          _
        // Predicated region
        $region77: #{ribcage_forward.1} parent=71 // pred_check
          %p424 = pneg %p154
        $region78: #{ribcage_forward.1} parent=71 // pred_check_branch
          %426 = sbr.rel (%p424) target = $region80
        $region79: #{ribcage_forward.1} parent=71 // pred_region
          %428 = dma.done [#allocation8], 3840
        $region80: #{ribcage_forward.1} parent=71 // pred_fallthru
          _
        %p429 = scmp.lt.s32.totalorder %s28, 1
        %s430 = scalar_select %p429, %s28, 1
        %s431 = smul.addr %s430, 2
        %s432 = smul.addr %s431, 8
        %s433 = scalar_lea.vmem %s0, %s432
        %p434 = pneg %p49
        %p435 = pneg %p46
        %p436 = pneg %p70
        %p437 = pneg %p67
        %p438 = pneg %p91
        %p439 = pneg %p88
        %p440 = pneg %p112
        %p441 = pneg %p109
        %p442 = pneg %p133
        %p443 = pneg %p130
        %p444 = pneg %p154
        %p445 = pneg %p151
        %p446 = pneg %p175
        %p447 = pneg %p172
        %p448 = pneg %p196
        %p449 = pneg %p193
        %p450 = pneg %p217
        %p451 = pneg %p214
        %p452 = pneg %p238
        %p453 = pneg %p235
        %p454 = pneg %p259
        %p455 = pneg %p256
        %p456 = pneg %p280
        %p457 = pneg %p277
        %p458 = pneg %p301
        %p459 = pneg %p298
        %p460 = pneg %p327
        %p461 = pneg %p324
        %p462 = scmp.lt.s32.totalorder %s28, 1
        %s463 = scalar_select %p462, %s28, 1
        %s464 = scalar_lea.vmem %s13, %s463
        %p465 = scmp.lt.s32.totalorder %s28, 1
        %s466 = scalar_select %p465, %s28, 1
        %s467 = smul.addr %s466, 2
        %s468 = smul.addr %s467, 8
        %s469 = scalar_lea.vmem %s0, %s468
        %p470 = scmp.lt.s32.totalorder %s28, 1
        %s471 = scalar_select %p470, %s28, 1
        %s472 = scalar_lea.vmem %s13, %s471
        %v474 = vld [vmem:[%s469] sm:$0xff]
        %v475 = vld [vmem:[%s469 + $0x8] sm:$0xff]
        %vm478 = vcmask 1040384
        %v479 = vrot.slane %v474, 7
        %v480 = vrot.slane %v475, 7
        %v481 = vsel %vm478, %v479, %v480
        %v485 = vsel %vm478, 0.0, %v479
        %v486 = vsel %vm478, %v480, 0.0
        %v487 = vpack.c.bf16 %v481, %v485
        %v488 = vld [vmem:[%s1] sm:$0xff]
        %v489 = vld [vmem:[%s1 + $0x8] sm:$0xf]
        %v490 = vld [vmem:[%s1 + $0xc] sm:$0xff]
        %v491 = vld [vmem:[%s1 + $0x14] sm:$0xf]
        %v492 = vld [vmem:[%s1 + $0x18] sm:$0xff]
        %v493 = vld [vmem:[%s1 + $0x20] sm:$0xf]
        %v494 = vld [vmem:[%s1 + $0x24] sm:$0xff]
        %v495 = vld [vmem:[%s1 + $0x2c] sm:$0xf]
        %v496 = vld [vmem:[%s1 + $0x30] sm:$0xff]
        %v497 = vld [vmem:[%s1 + $0x38] sm:$0xf]
        %v498 = vld [vmem:[%s1 + $0x3c] sm:$0xff]
        %v499 = vld [vmem:[%s1 + $0x44] sm:$0xf]
        %v500 = vld [vmem:[%s1 + $0x48] sm:$0xff]
        %v501 = vld [vmem:[%s1 + $0x50] sm:$0xf]
        %v502 = vld [vmem:[%s1 + $0x54] sm:$0xff]
        %v503 = vld [vmem:[%s1 + $0x5c] sm:$0xf]
        %s504 = scalar_lea.vmem %s1, 96
        %v505 = vld [vmem:[%s504] sm:$0xff]
        %v506 = vld [vmem:[%s504 + $0x8] sm:$0xf]
        %v507 = vld [vmem:[%s504 + $0xc] sm:$0xff]
        %v508 = vld [vmem:[%s504 + $0x14] sm:$0xf]
        %v509 = vld [vmem:[%s504 + $0x18] sm:$0xff]
        %v510 = vld [vmem:[%s504 + $0x20] sm:$0xf]
        %v511 = vld [vmem:[%s504 + $0x24] sm:$0xff]
        %v512 = vld [vmem:[%s504 + $0x2c] sm:$0xf]
        %v513 = vld [vmem:[%s504 + $0x30] sm:$0xff]
        %v514 = vld [vmem:[%s504 + $0x38] sm:$0xf]
        %v515 = vld [vmem:[%s504 + $0x3c] sm:$0xff]
        %v516 = vld [vmem:[%s504 + $0x44] sm:$0xf]
        %v517 = vld [vmem:[%s504 + $0x48] sm:$0xff]
        %v518 = vld [vmem:[%s504 + $0x50] sm:$0xf]
        %v519 = vld [vmem:[%s504 + $0x54] sm:$0xff]
        %v520 = vld [vmem:[%s504 + $0x5c] sm:$0xf]
        %v522 = vshrl.u32 %v487, 16
        %v524 = vshll.u32 %v487, 16
        %v526 = vrot.slane %v524, 1
        %v527 = vor.u32 %v522, %v526
        %v544 = vunpack.c.l.b16 %v505
        %v545 = vunpack.c.h.b16 %v505
        %v546 = vunpack.c.l.b16 %v506
        %v547 = vunpack.c.l.b16 %v507
        %v548 = vunpack.c.h.b16 %v507
        %v549 = vunpack.c.l.b16 %v508
        %v550 = vunpack.c.l.b16 %v509
        %v551 = vunpack.c.h.b16 %v509
        %v552 = vunpack.c.l.b16 %v510
        %v553 = vunpack.c.l.b16 %v511
        %v554 = vunpack.c.h.b16 %v511
        %v555 = vunpack.c.l.b16 %v512
        %v556 = vunpack.c.l.b16 %v513
        %v557 = vunpack.c.h.b16 %v513
        %v558 = vunpack.c.l.b16 %v514
        %v559 = vunpack.c.l.b16 %v515
        %v560 = vunpack.c.h.b16 %v515
        %v561 = vunpack.c.l.b16 %v516
        %v562 = vunpack.c.l.b16 %v517
        %v563 = vunpack.c.h.b16 %v517
        %v564 = vunpack.c.l.b16 %v518
        %v565 = vunpack.c.l.b16 %v519
        %v566 = vunpack.c.h.b16 %v519
        %v567 = vunpack.c.l.b16 %v520
        %v568 = vpack.c.b16 %v547, %v544
        %v569 = vpack.c.b16 %v548, %v545
        %v570 = vpack.c.b16 %v549, %v546
        %v571 = vpack.c.b16 %v553, %v550
        %v572 = vpack.c.b16 %v554, %v551
        %v573 = vpack.c.b16 %v555, %v552
        %v574 = vpack.c.b16 %v559, %v556
        %v575 = vpack.c.b16 %v560, %v557
        %v576 = vpack.c.b16 %v561, %v558
        %v577 = vpack.c.b16 %v565, %v562
        %v578 = vpack.c.b16 %v566, %v563
        %v579 = vpack.c.b16 %v567, %v564
        %vm592 = vcmask 523264
        %v594 = vsel %vm592, %v527, 0
        %596 = vmatpush.bf16.msra.mxu0 0
        %597 = vmatpush.bf16.msra.mxu0 0
        %598 = vmatpush.bf16.msra.mxu0 0
        %599 = vmatpush.bf16.msra.mxu0 0
        %600 = vmatpush.bf16.msra.mxu0 %v577
        %601 = vmatpush.bf16.msra.mxu0 %v574
        %602 = vmatpush.bf16.msra.mxu0 %v571
        %603 = vmatpush.bf16.msra.mxu0 %v568
        %604 = vmatmul.bf16.gmra.mxu0 %v594
        %v605 = vpop.f32.mrf.mxu0
        %v606 = vadd.f32 0.0, %v605
        %v607 = vpop.f32.mrf.mxu0
        %v608 = vadd.f32 0.0, %v607
        %609 = vdwg.mxu0
        %610 = vmatpush.bf16.msra.mxu0 0
        %611 = vmatpush.bf16.msra.mxu0 0
        %612 = vmatpush.bf16.msra.mxu0 0
        %613 = vmatpush.bf16.msra.mxu0 0
        %614 = vmatpush.bf16.msra.mxu0 %v578
        %615 = vmatpush.bf16.msra.mxu0 %v575
        %616 = vmatpush.bf16.msra.mxu0 %v572
        %617 = vmatpush.bf16.msra.mxu0 %v569
        %618 = vmatmul.bf16.gmra.mxu0 %v594
        %v619 = vpop.f32.mrf.mxu0
        %v620 = vadd.f32 0.0, %v619
        %v621 = vpop.f32.mrf.mxu0
        %v622 = vadd.f32 0.0, %v621
        %623 = vdwg.mxu0
        %624 = vmatpush.bf16.msra.mxu0 0
        %625 = vmatpush.bf16.msra.mxu0 0
        %626 = vmatpush.bf16.msra.mxu0 0
        %627 = vmatpush.bf16.msra.mxu0 0
        %628 = vmatpush.bf16.msra.mxu0 %v579
        %629 = vmatpush.bf16.msra.mxu0 %v576
        %630 = vmatpush.bf16.msra.mxu0 %v573
        %631 = vmatpush.bf16.msra.mxu0 %v570
        %632 = vmatmul.bf16.gmra.mxu0 %v594
        %v633 = vpop.f32.mrf.mxu0
        %v634 = vadd.f32 0.0, %v633
        %v635 = vpop.f32.mrf.mxu0
        %v636 = vadd.f32 0.0, %v635
        %637 = vdwg.mxu0
        %v654 = vunpack.c.l.b16 %v488
        %v655 = vunpack.c.h.b16 %v488
        %v656 = vunpack.c.l.b16 %v489
        %v657 = vunpack.c.l.b16 %v490
        %v658 = vunpack.c.h.b16 %v490
        %v659 = vunpack.c.l.b16 %v491
        %v660 = vunpack.c.l.b16 %v492
        %v661 = vunpack.c.h.b16 %v492
        %v662 = vunpack.c.l.b16 %v493
        %v663 = vunpack.c.l.b16 %v494
        %v664 = vunpack.c.h.b16 %v494
        %v665 = vunpack.c.l.b16 %v495
        %v666 = vunpack.c.l.b16 %v496
        %v667 = vunpack.c.h.b16 %v496
        %v668 = vunpack.c.l.b16 %v497
        %v669 = vunpack.c.l.b16 %v498
        %v670 = vunpack.c.h.b16 %v498
        %v671 = vunpack.c.l.b16 %v499
        %v672 = vunpack.c.l.b16 %v500
        %v673 = vunpack.c.h.b16 %v500
        %v674 = vunpack.c.l.b16 %v501
        %v675 = vunpack.c.l.b16 %v502
        %v676 = vunpack.c.h.b16 %v502
        %v677 = vunpack.c.l.b16 %v503
        %v678 = vpack.c.b16 %v657, %v654
        %v679 = vpack.c.b16 %v658, %v655
        %v680 = vpack.c.b16 %v659, %v656
        %v681 = vpack.c.b16 %v663, %v660
        %v682 = vpack.c.b16 %v664, %v661
        %v683 = vpack.c.b16 %v665, %v662
        %v684 = vpack.c.b16 %v669, %v666
        %v685 = vpack.c.b16 %v670, %v667
        %v686 = vpack.c.b16 %v671, %v668
        %v687 = vpack.c.b16 %v675, %v672
        %v688 = vpack.c.b16 %v676, %v673
        %v689 = vpack.c.b16 %v677, %v674
        %v702 = vsel %vm592, %v487, 0
        %704 = vmatpush.bf16.msra.mxu0 0
        %705 = vmatpush.bf16.msra.mxu0 0
        %706 = vmatpush.bf16.msra.mxu0 0
        %707 = vmatpush.bf16.msra.mxu0 0
        %708 = vmatpush.bf16.msra.mxu0 %v687
        %709 = vmatpush.bf16.msra.mxu0 %v684
        %710 = vmatpush.bf16.msra.mxu0 %v681
        %711 = vmatpush.bf16.msra.mxu0 %v678
        %712 = vmatmul.bf16.gmra.mxu0 %v702
        %v713 = vpop.f32.mrf.mxu0
        %v714 = vadd.f32 %v606, %v713
        %v715 = vpop.f32.mrf.mxu0
        %v716 = vadd.f32 %v608, %v715
        %717 = vdwg.mxu0
        %718 = vmatpush.bf16.msra.mxu0 0
        %719 = vmatpush.bf16.msra.mxu0 0
        %720 = vmatpush.bf16.msra.mxu0 0
        %721 = vmatpush.bf16.msra.mxu0 0
        %722 = vmatpush.bf16.msra.mxu0 %v688
        %723 = vmatpush.bf16.msra.mxu0 %v685
        %724 = vmatpush.bf16.msra.mxu0 %v682
        %725 = vmatpush.bf16.msra.mxu0 %v679
        %726 = vmatmul.bf16.gmra.mxu0 %v702
        %v727 = vpop.f32.mrf.mxu0
        %v728 = vadd.f32 %v620, %v727
        %v729 = vpop.f32.mrf.mxu0
        %v730 = vadd.f32 %v622, %v729
        %731 = vdwg.mxu0
        %732 = vmatpush.bf16.msra.mxu0 0
        %733 = vmatpush.bf16.msra.mxu0 0
        %734 = vmatpush.bf16.msra.mxu0 0
        %735 = vmatpush.bf16.msra.mxu0 0
        %736 = vmatpush.bf16.msra.mxu0 %v689
        %737 = vmatpush.bf16.msra.mxu0 %v686
        %738 = vmatpush.bf16.msra.mxu0 %v683
        %739 = vmatpush.bf16.msra.mxu0 %v680
        %740 = vmatmul.bf16.gmra.mxu0 %v702
        %v741 = vpop.f32.mrf.mxu0
        %v742 = vadd.f32 %v634, %v741
        %v743 = vpop.f32.mrf.mxu0
        %v744 = vadd.f32 %v636, %v743
        %745 = vdwg.mxu0
        %s746 = scalar_lea.vmem %s1, 192
        %v747 = vld [vmem:[%s746] sm:$0xff]
        %v748 = vld [vmem:[%s746 + $0x8] sm:$0xf]
        %v749 = vld [vmem:[%s746 + $0xc] sm:$0xff]
        %v750 = vld [vmem:[%s746 + $0x14] sm:$0xf]
        %v751 = vld [vmem:[%s746 + $0x18] sm:$0xff]
        %v752 = vld [vmem:[%s746 + $0x20] sm:$0xf]
        %v753 = vld [vmem:[%s746 + $0x24] sm:$0xff]
        %v754 = vld [vmem:[%s746 + $0x2c] sm:$0xf]
        %v755 = vld [vmem:[%s746 + $0x30] sm:$0xff]
        %v756 = vld [vmem:[%s746 + $0x38] sm:$0xf]
        %v757 = vld [vmem:[%s746 + $0x3c] sm:$0xff]
        %v758 = vld [vmem:[%s746 + $0x44] sm:$0xf]
        %v759 = vld [vmem:[%s746 + $0x48] sm:$0xff]
        %v760 = vld [vmem:[%s746 + $0x50] sm:$0xf]
        %v761 = vld [vmem:[%s746 + $0x54] sm:$0xff]
        %v762 = vld [vmem:[%s746 + $0x5c] sm:$0xf]
        %v764 = vrot.slane %v487, 1
        %v781 = vunpack.c.l.b16 %v747
        %v782 = vunpack.c.h.b16 %v747
        %v783 = vunpack.c.l.b16 %v748
        %v784 = vunpack.c.l.b16 %v749
        %v785 = vunpack.c.h.b16 %v749
        %v786 = vunpack.c.l.b16 %v750
        %v787 = vunpack.c.l.b16 %v751
        %v788 = vunpack.c.h.b16 %v751
        %v789 = vunpack.c.l.b16 %v752
        %v790 = vunpack.c.l.b16 %v753
        %v791 = vunpack.c.h.b16 %v753
        %v792 = vunpack.c.l.b16 %v754
        %v793 = vunpack.c.l.b16 %v755
        %v794 = vunpack.c.h.b16 %v755
        %v795 = vunpack.c.l.b16 %v756
        %v796 = vunpack.c.l.b16 %v757
        %v797 = vunpack.c.h.b16 %v757
        %v798 = vunpack.c.l.b16 %v758
        %v799 = vunpack.c.l.b16 %v759
        %v800 = vunpack.c.h.b16 %v759
        %v801 = vunpack.c.l.b16 %v760
        %v802 = vunpack.c.l.b16 %v761
        %v803 = vunpack.c.h.b16 %v761
        %v804 = vunpack.c.l.b16 %v762
        %v805 = vpack.c.b16 %v784, %v781
        %v806 = vpack.c.b16 %v785, %v782
        %v807 = vpack.c.b16 %v786, %v783
        %v808 = vpack.c.b16 %v790, %v787
        %v809 = vpack.c.b16 %v791, %v788
        %v810 = vpack.c.b16 %v792, %v789
        %v811 = vpack.c.b16 %v796, %v793
        %v812 = vpack.c.b16 %v797, %v794
        %v813 = vpack.c.b16 %v798, %v795
        %v814 = vpack.c.b16 %v802, %v799
        %v815 = vpack.c.b16 %v803, %v800
        %v816 = vpack.c.b16 %v804, %v801
        %v830 = vsel %vm592, %v764, 0
        %832 = vmatpush.bf16.msra.mxu0 0
        %833 = vmatpush.bf16.msra.mxu0 0
        %834 = vmatpush.bf16.msra.mxu0 0
        %835 = vmatpush.bf16.msra.mxu0 0
        %836 = vmatpush.bf16.msra.mxu0 %v814
        %837 = vmatpush.bf16.msra.mxu0 %v811
        %838 = vmatpush.bf16.msra.mxu0 %v808
        %839 = vmatpush.bf16.msra.mxu0 %v805
        %840 = vmatmul.bf16.gmra.mxu0 %v830
        %v841 = vpop.f32.mrf.mxu0
        %v842 = vadd.f32 0.0, %v841
        %v843 = vpop.f32.mrf.mxu0
        %v844 = vadd.f32 0.0, %v843
        %845 = vdwg.mxu0
        %846 = vmatpush.bf16.msra.mxu0 0
        %847 = vmatpush.bf16.msra.mxu0 0
        %848 = vmatpush.bf16.msra.mxu0 0
        %849 = vmatpush.bf16.msra.mxu0 0
        %850 = vmatpush.bf16.msra.mxu0 %v815
        %851 = vmatpush.bf16.msra.mxu0 %v812
        %852 = vmatpush.bf16.msra.mxu0 %v809
        %853 = vmatpush.bf16.msra.mxu0 %v806
        %854 = vmatmul.bf16.gmra.mxu0 %v830
        %v855 = vpop.f32.mrf.mxu0
        %v856 = vadd.f32 0.0, %v855
        %v857 = vpop.f32.mrf.mxu0
        %v858 = vadd.f32 0.0, %v857
        %859 = vdwg.mxu0
        %860 = vmatpush.bf16.msra.mxu0 0
        %861 = vmatpush.bf16.msra.mxu0 0
        %862 = vmatpush.bf16.msra.mxu0 0
        %863 = vmatpush.bf16.msra.mxu0 0
        %864 = vmatpush.bf16.msra.mxu0 %v816
        %865 = vmatpush.bf16.msra.mxu0 %v813
        %866 = vmatpush.bf16.msra.mxu0 %v810
        %867 = vmatpush.bf16.msra.mxu0 %v807
        %868 = vmatmul.bf16.gmra.mxu0 %v830
        %v869 = vpop.f32.mrf.mxu0
        %v870 = vadd.f32 0.0, %v869
        %v871 = vpop.f32.mrf.mxu0
        %v872 = vadd.f32 0.0, %v871
        %873 = vdwg.mxu0
        %v874 = vadd.f32 %v714, %v842
        %v875 = vadd.f32 %v728, %v856
        %v876 = vadd.f32 %v742, %v870
        %v877 = vadd.f32 %v716, %v844
        %v878 = vadd.f32 %v730, %v858
        %v879 = vadd.f32 %v744, %v872
        %v880 = vpack.c.bf16 %v486, %v486
        %s881 = scalar_lea.vmem %s1, 288
        %v882 = vld [vmem:[%s881] sm:$0xff]
        %v883 = vld [vmem:[%s881 + $0x8] sm:$0xf]
        %v884 = vld [vmem:[%s881 + $0xc] sm:$0xff]
        %v885 = vld [vmem:[%s881 + $0x14] sm:$0xf]
        %v886 = vld [vmem:[%s881 + $0x18] sm:$0xff]
        %v887 = vld [vmem:[%s881 + $0x20] sm:$0xf]
        %v888 = vld [vmem:[%s881 + $0x24] sm:$0xff]
        %v889 = vld [vmem:[%s881 + $0x2c] sm:$0xf]
        %v890 = vld [vmem:[%s881 + $0x30] sm:$0xff]
        %v891 = vld [vmem:[%s881 + $0x38] sm:$0xf]
        %v892 = vld [vmem:[%s881 + $0x3c] sm:$0xff]
        %v893 = vld [vmem:[%s881 + $0x44] sm:$0xf]
        %v894 = vld [vmem:[%s881 + $0x48] sm:$0xff]
        %v895 = vld [vmem:[%s881 + $0x50] sm:$0xf]
        %v896 = vld [vmem:[%s881 + $0x54] sm:$0xff]
        %v897 = vld [vmem:[%s881 + $0x5c] sm:$0xf]
        %vm898 = vsmask.f32 6400
        %v899 = vrot.slane %v522, 1
        %v900 = vrot.slane %v524, 2
        %v901 = vor.u32 %v899, %v900
        %v903 = vshll.u32 %v880, 16
        %v905 = vrot.slane %v903, 2
        %v906 = vsel %vm898, %v901, %v905
        %v923 = vunpack.c.l.b16 %v882
        %v924 = vunpack.c.h.b16 %v882
        %v925 = vunpack.c.l.b16 %v883
        %v926 = vunpack.c.l.b16 %v884
        %v927 = vunpack.c.h.b16 %v884
        %v928 = vunpack.c.l.b16 %v885
        %v929 = vunpack.c.l.b16 %v886
        %v930 = vunpack.c.h.b16 %v886
        %v931 = vunpack.c.l.b16 %v887
        %v932 = vunpack.c.l.b16 %v888
        %v933 = vunpack.c.h.b16 %v888
        %v934 = vunpack.c.l.b16 %v889
        %v935 = vunpack.c.l.b16 %v890
        %v936 = vunpack.c.h.b16 %v890
        %v937 = vunpack.c.l.b16 %v891
        %v938 = vunpack.c.l.b16 %v892
        %v939 = vunpack.c.h.b16 %v892
        %v940 = vunpack.c.l.b16 %v893
        %v941 = vunpack.c.l.b16 %v894
        %v942 = vunpack.c.h.b16 %v894
        %v943 = vunpack.c.l.b16 %v895
        %v944 = vunpack.c.l.b16 %v896
        %v945 = vunpack.c.h.b16 %v896
        %v946 = vunpack.c.l.b16 %v897
        %v947 = vpack.c.b16 %v926, %v923
        %v948 = vpack.c.b16 %v927, %v924
        %v949 = vpack.c.b16 %v928, %v925
        %v950 = vpack.c.b16 %v932, %v929
        %v951 = vpack.c.b16 %v933, %v930
        %v952 = vpack.c.b16 %v934, %v931
        %v953 = vpack.c.b16 %v938, %v935
        %v954 = vpack.c.b16 %v939, %v936
        %v955 = vpack.c.b16 %v940, %v937
        %v956 = vpack.c.b16 %v944, %v941
        %v957 = vpack.c.b16 %v945, %v942
        %v958 = vpack.c.b16 %v946, %v943
        %v972 = vsel %vm592, %v906, 0
        %974 = vmatpush.bf16.msra.mxu0 0
        %975 = vmatpush.bf16.msra.mxu0 0
        %976 = vmatpush.bf16.msra.mxu0 0
        %977 = vmatpush.bf16.msra.mxu0 0
        %978 = vmatpush.bf16.msra.mxu0 %v956
        %979 = vmatpush.bf16.msra.mxu0 %v953
        %980 = vmatpush.bf16.msra.mxu0 %v950
        %981 = vmatpush.bf16.msra.mxu0 %v947
        %982 = vmatmul.bf16.gmra.mxu0 %v972
        %v983 = vpop.f32.mrf.mxu0
        %v984 = vadd.f32 0.0, %v983
        %v985 = vpop.f32.mrf.mxu0
        %v986 = vadd.f32 0.0, %v985
        %987 = vdwg.mxu0
        %988 = vmatpush.bf16.msra.mxu0 0
        %989 = vmatpush.bf16.msra.mxu0 0
        %990 = vmatpush.bf16.msra.mxu0 0
        %991 = vmatpush.bf16.msra.mxu0 0
        %992 = vmatpush.bf16.msra.mxu0 %v957
        %993 = vmatpush.bf16.msra.mxu0 %v954
        %994 = vmatpush.bf16.msra.mxu0 %v951
        %995 = vmatpush.bf16.msra.mxu0 %v948
        %996 = vmatmul.bf16.gmra.mxu0 %v972
        %v997 = vpop.f32.mrf.mxu0
        %v998 = vadd.f32 0.0, %v997
        %v999 = vpop.f32.mrf.mxu0
        %v1000 = vadd.f32 0.0, %v999
        %1001 = vdwg.mxu0
        %1002 = vmatpush.bf16.msra.mxu0 0
        %1003 = vmatpush.bf16.msra.mxu0 0
        %1004 = vmatpush.bf16.msra.mxu0 0
        %1005 = vmatpush.bf16.msra.mxu0 0
        %1006 = vmatpush.bf16.msra.mxu0 %v958
        %1007 = vmatpush.bf16.msra.mxu0 %v955
        %1008 = vmatpush.bf16.msra.mxu0 %v952
        %1009 = vmatpush.bf16.msra.mxu0 %v949
        %1010 = vmatmul.bf16.gmra.mxu0 %v972
        %v1011 = vpop.f32.mrf.mxu0
        %v1012 = vadd.f32 0.0, %v1011
        %v1013 = vpop.f32.mrf.mxu0
        %v1014 = vadd.f32 0.0, %v1013
        %1015 = vdwg.mxu0
        %v1016 = vadd.f32 %v874, %v984
        %v1017 = vadd.f32 %v875, %v998
        %v1018 = vadd.f32 %v876, %v1012
        %v1019 = vadd.f32 %v877, %v986
        %v1020 = vadd.f32 %v878, %v1000
        %v1021 = vadd.f32 %v879, %v1014
        %s1022 = scalar_lea.vmem %s1, 384
        %v1023 = vld [vmem:[%s1022] sm:$0xff]
        %v1024 = vld [vmem:[%s1022 + $0x8] sm:$0xf]
        %v1025 = vld [vmem:[%s1022 + $0xc] sm:$0xff]
        %v1026 = vld [vmem:[%s1022 + $0x14] sm:$0xf]
        %v1027 = vld [vmem:[%s1022 + $0x18] sm:$0xff]
        %v1028 = vld [vmem:[%s1022 + $0x20] sm:$0xf]
        %v1029 = vld [vmem:[%s1022 + $0x24] sm:$0xff]
        %v1030 = vld [vmem:[%s1022 + $0x2c] sm:$0xf]
        %v1031 = vld [vmem:[%s1022 + $0x30] sm:$0xff]
        %v1032 = vld [vmem:[%s1022 + $0x38] sm:$0xf]
        %v1033 = vld [vmem:[%s1022 + $0x3c] sm:$0xff]
        %v1034 = vld [vmem:[%s1022 + $0x44] sm:$0xf]
        %v1035 = vld [vmem:[%s1022 + $0x48] sm:$0xff]
        %v1036 = vld [vmem:[%s1022 + $0x50] sm:$0xf]
        %v1037 = vld [vmem:[%s1022 + $0x54] sm:$0xff]
        %v1038 = vld [vmem:[%s1022 + $0x5c] sm:$0xf]
        %vm1040 = vcmask 1045504
        %v1041 = vrot.slane %v487, 2
        %v1042 = vrot.slane %v880, 2
        %v1043 = vsel %vm1040, %v1041, %v1042
        %v1060 = vunpack.c.l.b16 %v1023
        %v1061 = vunpack.c.h.b16 %v1023
        %v1062 = vunpack.c.l.b16 %v1024
        %v1063 = vunpack.c.l.b16 %v1025
        %v1064 = vunpack.c.h.b16 %v1025
        %v1065 = vunpack.c.l.b16 %v1026
        %v1066 = vunpack.c.l.b16 %v1027
        %v1067 = vunpack.c.h.b16 %v1027
        %v1068 = vunpack.c.l.b16 %v1028
        %v1069 = vunpack.c.l.b16 %v1029
        %v1070 = vunpack.c.h.b16 %v1029
        %v1071 = vunpack.c.l.b16 %v1030
        %v1072 = vunpack.c.l.b16 %v1031
        %v1073 = vunpack.c.h.b16 %v1031
        %v1074 = vunpack.c.l.b16 %v1032
        %v1075 = vunpack.c.l.b16 %v1033
        %v1076 = vunpack.c.h.b16 %v1033
        %v1077 = vunpack.c.l.b16 %v1034
        %v1078 = vunpack.c.l.b16 %v1035
        %v1079 = vunpack.c.h.b16 %v1035
        %v1080 = vunpack.c.l.b16 %v1036
        %v1081 = vunpack.c.l.b16 %v1037
        %v1082 = vunpack.c.h.b16 %v1037
        %v1083 = vunpack.c.l.b16 %v1038
        %v1084 = vpack.c.b16 %v1063, %v1060
        %v1085 = vpack.c.b16 %v1064, %v1061
        %v1086 = vpack.c.b16 %v1065, %v1062
        %v1087 = vpack.c.b16 %v1069, %v1066
        %v1088 = vpack.c.b16 %v1070, %v1067
        %v1089 = vpack.c.b16 %v1071, %v1068
        %v1090 = vpack.c.b16 %v1075, %v1072
        %v1091 = vpack.c.b16 %v1076, %v1073
        %v1092 = vpack.c.b16 %v1077, %v1074
        %v1093 = vpack.c.b16 %v1081, %v1078
        %v1094 = vpack.c.b16 %v1082, %v1079
        %v1095 = vpack.c.b16 %v1083, %v1080
        %v1109 = vsel %vm592, %v1043, 0
        %1111 = vmatpush.bf16.msra.mxu0 0
        %1112 = vmatpush.bf16.msra.mxu0 0
        %1113 = vmatpush.bf16.msra.mxu0 0
        %1114 = vmatpush.bf16.msra.mxu0 0
        %1115 = vmatpush.bf16.msra.mxu0 %v1093
        %1116 = vmatpush.bf16.msra.mxu0 %v1090
        %1117 = vmatpush.bf16.msra.mxu0 %v1087
        %1118 = vmatpush.bf16.msra.mxu0 %v1084
        %1119 = vmatmul.bf16.gmra.mxu0 %v1109
        %v1120 = vpop.f32.mrf.mxu0
        %v1121 = vadd.f32 0.0, %v1120
        %v1122 = vpop.f32.mrf.mxu0
        %v1123 = vadd.f32 0.0, %v1122
        %1124 = vdwg.mxu0
        %1125 = vmatpush.bf16.msra.mxu0 0
        %1126 = vmatpush.bf16.msra.mxu0 0
        %1127 = vmatpush.bf16.msra.mxu0 0
        %1128 = vmatpush.bf16.msra.mxu0 0
        %1129 = vmatpush.bf16.msra.mxu0 %v1094
        %1130 = vmatpush.bf16.msra.mxu0 %v1091
        %1131 = vmatpush.bf16.msra.mxu0 %v1088
        %1132 = vmatpush.bf16.msra.mxu0 %v1085
        %1133 = vmatmul.bf16.gmra.mxu0 %v1109
        %v1134 = vpop.f32.mrf.mxu0
        %v1135 = vadd.f32 0.0, %v1134
        %v1136 = vpop.f32.mrf.mxu0
        %v1137 = vadd.f32 0.0, %v1136
        %1138 = vdwg.mxu0
        %1139 = vmatpush.bf16.msra.mxu0 0
        %1140 = vmatpush.bf16.msra.mxu0 0
        %1141 = vmatpush.bf16.msra.mxu0 0
        %1142 = vmatpush.bf16.msra.mxu0 0
        %1143 = vmatpush.bf16.msra.mxu0 %v1095
        %1144 = vmatpush.bf16.msra.mxu0 %v1092
        %1145 = vmatpush.bf16.msra.mxu0 %v1089
        %1146 = vmatpush.bf16.msra.mxu0 %v1086
        %1147 = vmatmul.bf16.gmra.mxu0 %v1109
        %v1148 = vpop.f32.mrf.mxu0
        %v1149 = vadd.f32 0.0, %v1148
        %v1150 = vpop.f32.mrf.mxu0
        %v1151 = vadd.f32 0.0, %v1150
        %1152 = vdwg.mxu0
        %v1153 = vadd.f32 %v1016, %v1121
        %v1154 = vadd.f32 %v1017, %v1135
        %v1155 = vadd.f32 %v1018, %v1149
        %v1156 = vadd.f32 %v1019, %v1123
        %v1157 = vadd.f32 %v1020, %v1137
        %v1158 = vadd.f32 %v1021, %v1151
        %v1159 = vld [vmem:[%s2] sm:$0x7]
        %v1161 = vperm.slane %v1159, 0
        %v1162 = vperm.slane %v1159, 1
        %v1163 = vperm.slane %v1159, 2
        %v1167 = vadd.f32 %v1153, %v1161
        %v1168 = vadd.f32 %v1154, %v1162
        %v1169 = vadd.f32 %v1155, %v1163
        %v1170 = vadd.f32 %v1156, %v1161
        %v1171 = vadd.f32 %v1157, %v1162
        %v1172 = vadd.f32 %v1158, %v1163
        %vm1173 = vcmp.gt.f32.partialorder %v1167, 0.0
        %vm1174 = vcmp.gt.f32.partialorder %v1168, 0.0
        %vm1175 = vcmp.gt.f32.partialorder %v1169, 0.0
        %vm1176 = vcmp.gt.f32.partialorder %v1170, 0.0
        %vm1177 = vcmp.gt.f32.partialorder %v1171, 0.0
        %vm1178 = vcmp.gt.f32.partialorder %v1172, 0.0
        %v1179 = vmul.f32 %v1167, 0.1
        %v1180 = vmul.f32 %v1168, 0.1
        %v1181 = vmul.f32 %v1169, 0.1
        %v1182 = vmul.f32 %v1170, 0.1
        %v1183 = vmul.f32 %v1171, 0.1
        %v1184 = vmul.f32 %v1172, 0.1
        %v1185 = vsel %vm1173, %v1167, %v1179
        %v1186 = vsel %vm1174, %v1168, %v1180
        %v1187 = vsel %vm1175, %v1169, %v1181
        %v1188 = vsel %vm1176, %v1170, %v1182
        %v1189 = vsel %vm1177, %v1171, %v1183
        %v1190 = vsel %vm1178, %v1172, %v1184
        %v1194 = vrot.slane %v1186, 7
        %v1195 = vrot.slane %v1187, 6
        %v1196 = vsel %vm478, %v1185, %v1194
        %vm1197 = vcmask 1041408
        %v1198 = vsel %vm1197, %v1196, %v1195
        %v1200 = vlaneseq
        %vm1201 = vcmp.ge.s32.totalorder %v1200, 0
        %vm1202 = vcmp.lt.s32.totalorder %v1200, 336
        %vm1203 = vmand %vm1201, %vm1202
        %1204 = vst.msk [vmem:[#allocation2] ss:$8 sm:$0x7] %vm1203, %v1198
        %1205 = vst.msk [vmem:[#allocation2] ss:$8 sm:$0x0] %vm1203, %v1198
        %v1206 = vrot.slane %v1185, 1
        %v1207 = vrot.slane %v1186, 1
        %v1208 = vrot.slane %v1187, 1
        %v1212 = vmax.f32 %v1185, %v1206
        %v1213 = vmax.f32 %v1186, %v1207
        %v1214 = vmax.f32 %v1187, %v1208
        %1218 = vst [vmem:[#allocation1] sm:$0xff] %v1212
        %1219 = vst [vmem:[#allocation1 + $0x9] sm:$0xff] %v1213
        %1220 = vst [vmem:[#allocation1 + $0x12] sm:$0xff] %v1214
        %s1221 = scalar_lea.vmem [#allocation1], 1
        %v1222 = vld [vmem:[%s1221] ss:$9 sm:$0xff]
        %s1224 = scalar_lea.vmem [#allocation2], 1
        %1225 = vst.msk [vmem:[%s1224] ss:$8 sm:$0x7] %vm1203, %v1222
        %1226 = vst.msk [vmem:[%s1224] ss:$8 sm:$0x0] %vm1203, %v1222
        %1227 = vst [vmem:[#allocation1] sm:$0xff] %v1212
        %1228 = vst [vmem:[#allocation1 + $0x9] sm:$0xff] %v1213
        %1229 = vst [vmem:[#allocation1 + $0x12] sm:$0xff] %v1214
        %s1230 = scalar_lea.vmem [#allocation1], 3
        %v1231 = vld [vmem:[%s1230] ss:$9 sm:$0xff]
        %s1233 = scalar_lea.vmem [#allocation2], 2
        %1234 = vst.msk [vmem:[%s1233] ss:$8 sm:$0x7] %vm1203, %v1231
        %1235 = vst.msk [vmem:[%s1233] ss:$8 sm:$0x0] %vm1203, %v1231
        %1236 = vst [vmem:[#allocation1] sm:$0xff] %v1212
        %1237 = vst [vmem:[#allocation1 + $0x9] sm:$0xff] %v1213
        %1238 = vst [vmem:[#allocation1 + $0x12] sm:$0xff] %v1214
        %s1239 = scalar_lea.vmem [#allocation1], 5
        %v1240 = vld [vmem:[%s1239] ss:$9 sm:$0xff]
        %s1242 = scalar_lea.vmem [#allocation2], 3
        %1243 = vst.msk [vmem:[%s1242] ss:$8 sm:$0x7] %vm1203, %v1240
        %1244 = vst.msk [vmem:[%s1242] ss:$8 sm:$0x0] %vm1203, %v1240
        %v1248 = vrot.slane %v1188, 1
        %v1249 = vrot.slane %v1189, 1
        %v1250 = vrot.slane %v1190, 1
        %v1254 = vmax.f32 %v1185, %v1248
        %v1255 = vmax.f32 %v1186, %v1249
        %v1256 = vmax.f32 %v1187, %v1250
        %1260 = vst [vmem:[#allocation1] sm:$0xff] %v1254
        %1261 = vst [vmem:[#allocation1 + $0x9] sm:$0xff] %v1255
        %1262 = vst [vmem:[#allocation1 + $0x12] sm:$0xff] %v1256
        %s1263 = scalar_lea.vmem [#allocation1], 7
        %v1264 = vld [vmem:[%s1263] ss:$9 sm:$0xff]
        %s1266 = scalar_lea.vmem [#allocation2], 4
        %1267 = vst.msk [vmem:[%s1266] ss:$8 sm:$0x7] %vm1203, %v1264
        %1268 = vst.msk [vmem:[%s1266] ss:$8 sm:$0x0] %vm1203, %v1264
        %v1269 = vmax.f32 %v1188, %v1248
        %v1270 = vmax.f32 %v1189, %v1249
        %v1271 = vmax.f32 %v1190, %v1250
        %1275 = vst [vmem:[#allocation1] sm:$0xff] %v1269
        %1276 = vst [vmem:[#allocation1 + $0x9] sm:$0xff] %v1270
        %1277 = vst [vmem:[#allocation1 + $0x12] sm:$0xff] %v1271
        %s1278 = scalar_lea.vmem [#allocation1], 1
        %v1279 = vld [vmem:[%s1278] ss:$9 sm:$0xff]
        %s1281 = scalar_lea.vmem [#allocation2], 5
        %1282 = vst.msk [vmem:[%s1281] ss:$8 sm:$0x7] %vm1203, %v1279
        %1283 = vst.msk [vmem:[%s1281] ss:$8 sm:$0x0] %vm1203, %v1279
        %1284 = vst [vmem:[#allocation1] sm:$0xff] %v1269
        %1285 = vst [vmem:[#allocation1 + $0x9] sm:$0xff] %v1270
        %1286 = vst [vmem:[#allocation1 + $0x12] sm:$0xff] %v1271
        %s1287 = scalar_lea.vmem [#allocation1], 3
        %v1288 = vld [vmem:[%s1287] ss:$9 sm:$0xff]
        %s1290 = scalar_lea.vmem [#allocation2], 6
        %1291 = vst.msk [vmem:[%s1290] ss:$8 sm:$0x7] %vm1203, %v1288
        %1292 = vst.msk [vmem:[%s1290] ss:$8 sm:$0x0] %vm1203, %v1288
        %1293 = vst [vmem:[#allocation1] sm:$0xff] %v1188
        %1294 = vst [vmem:[#allocation1 + $0x9] sm:$0xff] %v1189
        %1295 = vst [vmem:[#allocation1 + $0x12] sm:$0xff] %v1190
        %s1296 = scalar_lea.vmem [#allocation1], 5
        %v1297 = vld [vmem:[%s1296] ss:$9 sm:$0xff]
        %s1299 = scalar_lea.vmem [#allocation2], 7
        %1300 = vst.msk [vmem:[%s1299] ss:$8 sm:$0x7] %vm1203, %v1297
        %1301 = vst.msk [vmem:[%s1299] ss:$8 sm:$0x0] %vm1203, %v1297
        %v1302 = vld [vmem:[#allocation2] sm:$0xff]
        %vm1303 = vcmask 195584
        %1304 = vst.msk [vmem:[#allocation3] sm:$0xff] %vm1303, %v1302
        %v1305 = vld [vmem:[#allocation2] sm:$0xff]
        %1307 = vrot.lane.b32.xlu0 %v1305, 104
        %v1308 = vpop.permute.xlu0 %1307
        %v1310 = vmax.f32 %v1305, %v1308
        %vm1311 = vcmask 392384
        %1312 = vst.msk [vmem:[#allocation3] sm:$0xff] %vm1311, %v1310
        %v1313 = vld [vmem:[#allocation2] sm:$0xff]
        %1315 = vrot.lane.b32.xlu0 %v1313, 104
        %v1316 = vpop.permute.xlu0 %1315
        %v1318 = vmax.f32 %v1313, %v1316
        %1320 = vrot.lane.b32.xlu0 %v1318, 104
        %v1321 = vpop.permute.xlu0 %1320
        %vm1323 = vcmask 589184
        %1324 = vst.msk [vmem:[#allocation3] sm:$0xff] %vm1323, %v1321
        %v1325 = vld [vmem:[#allocation2] sm:$0xff]
        %v1326 = vld [vmem:[#allocation2 + $0x8] sm:$0xff]
        %1328 = vrot.lane.b32.xlu0 %v1326, 104
        %v1329 = vpop.permute.xlu0 %1328
        %v1331 = vmax.f32 %v1325, %v1329
        %v1332 = vmax.f32 %v1326, %v1329
        %1335 = vrot.lane.b32.xlu0 %v1331, 80
        %v1336 = vpop.permute.xlu0 %1335
        %1337 = vrot.lane.b32.xlu0 %v1332, 80
        %v1338 = vpop.permute.xlu0 %1337
        %vm1339 = vcmask 654336
        %v1340 = vsel %vm1339, %v1336, %v1338
        %vm1342 = vcmask 785984
        %1343 = vst.msk [vmem:[#allocation3] sm:$0xff] %vm1342, %v1340
        %v1344 = vld [vmem:[#allocation2 + $0x8] sm:$0xff]
        %1346 = vrot.lane.b32.xlu0 %v1344, 104
        %v1347 = vpop.permute.xlu0 %1346
        %v1349 = vmax.f32 %v1344, %v1347
        %1351 = vrot.lane.b32.xlu0 %v1349, 56
        %v1352 = vpop.permute.xlu0 %1351
        %vm1354 = vcmask 982784
        %1355 = vst.msk [vmem:[#allocation3] sm:$0xff] %vm1354, %v1352
        %v1356 = vld [vmem:[#allocation2 + $0x8] sm:$0xff]
        %v1357 = vld [vmem:[#allocation2 + $0x10] sm:$0xff]
        %1360 = vrot.lane.b32.xlu0 %v1356, 104
        %v1361 = vpop.permute.xlu0 %1360
        %1362 = vrot.lane.b32.xlu0 %v1357, 104
        %v1363 = vpop.permute.xlu0 %1362
        %vm1364 = vcmask 850944
        %v1365 = vsel %vm1364, %v1361, %v1363
        %v1367 = vmax.f32 %v1356, %v1365
        %1369 = vrot.lane.b32.xlu0 %v1367, 32
        %v1370 = vpop.permute.xlu0 %1369
        %vm1372 = vcmask 1048512
        %1373 = vst.msk [vmem:[#allocation3] sm:$0xff] %vm1372, %v1370
        %vm1374 = vcmask 130048
        %1375 = vst.msk [vmem:[#allocation3 + $0x8] sm:$0xff] %vm1374, %v1370
        %v1376 = vld [vmem:[#allocation2 + $0x10] sm:$0xff]
        %1378 = vrot.lane.b32.xlu0 %v1376, 104
        %v1379 = vpop.permute.xlu0 %1378
        %v1381 = vmax.f32 %v1376, %v1379
        %1383 = vrot.lane.b32.xlu0 %v1381, 8
        %v1384 = vpop.permute.xlu0 %1383
        %vm1386 = vcmask 326784
        %1387 = vst.msk [vmem:[#allocation3 + $0x8] sm:$0xff] %vm1386, %v1384
        %v1388 = vld [vmem:[#allocation2 + $0x10] sm:$0xff]
        %1390 = vrot.lane.b32.xlu0 %v1388, 112
        %v1391 = vpop.permute.xlu0 %1390
        %vm1393 = vcmask 523584
        %1394 = vst.msk [vmem:[#allocation3 + $0x8] sm:$0xff] %vm1393, %v1391
        %v1395 = vld [vmem:[#allocation3] sm:$0xff]
        %v1396 = vld [vmem:[#allocation3 + $0x8] sm:$0xff]
        %v1399 = vrot.slane %v1395, 7
        %v1400 = vrot.slane %v1396, 7
        %v1403 = vsel %vm478, 0.0, %v1399
        %v1404 = vsel %vm478, 0.0, %v1400
        %v1405 = vsel %vm478, %v1399, 0.0
        %v1406 = vsel %vm478, %v1400, 0.0
        %v1407 = vpack.c.bf16 %v1403, %v1403
        %v1408 = vpack.c.bf16 %v1404, %v1404
        %v1409 = vld [vmem:[#allocation5] sm:$0xff]
        %v1410 = vld [vmem:[#allocation5 + $0x8] sm:$0xff]
        %v1411 = vld [vmem:[#allocation5 + $0x10] sm:$0xff]
        %v1412 = vld [vmem:[#allocation5 + $0x18] sm:$0xff]
        %v1413 = vld [vmem:[#allocation5 + $0x20] sm:$0xff]
        %v1414 = vld [vmem:[#allocation5 + $0x28] sm:$0xff]
        %v1415 = vld [vmem:[#allocation5 + $0x30] sm:$0xff]
        %v1416 = vld [vmem:[#allocation5 + $0x38] sm:$0xff]
        %v1417 = vld [vmem:[#allocation5 + $0x40] sm:$0xff]
        %v1418 = vld [vmem:[#allocation5 + $0x48] sm:$0xff]
        %v1419 = vld [vmem:[#allocation5 + $0x50] sm:$0xff]
        %v1420 = vld [vmem:[#allocation5 + $0x58] sm:$0xff]
        %v1421 = vld [vmem:[#allocation5 + $0x60] sm:$0xff]
        %v1422 = vld [vmem:[#allocation5 + $0x68] sm:$0xff]
        %v1423 = vld [vmem:[#allocation5 + $0x70] sm:$0xff]
        %v1424 = vld [vmem:[#allocation5 + $0x78] sm:$0xff]
        %v1425 = vld [vmem:[#allocation5 + $0x80] sm:$0xff]
        %v1426 = vld [vmem:[#allocation5 + $0x88] sm:$0xff]
        %v1427 = vld [vmem:[#allocation5 + $0x90] sm:$0xff]
        %v1428 = vld [vmem:[#allocation5 + $0x98] sm:$0xff]
        %v1429 = vld [vmem:[#allocation5 + $0xa0] sm:$0xff]
        %v1430 = vld [vmem:[#allocation5 + $0xa8] sm:$0xff]
        %v1431 = vld [vmem:[#allocation5 + $0xb0] sm:$0xff]
        %v1432 = vld [vmem:[#allocation5 + $0xb8] sm:$0xff]
        %s1433 = scalar_lea.vmem [#allocation5], 192
        %v1434 = vld [vmem:[%s1433] sm:$0xff]
        %v1435 = vld [vmem:[%s1433 + $0x8] sm:$0xff]
        %v1436 = vld [vmem:[%s1433 + $0x10] sm:$0xff]
        %v1437 = vld [vmem:[%s1433 + $0x18] sm:$0xff]
        %v1438 = vld [vmem:[%s1433 + $0x20] sm:$0xff]
        %v1439 = vld [vmem:[%s1433 + $0x28] sm:$0xff]
        %v1440 = vld [vmem:[%s1433 + $0x30] sm:$0xff]
        %v1441 = vld [vmem:[%s1433 + $0x38] sm:$0xff]
        %v1442 = vld [vmem:[%s1433 + $0x40] sm:$0xff]
        %v1443 = vld [vmem:[%s1433 + $0x48] sm:$0xff]
        %v1444 = vld [vmem:[%s1433 + $0x50] sm:$0xff]
        %v1445 = vld [vmem:[%s1433 + $0x58] sm:$0xff]
        %v1446 = vld [vmem:[%s1433 + $0x60] sm:$0xff]
        %v1447 = vld [vmem:[%s1433 + $0x68] sm:$0xff]
        %v1448 = vld [vmem:[%s1433 + $0x70] sm:$0xff]
        %v1449 = vld [vmem:[%s1433 + $0x78] sm:$0xff]
        %v1450 = vld [vmem:[%s1433 + $0x80] sm:$0xff]
        %v1451 = vld [vmem:[%s1433 + $0x88] sm:$0xff]
        %v1452 = vld [vmem:[%s1433 + $0x90] sm:$0xff]
        %v1453 = vld [vmem:[%s1433 + $0x98] sm:$0xff]
        %v1454 = vld [vmem:[%s1433 + $0xa0] sm:$0xff]
        %v1455 = vld [vmem:[%s1433 + $0xa8] sm:$0xff]
        %v1456 = vld [vmem:[%s1433 + $0xb0] sm:$0xff]
        %v1457 = vld [vmem:[%s1433 + $0xb8] sm:$0xff]
        %v1459 = vshrl.u32 %v1407, 16
        %v1461 = vshll.u32 %v1407, 16
        %v1463 = vrot.slane %v1461, 1
        %v1464 = vor.u32 %v1459, %v1463
        %v1466 = vshrl.u32 %v1408, 16
        %v1468 = vshll.u32 %v1408, 16
        %v1470 = vrot.slane %v1468, 1
        %v1471 = vor.u32 %v1466, %v1470
        %v1497 = vunpack.c.l.b16 %v1434
        %v1498 = vunpack.c.h.b16 %v1434
        %v1499 = vunpack.c.l.b16 %v1435
        %v1500 = vunpack.c.h.b16 %v1435
        %v1501 = vunpack.c.l.b16 %v1436
        %v1502 = vunpack.c.h.b16 %v1436
        %v1503 = vunpack.c.l.b16 %v1437
        %v1504 = vunpack.c.h.b16 %v1437
        %v1505 = vunpack.c.l.b16 %v1438
        %v1506 = vunpack.c.h.b16 %v1438
        %v1507 = vunpack.c.l.b16 %v1439
        %v1508 = vunpack.c.h.b16 %v1439
        %v1509 = vunpack.c.l.b16 %v1440
        %v1510 = vunpack.c.h.b16 %v1440
        %v1511 = vunpack.c.l.b16 %v1441
        %v1512 = vunpack.c.h.b16 %v1441
        %v1513 = vunpack.c.l.b16 %v1442
        %v1514 = vunpack.c.h.b16 %v1442
        %v1515 = vunpack.c.l.b16 %v1443
        %v1516 = vunpack.c.h.b16 %v1443
        %v1517 = vunpack.c.l.b16 %v1444
        %v1518 = vunpack.c.h.b16 %v1444
        %v1519 = vunpack.c.l.b16 %v1445
        %v1520 = vunpack.c.h.b16 %v1445
        %v1521 = vunpack.c.l.b16 %v1446
        %v1522 = vunpack.c.h.b16 %v1446
        %v1523 = vunpack.c.l.b16 %v1447
        %v1524 = vunpack.c.h.b16 %v1447
        %v1525 = vunpack.c.l.b16 %v1448
        %v1526 = vunpack.c.h.b16 %v1448
        %v1527 = vunpack.c.l.b16 %v1449
        %v1528 = vunpack.c.h.b16 %v1449
        %v1529 = vunpack.c.l.b16 %v1450
        %v1530 = vunpack.c.h.b16 %v1450
        %v1531 = vunpack.c.l.b16 %v1451
        %v1532 = vunpack.c.h.b16 %v1451
        %v1533 = vunpack.c.l.b16 %v1452
        %v1534 = vunpack.c.h.b16 %v1452
        %v1535 = vunpack.c.l.b16 %v1453
        %v1536 = vunpack.c.h.b16 %v1453
        %v1537 = vunpack.c.l.b16 %v1454
        %v1538 = vunpack.c.h.b16 %v1454
        %v1539 = vunpack.c.l.b16 %v1455
        %v1540 = vunpack.c.h.b16 %v1455
        %v1541 = vunpack.c.l.b16 %v1456
        %v1542 = vunpack.c.h.b16 %v1456
        %v1543 = vunpack.c.l.b16 %v1457
        %v1544 = vunpack.c.h.b16 %v1457
        %v1545 = vpack.c.b16 %v1499, %v1497
        %v1546 = vpack.c.b16 %v1500, %v1498
        %v1547 = vpack.c.b16 %v1503, %v1501
        %v1548 = vpack.c.b16 %v1504, %v1502
        %v1549 = vpack.c.b16 %v1507, %v1505
        %v1550 = vpack.c.b16 %v1508, %v1506
        %v1551 = vpack.c.b16 %v1511, %v1509
        %v1552 = vpack.c.b16 %v1512, %v1510
        %v1553 = vpack.c.b16 %v1515, %v1513
        %v1554 = vpack.c.b16 %v1516, %v1514
        %v1555 = vpack.c.b16 %v1519, %v1517
        %v1556 = vpack.c.b16 %v1520, %v1518
        %v1557 = vpack.c.b16 %v1523, %v1521
        %v1558 = vpack.c.b16 %v1524, %v1522
        %v1559 = vpack.c.b16 %v1527, %v1525
        %v1560 = vpack.c.b16 %v1528, %v1526
        %v1561 = vpack.c.b16 %v1531, %v1529
        %v1562 = vpack.c.b16 %v1532, %v1530
        %v1563 = vpack.c.b16 %v1535, %v1533
        %v1564 = vpack.c.b16 %v1536, %v1534
        %v1565 = vpack.c.b16 %v1539, %v1537
        %v1566 = vpack.c.b16 %v1540, %v1538
        %v1567 = vpack.c.b16 %v1543, %v1541
        %v1568 = vpack.c.b16 %v1544, %v1542
        %v1594 = vsel %vm592, %v1471, 0
        %1596 = vmatpush.bf16.msra.mxu0 %v1559
        %1597 = vmatpush.bf16.msra.mxu0 %v1557
        %1598 = vmatpush.bf16.msra.mxu0 %v1555
        %1599 = vmatpush.bf16.msra.mxu0 %v1553
        %1600 = vmatpush.bf16.msra.mxu0 %v1551
        %1601 = vmatpush.bf16.msra.mxu0 %v1549
        %1602 = vmatpush.bf16.msra.mxu0 %v1547
        %1603 = vmatpush.bf16.msra.mxu0 %v1545
        %1604 = vmatmul.bf16.gmra.mxu0 %v1464
        %v1605 = vpop.f32.mrf.mxu0
        %v1606 = vadd.f32 0.0, %v1605
        %v1607 = vpop.f32.mrf.mxu0
        %1608 = vdwg.mxu0
        %1609 = vmatpush.bf16.msra.mxu0 0
        %1610 = vmatpush.bf16.msra.mxu0 0
        %1611 = vmatpush.bf16.msra.mxu0 0
        %1612 = vmatpush.bf16.msra.mxu0 0
        %1613 = vmatpush.bf16.msra.mxu0 %v1567
        %1614 = vmatpush.bf16.msra.mxu0 %v1565
        %1615 = vmatpush.bf16.msra.mxu0 %v1563
        %1616 = vmatpush.bf16.msra.mxu0 %v1561
        %1617 = vmatmul.bf16.gmra.mxu0 %v1594
        %v1618 = vpop.f32.mrf.mxu0
        %v1619 = vadd.f32 %v1606, %v1618
        %v1620 = vpop.f32.mrf.mxu0
        %1621 = vdwg.mxu0
        %1622 = vmatpush.bf16.msra.mxu0 %v1560
        %1623 = vmatpush.bf16.msra.mxu0 %v1558
        %1624 = vmatpush.bf16.msra.mxu0 %v1556
        %1625 = vmatpush.bf16.msra.mxu0 %v1554
        %1626 = vmatpush.bf16.msra.mxu0 %v1552
        %1627 = vmatpush.bf16.msra.mxu0 %v1550
        %1628 = vmatpush.bf16.msra.mxu0 %v1548
        %1629 = vmatpush.bf16.msra.mxu0 %v1546
        %1630 = vmatmul.bf16.gmra.mxu0 %v1464
        %v1631 = vpop.f32.mrf.mxu0
        %v1632 = vadd.f32 0.0, %v1631
        %v1633 = vpop.f32.mrf.mxu0
        %1634 = vdwg.mxu0
        %1635 = vmatpush.bf16.msra.mxu0 0
        %1636 = vmatpush.bf16.msra.mxu0 0
        %1637 = vmatpush.bf16.msra.mxu0 0
        %1638 = vmatpush.bf16.msra.mxu0 0
        %1639 = vmatpush.bf16.msra.mxu0 %v1568
        %1640 = vmatpush.bf16.msra.mxu0 %v1566
        %1641 = vmatpush.bf16.msra.mxu0 %v1564
        %1642 = vmatpush.bf16.msra.mxu0 %v1562
        %1643 = vmatmul.bf16.gmra.mxu0 %v1594
        %v1644 = vpop.f32.mrf.mxu0
        %v1645 = vadd.f32 %v1632, %v1644
        %v1646 = vpop.f32.mrf.mxu0
        %1647 = vdwg.mxu0
        %v1672 = vunpack.c.l.b16 %v1409
        %v1673 = vunpack.c.h.b16 %v1409
        %v1674 = vunpack.c.l.b16 %v1410
        %v1675 = vunpack.c.h.b16 %v1410
        %v1676 = vunpack.c.l.b16 %v1411
        %v1677 = vunpack.c.h.b16 %v1411
        %v1678 = vunpack.c.l.b16 %v1412
        %v1679 = vunpack.c.h.b16 %v1412
        %v1680 = vunpack.c.l.b16 %v1413
        %v1681 = vunpack.c.h.b16 %v1413
        %v1682 = vunpack.c.l.b16 %v1414
        %v1683 = vunpack.c.h.b16 %v1414
        %v1684 = vunpack.c.l.b16 %v1415
        %v1685 = vunpack.c.h.b16 %v1415
        %v1686 = vunpack.c.l.b16 %v1416
        %v1687 = vunpack.c.h.b16 %v1416
        %v1688 = vunpack.c.l.b16 %v1417
        %v1689 = vunpack.c.h.b16 %v1417
        %v1690 = vunpack.c.l.b16 %v1418
        %v1691 = vunpack.c.h.b16 %v1418
        %v1692 = vunpack.c.l.b16 %v1419
        %v1693 = vunpack.c.h.b16 %v1419
        %v1694 = vunpack.c.l.b16 %v1420
        %v1695 = vunpack.c.h.b16 %v1420
        %v1696 = vunpack.c.l.b16 %v1421
        %v1697 = vunpack.c.h.b16 %v1421
        %v1698 = vunpack.c.l.b16 %v1422
        %v1699 = vunpack.c.h.b16 %v1422
        %v1700 = vunpack.c.l.b16 %v1423
        %v1701 = vunpack.c.h.b16 %v1423
        %v1702 = vunpack.c.l.b16 %v1424
        %v1703 = vunpack.c.h.b16 %v1424
        %v1704 = vunpack.c.l.b16 %v1425
        %v1705 = vunpack.c.h.b16 %v1425
        %v1706 = vunpack.c.l.b16 %v1426
        %v1707 = vunpack.c.h.b16 %v1426
        %v1708 = vunpack.c.l.b16 %v1427
        %v1709 = vunpack.c.h.b16 %v1427
        %v1710 = vunpack.c.l.b16 %v1428
        %v1711 = vunpack.c.h.b16 %v1428
        %v1712 = vunpack.c.l.b16 %v1429
        %v1713 = vunpack.c.h.b16 %v1429
        %v1714 = vunpack.c.l.b16 %v1430
        %v1715 = vunpack.c.h.b16 %v1430
        %v1716 = vunpack.c.l.b16 %v1431
        %v1717 = vunpack.c.h.b16 %v1431
        %v1718 = vunpack.c.l.b16 %v1432
        %v1719 = vunpack.c.h.b16 %v1432
        %v1720 = vpack.c.b16 %v1674, %v1672
        %v1721 = vpack.c.b16 %v1675, %v1673
        %v1722 = vpack.c.b16 %v1678, %v1676
        %v1723 = vpack.c.b16 %v1679, %v1677
        %v1724 = vpack.c.b16 %v1682, %v1680
        %v1725 = vpack.c.b16 %v1683, %v1681
        %v1726 = vpack.c.b16 %v1686, %v1684
        %v1727 = vpack.c.b16 %v1687, %v1685
        %v1728 = vpack.c.b16 %v1690, %v1688
        %v1729 = vpack.c.b16 %v1691, %v1689
        %v1730 = vpack.c.b16 %v1694, %v1692
        %v1731 = vpack.c.b16 %v1695, %v1693
        %v1732 = vpack.c.b16 %v1698, %v1696
        %v1733 = vpack.c.b16 %v1699, %v1697
        %v1734 = vpack.c.b16 %v1702, %v1700
        %v1735 = vpack.c.b16 %v1703, %v1701
        %v1736 = vpack.c.b16 %v1706, %v1704
        %v1737 = vpack.c.b16 %v1707, %v1705
        %v1738 = vpack.c.b16 %v1710, %v1708
        %v1739 = vpack.c.b16 %v1711, %v1709
        %v1740 = vpack.c.b16 %v1714, %v1712
        %v1741 = vpack.c.b16 %v1715, %v1713
        %v1742 = vpack.c.b16 %v1718, %v1716
        %v1743 = vpack.c.b16 %v1719, %v1717
        %v1768 = vsel %vm592, %v1408, 0
        %1770 = vmatpush.bf16.msra.mxu0 %v1734
        %1771 = vmatpush.bf16.msra.mxu0 %v1732
        %1772 = vmatpush.bf16.msra.mxu0 %v1730
        %1773 = vmatpush.bf16.msra.mxu0 %v1728
        %1774 = vmatpush.bf16.msra.mxu0 %v1726
        %1775 = vmatpush.bf16.msra.mxu0 %v1724
        %1776 = vmatpush.bf16.msra.mxu0 %v1722
        %1777 = vmatpush.bf16.msra.mxu0 %v1720
        %1778 = vmatmul.bf16.gmra.mxu0 %v1407
        %v1779 = vpop.f32.mrf.mxu0
        %v1780 = vadd.f32 %v1619, %v1779
        %v1781 = vpop.f32.mrf.mxu0
        %1782 = vdwg.mxu0
        %1783 = vmatpush.bf16.msra.mxu0 0
        %1784 = vmatpush.bf16.msra.mxu0 0
        %1785 = vmatpush.bf16.msra.mxu0 0
        %1786 = vmatpush.bf16.msra.mxu0 0
        %1787 = vmatpush.bf16.msra.mxu0 %v1742
        %1788 = vmatpush.bf16.msra.mxu0 %v1740
        %1789 = vmatpush.bf16.msra.mxu0 %v1738
        %1790 = vmatpush.bf16.msra.mxu0 %v1736
        %1791 = vmatmul.bf16.gmra.mxu0 %v1768
        %v1792 = vpop.f32.mrf.mxu0
        %v1793 = vadd.f32 %v1780, %v1792
        %v1794 = vpop.f32.mrf.mxu0
        %1795 = vdwg.mxu0
        %1796 = vmatpush.bf16.msra.mxu0 %v1735
        %1797 = vmatpush.bf16.msra.mxu0 %v1733
        %1798 = vmatpush.bf16.msra.mxu0 %v1731
        %1799 = vmatpush.bf16.msra.mxu0 %v1729
        %1800 = vmatpush.bf16.msra.mxu0 %v1727
        %1801 = vmatpush.bf16.msra.mxu0 %v1725
        %1802 = vmatpush.bf16.msra.mxu0 %v1723
        %1803 = vmatpush.bf16.msra.mxu0 %v1721
        %1804 = vmatmul.bf16.gmra.mxu0 %v1407
        %v1805 = vpop.f32.mrf.mxu0
        %v1806 = vadd.f32 %v1645, %v1805
        %v1807 = vpop.f32.mrf.mxu0
        %1808 = vdwg.mxu0
        %1809 = vmatpush.bf16.msra.mxu0 0
        %1810 = vmatpush.bf16.msra.mxu0 0
        %1811 = vmatpush.bf16.msra.mxu0 0
        %1812 = vmatpush.bf16.msra.mxu0 0
        %1813 = vmatpush.bf16.msra.mxu0 %v1743
        %1814 = vmatpush.bf16.msra.mxu0 %v1741
        %1815 = vmatpush.bf16.msra.mxu0 %v1739
        %1816 = vmatpush.bf16.msra.mxu0 %v1737
        %1817 = vmatmul.bf16.gmra.mxu0 %v1768
        %v1818 = vpop.f32.mrf.mxu0
        %v1819 = vadd.f32 %v1806, %v1818
        %v1820 = vpop.f32.mrf.mxu0
        %1821 = vdwg.mxu0
        %s1822 = scalar_lea.vmem [#allocation5], 384
        %v1823 = vld [vmem:[%s1822] sm:$0xff]
        %v1824 = vld [vmem:[%s1822 + $0x8] sm:$0xff]
        %v1825 = vld [vmem:[%s1822 + $0x10] sm:$0xff]
        %v1826 = vld [vmem:[%s1822 + $0x18] sm:$0xff]
        %v1827 = vld [vmem:[%s1822 + $0x20] sm:$0xff]
        %v1828 = vld [vmem:[%s1822 + $0x28] sm:$0xff]
        %v1829 = vld [vmem:[%s1822 + $0x30] sm:$0xff]
        %v1830 = vld [vmem:[%s1822 + $0x38] sm:$0xff]
        %v1831 = vld [vmem:[%s1822 + $0x40] sm:$0xff]
        %v1832 = vld [vmem:[%s1822 + $0x48] sm:$0xff]
        %v1833 = vld [vmem:[%s1822 + $0x50] sm:$0xff]
        %v1834 = vld [vmem:[%s1822 + $0x58] sm:$0xff]
        %v1835 = vld [vmem:[%s1822 + $0x60] sm:$0xff]
        %v1836 = vld [vmem:[%s1822 + $0x68] sm:$0xff]
        %v1837 = vld [vmem:[%s1822 + $0x70] sm:$0xff]
        %v1838 = vld [vmem:[%s1822 + $0x78] sm:$0xff]
        %v1839 = vld [vmem:[%s1822 + $0x80] sm:$0xff]
        %v1840 = vld [vmem:[%s1822 + $0x88] sm:$0xff]
        %v1841 = vld [vmem:[%s1822 + $0x90] sm:$0xff]
        %v1842 = vld [vmem:[%s1822 + $0x98] sm:$0xff]
        %v1843 = vld [vmem:[%s1822 + $0xa0] sm:$0xff]
        %v1844 = vld [vmem:[%s1822 + $0xa8] sm:$0xff]
        %v1845 = vld [vmem:[%s1822 + $0xb0] sm:$0xff]
        %v1846 = vld [vmem:[%s1822 + $0xb8] sm:$0xff]
        %v1849 = vrot.slane %v1407, 1
        %v1850 = vrot.slane %v1408, 1
        %v1876 = vunpack.c.l.b16 %v1823
        %v1877 = vunpack.c.h.b16 %v1823
        %v1878 = vunpack.c.l.b16 %v1824
        %v1879 = vunpack.c.h.b16 %v1824
        %v1880 = vunpack.c.l.b16 %v1825
        %v1881 = vunpack.c.h.b16 %v1825
        %v1882 = vunpack.c.l.b16 %v1826
        %v1883 = vunpack.c.h.b16 %v1826
        %v1884 = vunpack.c.l.b16 %v1827
        %v1885 = vunpack.c.h.b16 %v1827
        %v1886 = vunpack.c.l.b16 %v1828
        %v1887 = vunpack.c.h.b16 %v1828
        %v1888 = vunpack.c.l.b16 %v1829
        %v1889 = vunpack.c.h.b16 %v1829
        %v1890 = vunpack.c.l.b16 %v1830
        %v1891 = vunpack.c.h.b16 %v1830
        %v1892 = vunpack.c.l.b16 %v1831
        %v1893 = vunpack.c.h.b16 %v1831
        %v1894 = vunpack.c.l.b16 %v1832
        %v1895 = vunpack.c.h.b16 %v1832
        %v1896 = vunpack.c.l.b16 %v1833
        %v1897 = vunpack.c.h.b16 %v1833
        %v1898 = vunpack.c.l.b16 %v1834
        %v1899 = vunpack.c.h.b16 %v1834
        %v1900 = vunpack.c.l.b16 %v1835
        %v1901 = vunpack.c.h.b16 %v1835
        %v1902 = vunpack.c.l.b16 %v1836
        %v1903 = vunpack.c.h.b16 %v1836
        %v1904 = vunpack.c.l.b16 %v1837
        %v1905 = vunpack.c.h.b16 %v1837
        %v1906 = vunpack.c.l.b16 %v1838
        %v1907 = vunpack.c.h.b16 %v1838
        %v1908 = vunpack.c.l.b16 %v1839
        %v1909 = vunpack.c.h.b16 %v1839
        %v1910 = vunpack.c.l.b16 %v1840
        %v1911 = vunpack.c.h.b16 %v1840
        %v1912 = vunpack.c.l.b16 %v1841
        %v1913 = vunpack.c.h.b16 %v1841
        %v1914 = vunpack.c.l.b16 %v1842
        %v1915 = vunpack.c.h.b16 %v1842
        %v1916 = vunpack.c.l.b16 %v1843
        %v1917 = vunpack.c.h.b16 %v1843
        %v1918 = vunpack.c.l.b16 %v1844
        %v1919 = vunpack.c.h.b16 %v1844
        %v1920 = vunpack.c.l.b16 %v1845
        %v1921 = vunpack.c.h.b16 %v1845
        %v1922 = vunpack.c.l.b16 %v1846
        %v1923 = vunpack.c.h.b16 %v1846
        %v1924 = vpack.c.b16 %v1878, %v1876
        %v1925 = vpack.c.b16 %v1879, %v1877
        %v1926 = vpack.c.b16 %v1882, %v1880
        %v1927 = vpack.c.b16 %v1883, %v1881
        %v1928 = vpack.c.b16 %v1886, %v1884
        %v1929 = vpack.c.b16 %v1887, %v1885
        %v1930 = vpack.c.b16 %v1890, %v1888
        %v1931 = vpack.c.b16 %v1891, %v1889
        %v1932 = vpack.c.b16 %v1894, %v1892
        %v1933 = vpack.c.b16 %v1895, %v1893
        %v1934 = vpack.c.b16 %v1898, %v1896
        %v1935 = vpack.c.b16 %v1899, %v1897
        %v1936 = vpack.c.b16 %v1902, %v1900
        %v1937 = vpack.c.b16 %v1903, %v1901
        %v1938 = vpack.c.b16 %v1906, %v1904
        %v1939 = vpack.c.b16 %v1907, %v1905
        %v1940 = vpack.c.b16 %v1910, %v1908
        %v1941 = vpack.c.b16 %v1911, %v1909
        %v1942 = vpack.c.b16 %v1914, %v1912
        %v1943 = vpack.c.b16 %v1915, %v1913
        %v1944 = vpack.c.b16 %v1918, %v1916
        %v1945 = vpack.c.b16 %v1919, %v1917
        %v1946 = vpack.c.b16 %v1922, %v1920
        %v1947 = vpack.c.b16 %v1923, %v1921
        %v1973 = vsel %vm592, %v1850, 0
        %1975 = vmatpush.bf16.msra.mxu0 %v1938
        %1976 = vmatpush.bf16.msra.mxu0 %v1936
        %1977 = vmatpush.bf16.msra.mxu0 %v1934
        %1978 = vmatpush.bf16.msra.mxu0 %v1932
        %1979 = vmatpush.bf16.msra.mxu0 %v1930
        %1980 = vmatpush.bf16.msra.mxu0 %v1928
        %1981 = vmatpush.bf16.msra.mxu0 %v1926
        %1982 = vmatpush.bf16.msra.mxu0 %v1924
        %1983 = vmatmul.bf16.gmra.mxu0 %v1849
        %v1984 = vpop.f32.mrf.mxu0
        %v1985 = vadd.f32 0.0, %v1984
        %v1986 = vpop.f32.mrf.mxu0
        %1987 = vdwg.mxu0
        %1988 = vmatpush.bf16.msra.mxu0 0
        %1989 = vmatpush.bf16.msra.mxu0 0
        %1990 = vmatpush.bf16.msra.mxu0 0
        %1991 = vmatpush.bf16.msra.mxu0 0
        %1992 = vmatpush.bf16.msra.mxu0 %v1946
        %1993 = vmatpush.bf16.msra.mxu0 %v1944
        %1994 = vmatpush.bf16.msra.mxu0 %v1942
        %1995 = vmatpush.bf16.msra.mxu0 %v1940
        %1996 = vmatmul.bf16.gmra.mxu0 %v1973
        %v1997 = vpop.f32.mrf.mxu0
        %v1998 = vadd.f32 %v1985, %v1997
        %v1999 = vpop.f32.mrf.mxu0
        %2000 = vdwg.mxu0
        %2001 = vmatpush.bf16.msra.mxu0 %v1939
        %2002 = vmatpush.bf16.msra.mxu0 %v1937
        %2003 = vmatpush.bf16.msra.mxu0 %v1935
        %2004 = vmatpush.bf16.msra.mxu0 %v1933
        %2005 = vmatpush.bf16.msra.mxu0 %v1931
        %2006 = vmatpush.bf16.msra.mxu0 %v1929
        %2007 = vmatpush.bf16.msra.mxu0 %v1927
        %2008 = vmatpush.bf16.msra.mxu0 %v1925
        %2009 = vmatmul.bf16.gmra.mxu0 %v1849
        %v2010 = vpop.f32.mrf.mxu0
        %v2011 = vadd.f32 0.0, %v2010
        %v2012 = vpop.f32.mrf.mxu0
        %2013 = vdwg.mxu0
        %2014 = vmatpush.bf16.msra.mxu0 0
        %2015 = vmatpush.bf16.msra.mxu0 0
        %2016 = vmatpush.bf16.msra.mxu0 0
        %2017 = vmatpush.bf16.msra.mxu0 0
        %2018 = vmatpush.bf16.msra.mxu0 %v1947
        %2019 = vmatpush.bf16.msra.mxu0 %v1945
        %2020 = vmatpush.bf16.msra.mxu0 %v1943
        %2021 = vmatpush.bf16.msra.mxu0 %v1941
        %2022 = vmatmul.bf16.gmra.mxu0 %v1973
        %v2023 = vpop.f32.mrf.mxu0
        %v2024 = vadd.f32 %v2011, %v2023
        %v2025 = vpop.f32.mrf.mxu0
        %2026 = vdwg.mxu0
        %v2027 = vadd.f32 %v1793, %v1998
        %v2028 = vadd.f32 %v1819, %v2024
        %v2029 = vpack.c.bf16 %v1405, %v1403
        %v2030 = vpack.c.bf16 %v1406, %v1404
        %s2031 = scalar_lea.vmem [#allocation5], 576
        %v2032 = vld [vmem:[%s2031] sm:$0xff]
        %v2033 = vld [vmem:[%s2031 + $0x8] sm:$0xff]
        %v2034 = vld [vmem:[%s2031 + $0x10] sm:$0xff]
        %v2035 = vld [vmem:[%s2031 + $0x18] sm:$0xff]
        %v2036 = vld [vmem:[%s2031 + $0x20] sm:$0xff]
        %v2037 = vld [vmem:[%s2031 + $0x28] sm:$0xff]
        %v2038 = vld [vmem:[%s2031 + $0x30] sm:$0xff]
        %v2039 = vld [vmem:[%s2031 + $0x38] sm:$0xff]
        %v2040 = vld [vmem:[%s2031 + $0x40] sm:$0xff]
        %v2041 = vld [vmem:[%s2031 + $0x48] sm:$0xff]
        %v2042 = vld [vmem:[%s2031 + $0x50] sm:$0xff]
        %v2043 = vld [vmem:[%s2031 + $0x58] sm:$0xff]
        %v2044 = vld [vmem:[%s2031 + $0x60] sm:$0xff]
        %v2045 = vld [vmem:[%s2031 + $0x68] sm:$0xff]
        %v2046 = vld [vmem:[%s2031 + $0x70] sm:$0xff]
        %v2047 = vld [vmem:[%s2031 + $0x78] sm:$0xff]
        %v2048 = vld [vmem:[%s2031 + $0x80] sm:$0xff]
        %v2049 = vld [vmem:[%s2031 + $0x88] sm:$0xff]
        %v2050 = vld [vmem:[%s2031 + $0x90] sm:$0xff]
        %v2051 = vld [vmem:[%s2031 + $0x98] sm:$0xff]
        %v2052 = vld [vmem:[%s2031 + $0xa0] sm:$0xff]
        %v2053 = vld [vmem:[%s2031 + $0xa8] sm:$0xff]
        %v2054 = vld [vmem:[%s2031 + $0xb0] sm:$0xff]
        %v2055 = vld [vmem:[%s2031 + $0xb8] sm:$0xff]
        %v2057 = vshrl.u32 %v2029, 16
        %v2059 = vrot.slane %v2057, 1
        %v2060 = vshll.u32 %v2029, 16
        %v2062 = vrot.slane %v2060, 2
        %v2063 = vor.u32 %v2059, %v2062
        %v2065 = vshrl.u32 %v2030, 16
        %v2067 = vrot.slane %v2065, 1
        %v2068 = vshll.u32 %v2030, 16
        %v2070 = vrot.slane %v2068, 2
        %v2071 = vor.u32 %v2067, %v2070
        %v2097 = vunpack.c.l.b16 %v2032
        %v2098 = vunpack.c.h.b16 %v2032
        %v2099 = vunpack.c.l.b16 %v2033
        %v2100 = vunpack.c.h.b16 %v2033
        %v2101 = vunpack.c.l.b16 %v2034
        %v2102 = vunpack.c.h.b16 %v2034
        %v2103 = vunpack.c.l.b16 %v2035
        %v2104 = vunpack.c.h.b16 %v2035
        %v2105 = vunpack.c.l.b16 %v2036
        %v2106 = vunpack.c.h.b16 %v2036
        %v2107 = vunpack.c.l.b16 %v2037
        %v2108 = vunpack.c.h.b16 %v2037
        %v2109 = vunpack.c.l.b16 %v2038
        %v2110 = vunpack.c.h.b16 %v2038
        %v2111 = vunpack.c.l.b16 %v2039
        %v2112 = vunpack.c.h.b16 %v2039
        %v2113 = vunpack.c.l.b16 %v2040
        %v2114 = vunpack.c.h.b16 %v2040
        %v2115 = vunpack.c.l.b16 %v2041
        %v2116 = vunpack.c.h.b16 %v2041
        %v2117 = vunpack.c.l.b16 %v2042
        %v2118 = vunpack.c.h.b16 %v2042
        %v2119 = vunpack.c.l.b16 %v2043
        %v2120 = vunpack.c.h.b16 %v2043
        %v2121 = vunpack.c.l.b16 %v2044
        %v2122 = vunpack.c.h.b16 %v2044
        %v2123 = vunpack.c.l.b16 %v2045
        %v2124 = vunpack.c.h.b16 %v2045
        %v2125 = vunpack.c.l.b16 %v2046
        %v2126 = vunpack.c.h.b16 %v2046
        %v2127 = vunpack.c.l.b16 %v2047
        %v2128 = vunpack.c.h.b16 %v2047
        %v2129 = vunpack.c.l.b16 %v2048
        %v2130 = vunpack.c.h.b16 %v2048
        %v2131 = vunpack.c.l.b16 %v2049
        %v2132 = vunpack.c.h.b16 %v2049
        %v2133 = vunpack.c.l.b16 %v2050
        %v2134 = vunpack.c.h.b16 %v2050
        %v2135 = vunpack.c.l.b16 %v2051
        %v2136 = vunpack.c.h.b16 %v2051
        %v2137 = vunpack.c.l.b16 %v2052
        %v2138 = vunpack.c.h.b16 %v2052
        %v2139 = vunpack.c.l.b16 %v2053
        %v2140 = vunpack.c.h.b16 %v2053
        %v2141 = vunpack.c.l.b16 %v2054
        %v2142 = vunpack.c.h.b16 %v2054
        %v2143 = vunpack.c.l.b16 %v2055
        %v2144 = vunpack.c.h.b16 %v2055
        %v2145 = vpack.c.b16 %v2099, %v2097
        %v2146 = vpack.c.b16 %v2100, %v2098
        %v2147 = vpack.c.b16 %v2103, %v2101
        %v2148 = vpack.c.b16 %v2104, %v2102
        %v2149 = vpack.c.b16 %v2107, %v2105
        %v2150 = vpack.c.b16 %v2108, %v2106
        %v2151 = vpack.c.b16 %v2111, %v2109
        %v2152 = vpack.c.b16 %v2112, %v2110
        %v2153 = vpack.c.b16 %v2115, %v2113
        %v2154 = vpack.c.b16 %v2116, %v2114
        %v2155 = vpack.c.b16 %v2119, %v2117
        %v2156 = vpack.c.b16 %v2120, %v2118
        %v2157 = vpack.c.b16 %v2123, %v2121
        %v2158 = vpack.c.b16 %v2124, %v2122
        %v2159 = vpack.c.b16 %v2127, %v2125
        %v2160 = vpack.c.b16 %v2128, %v2126
        %v2161 = vpack.c.b16 %v2131, %v2129
        %v2162 = vpack.c.b16 %v2132, %v2130
        %v2163 = vpack.c.b16 %v2135, %v2133
        %v2164 = vpack.c.b16 %v2136, %v2134
        %v2165 = vpack.c.b16 %v2139, %v2137
        %v2166 = vpack.c.b16 %v2140, %v2138
        %v2167 = vpack.c.b16 %v2143, %v2141
        %v2168 = vpack.c.b16 %v2144, %v2142
        %v2194 = vsel %vm592, %v2071, 0
        %2196 = vmatpush.bf16.msra.mxu0 %v2159
        %2197 = vmatpush.bf16.msra.mxu0 %v2157
        %2198 = vmatpush.bf16.msra.mxu0 %v2155
        %2199 = vmatpush.bf16.msra.mxu0 %v2153
        %2200 = vmatpush.bf16.msra.mxu0 %v2151
        %2201 = vmatpush.bf16.msra.mxu0 %v2149
        %2202 = vmatpush.bf16.msra.mxu0 %v2147
        %2203 = vmatpush.bf16.msra.mxu0 %v2145
        %2204 = vmatmul.bf16.gmra.mxu0 %v2063
        %v2205 = vpop.f32.mrf.mxu0
        %v2206 = vadd.f32 0.0, %v2205
        %v2207 = vpop.f32.mrf.mxu0
        %2208 = vdwg.mxu0
        %2209 = vmatpush.bf16.msra.mxu0 0
        %2210 = vmatpush.bf16.msra.mxu0 0
        %2211 = vmatpush.bf16.msra.mxu0 0
        %2212 = vmatpush.bf16.msra.mxu0 0
        %2213 = vmatpush.bf16.msra.mxu0 %v2167
        %2214 = vmatpush.bf16.msra.mxu0 %v2165
        %2215 = vmatpush.bf16.msra.mxu0 %v2163
        %2216 = vmatpush.bf16.msra.mxu0 %v2161
        %2217 = vmatmul.bf16.gmra.mxu0 %v2194
        %v2218 = vpop.f32.mrf.mxu0
        %v2219 = vadd.f32 %v2206, %v2218
        %v2220 = vpop.f32.mrf.mxu0
        %2221 = vdwg.mxu0
        %2222 = vmatpush.bf16.msra.mxu0 %v2160
        %2223 = vmatpush.bf16.msra.mxu0 %v2158
        %2224 = vmatpush.bf16.msra.mxu0 %v2156
        %2225 = vmatpush.bf16.msra.mxu0 %v2154
        %2226 = vmatpush.bf16.msra.mxu0 %v2152
        %2227 = vmatpush.bf16.msra.mxu0 %v2150
        %2228 = vmatpush.bf16.msra.mxu0 %v2148
        %2229 = vmatpush.bf16.msra.mxu0 %v2146
        %2230 = vmatmul.bf16.gmra.mxu0 %v2063
        %v2231 = vpop.f32.mrf.mxu0
        %v2232 = vadd.f32 0.0, %v2231
        %v2233 = vpop.f32.mrf.mxu0
        %2234 = vdwg.mxu0
        %2235 = vmatpush.bf16.msra.mxu0 0
        %2236 = vmatpush.bf16.msra.mxu0 0
        %2237 = vmatpush.bf16.msra.mxu0 0
        %2238 = vmatpush.bf16.msra.mxu0 0
        %2239 = vmatpush.bf16.msra.mxu0 %v2168
        %2240 = vmatpush.bf16.msra.mxu0 %v2166
        %2241 = vmatpush.bf16.msra.mxu0 %v2164
        %2242 = vmatpush.bf16.msra.mxu0 %v2162
        %2243 = vmatmul.bf16.gmra.mxu0 %v2194
        %v2244 = vpop.f32.mrf.mxu0
        %v2245 = vadd.f32 %v2232, %v2244
        %v2246 = vpop.f32.mrf.mxu0
        %2247 = vdwg.mxu0
        %v2248 = vadd.f32 %v2027, %v2219
        %v2249 = vadd.f32 %v2028, %v2245
        %s2250 = scalar_lea.vmem [#allocation5], 768
        %v2251 = vld [vmem:[%s2250] sm:$0xff]
        %v2252 = vld [vmem:[%s2250 + $0x8] sm:$0xff]
        %v2253 = vld [vmem:[%s2250 + $0x10] sm:$0xff]
        %v2254 = vld [vmem:[%s2250 + $0x18] sm:$0xff]
        %v2255 = vld [vmem:[%s2250 + $0x20] sm:$0xff]
        %v2256 = vld [vmem:[%s2250 + $0x28] sm:$0xff]
        %v2257 = vld [vmem:[%s2250 + $0x30] sm:$0xff]
        %v2258 = vld [vmem:[%s2250 + $0x38] sm:$0xff]
        %v2259 = vld [vmem:[%s2250 + $0x40] sm:$0xff]
        %v2260 = vld [vmem:[%s2250 + $0x48] sm:$0xff]
        %v2261 = vld [vmem:[%s2250 + $0x50] sm:$0xff]
        %v2262 = vld [vmem:[%s2250 + $0x58] sm:$0xff]
        %v2263 = vld [vmem:[%s2250 + $0x60] sm:$0xff]
        %v2264 = vld [vmem:[%s2250 + $0x68] sm:$0xff]
        %v2265 = vld [vmem:[%s2250 + $0x70] sm:$0xff]
        %v2266 = vld [vmem:[%s2250 + $0x78] sm:$0xff]
        %v2267 = vld [vmem:[%s2250 + $0x80] sm:$0xff]
        %v2268 = vld [vmem:[%s2250 + $0x88] sm:$0xff]
        %v2269 = vld [vmem:[%s2250 + $0x90] sm:$0xff]
        %v2270 = vld [vmem:[%s2250 + $0x98] sm:$0xff]
        %v2271 = vld [vmem:[%s2250 + $0xa0] sm:$0xff]
        %v2272 = vld [vmem:[%s2250 + $0xa8] sm:$0xff]
        %v2273 = vld [vmem:[%s2250 + $0xb0] sm:$0xff]
        %v2274 = vld [vmem:[%s2250 + $0xb8] sm:$0xff]
        %v2277 = vrot.slane %v2029, 2
        %v2278 = vrot.slane %v2030, 2
        %v2304 = vunpack.c.l.b16 %v2251
        %v2305 = vunpack.c.h.b16 %v2251
        %v2306 = vunpack.c.l.b16 %v2252
        %v2307 = vunpack.c.h.b16 %v2252
        %v2308 = vunpack.c.l.b16 %v2253
        %v2309 = vunpack.c.h.b16 %v2253
        %v2310 = vunpack.c.l.b16 %v2254
        %v2311 = vunpack.c.h.b16 %v2254
        %v2312 = vunpack.c.l.b16 %v2255
        %v2313 = vunpack.c.h.b16 %v2255
        %v2314 = vunpack.c.l.b16 %v2256
        %v2315 = vunpack.c.h.b16 %v2256
        %v2316 = vunpack.c.l.b16 %v2257
        %v2317 = vunpack.c.h.b16 %v2257
        %v2318 = vunpack.c.l.b16 %v2258
        %v2319 = vunpack.c.h.b16 %v2258
        %v2320 = vunpack.c.l.b16 %v2259
        %v2321 = vunpack.c.h.b16 %v2259
        %v2322 = vunpack.c.l.b16 %v2260
        %v2323 = vunpack.c.h.b16 %v2260
        %v2324 = vunpack.c.l.b16 %v2261
        %v2325 = vunpack.c.h.b16 %v2261
        %v2326 = vunpack.c.l.b16 %v2262
        %v2327 = vunpack.c.h.b16 %v2262
        %v2328 = vunpack.c.l.b16 %v2263
        %v2329 = vunpack.c.h.b16 %v2263
        %v2330 = vunpack.c.l.b16 %v2264
        %v2331 = vunpack.c.h.b16 %v2264
        %v2332 = vunpack.c.l.b16 %v2265
        %v2333 = vunpack.c.h.b16 %v2265
        %v2334 = vunpack.c.l.b16 %v2266
        %v2335 = vunpack.c.h.b16 %v2266
        %v2336 = vunpack.c.l.b16 %v2267
        %v2337 = vunpack.c.h.b16 %v2267
        %v2338 = vunpack.c.l.b16 %v2268
        %v2339 = vunpack.c.h.b16 %v2268
        %v2340 = vunpack.c.l.b16 %v2269
        %v2341 = vunpack.c.h.b16 %v2269
        %v2342 = vunpack.c.l.b16 %v2270
        %v2343 = vunpack.c.h.b16 %v2270
        %v2344 = vunpack.c.l.b16 %v2271
        %v2345 = vunpack.c.h.b16 %v2271
        %v2346 = vunpack.c.l.b16 %v2272
        %v2347 = vunpack.c.h.b16 %v2272
        %v2348 = vunpack.c.l.b16 %v2273
        %v2349 = vunpack.c.h.b16 %v2273
        %v2350 = vunpack.c.l.b16 %v2274
        %v2351 = vunpack.c.h.b16 %v2274
        %v2352 = vpack.c.b16 %v2306, %v2304
        %v2353 = vpack.c.b16 %v2307, %v2305
        %v2354 = vpack.c.b16 %v2310, %v2308
        %v2355 = vpack.c.b16 %v2311, %v2309
        %v2356 = vpack.c.b16 %v2314, %v2312
        %v2357 = vpack.c.b16 %v2315, %v2313
        %v2358 = vpack.c.b16 %v2318, %v2316
        %v2359 = vpack.c.b16 %v2319, %v2317
        %v2360 = vpack.c.b16 %v2322, %v2320
        %v2361 = vpack.c.b16 %v2323, %v2321
        %v2362 = vpack.c.b16 %v2326, %v2324
        %v2363 = vpack.c.b16 %v2327, %v2325
        %v2364 = vpack.c.b16 %v2330, %v2328
        %v2365 = vpack.c.b16 %v2331, %v2329
        %v2366 = vpack.c.b16 %v2334, %v2332
        %v2367 = vpack.c.b16 %v2335, %v2333
        %v2368 = vpack.c.b16 %v2338, %v2336
        %v2369 = vpack.c.b16 %v2339, %v2337
        %v2370 = vpack.c.b16 %v2342, %v2340
        %v2371 = vpack.c.b16 %v2343, %v2341
        %v2372 = vpack.c.b16 %v2346, %v2344
        %v2373 = vpack.c.b16 %v2347, %v2345
        %v2374 = vpack.c.b16 %v2350, %v2348
        %v2375 = vpack.c.b16 %v2351, %v2349
        %v2401 = vsel %vm592, %v2278, 0
        %2403 = vmatpush.bf16.msra.mxu0 %v2366
        %2404 = vmatpush.bf16.msra.mxu0 %v2364
        %2405 = vmatpush.bf16.msra.mxu0 %v2362
        %2406 = vmatpush.bf16.msra.mxu0 %v2360
        %2407 = vmatpush.bf16.msra.mxu0 %v2358
        %2408 = vmatpush.bf16.msra.mxu0 %v2356
        %2409 = vmatpush.bf16.msra.mxu0 %v2354
        %2410 = vmatpush.bf16.msra.mxu0 %v2352
        %2411 = vmatmul.bf16.gmra.mxu0 %v2277
        %v2412 = vpop.f32.mrf.mxu0
        %v2413 = vadd.f32 0.0, %v2412
        %v2414 = vpop.f32.mrf.mxu0
        %2415 = vdwg.mxu0
        %2416 = vmatpush.bf16.msra.mxu0 0
        %2417 = vmatpush.bf16.msra.mxu0 0
        %2418 = vmatpush.bf16.msra.mxu0 0
        %2419 = vmatpush.bf16.msra.mxu0 0
        %2420 = vmatpush.bf16.msra.mxu0 %v2374
        %2421 = vmatpush.bf16.msra.mxu0 %v2372
        %2422 = vmatpush.bf16.msra.mxu0 %v2370
        %2423 = vmatpush.bf16.msra.mxu0 %v2368
        %2424 = vmatmul.bf16.gmra.mxu0 %v2401
        %v2425 = vpop.f32.mrf.mxu0
        %v2426 = vadd.f32 %v2413, %v2425
        %v2427 = vpop.f32.mrf.mxu0
        %2428 = vdwg.mxu0
        %2429 = vmatpush.bf16.msra.mxu0 %v2367
        %2430 = vmatpush.bf16.msra.mxu0 %v2365
        %2431 = vmatpush.bf16.msra.mxu0 %v2363
        %2432 = vmatpush.bf16.msra.mxu0 %v2361
        %2433 = vmatpush.bf16.msra.mxu0 %v2359
        %2434 = vmatpush.bf16.msra.mxu0 %v2357
        %2435 = vmatpush.bf16.msra.mxu0 %v2355
        %2436 = vmatpush.bf16.msra.mxu0 %v2353
        %2437 = vmatmul.bf16.gmra.mxu0 %v2277
        %v2438 = vpop.f32.mrf.mxu0
        %v2439 = vadd.f32 0.0, %v2438
        %v2440 = vpop.f32.mrf.mxu0
        %2441 = vdwg.mxu0
        %2442 = vmatpush.bf16.msra.mxu0 0
        %2443 = vmatpush.bf16.msra.mxu0 0
        %2444 = vmatpush.bf16.msra.mxu0 0
        %2445 = vmatpush.bf16.msra.mxu0 0
        %2446 = vmatpush.bf16.msra.mxu0 %v2375
        %2447 = vmatpush.bf16.msra.mxu0 %v2373
        %2448 = vmatpush.bf16.msra.mxu0 %v2371
        %2449 = vmatpush.bf16.msra.mxu0 %v2369
        %2450 = vmatmul.bf16.gmra.mxu0 %v2401
        %v2451 = vpop.f32.mrf.mxu0
        %v2452 = vadd.f32 %v2439, %v2451
        %v2453 = vpop.f32.mrf.mxu0
        %2454 = vdwg.mxu0
        %v2455 = vadd.f32 %v2248, %v2426
        %v2456 = vadd.f32 %v2249, %v2452
        %v2457 = vld [vmem:[%s4] sm:$0x3]
        %v2459 = vperm.slane %v2457, 0
        %v2460 = vperm.slane %v2457, 1
        %v2463 = vadd.f32 %v2455, %v2459
        %v2464 = vadd.f32 %v2456, %v2460
        %vm2465 = vcmp.gt.f32.partialorder %v2463, 0.0
        %vm2466 = vcmp.gt.f32.partialorder %v2464, 0.0
        %v2467 = vmul.f32 %v2463, 0.1
        %v2468 = vmul.f32 %v2464, 0.1
        %v2469 = vsel %vm2465, %v2463, %v2467
        %v2470 = vsel %vm2466, %v2464, %v2468
        %v2473 = vrot.slane %v2470, 7
        %v2474 = vsel %vm478, %v2469, %v2473
        %vm2476 = vcmp.lt.s32.totalorder %v1200, 144
        %vm2477 = vmand %vm1201, %vm2476
        %2478 = vst.msk [vmem:[#allocation2] ss:$8 sm:$0x3] %vm2477, %v2474
        %2479 = vst.msk [vmem:[#allocation2] ss:$8 sm:$0x0] %vm2477, %v2474
        %v2480 = vrot.slane %v2469, 1
        %v2481 = vrot.slane %v2470, 1
        %v2484 = vmax.f32 %v2469, %v2480
        %v2485 = vmax.f32 %v2470, %v2481
        %2488 = vst [vmem:[#allocation1] sm:$0xff] %v2484
        %2489 = vst [vmem:[#allocation1 + $0x9] sm:$0xff] %v2485
        %s2490 = scalar_lea.vmem [#allocation1], 1
        %v2491 = vld [vmem:[%s2490] ss:$9 sm:$0xff]
        %2493 = vst.msk [vmem:[%s1224] ss:$8 sm:$0x3] %vm2477, %v2491
        %2494 = vst.msk [vmem:[%s1224] ss:$8 sm:$0x0] %vm2477, %v2491
        %2495 = vst [vmem:[#allocation1] sm:$0xff] %v2484
        %2496 = vst [vmem:[#allocation1 + $0x9] sm:$0xff] %v2485
        %s2497 = scalar_lea.vmem [#allocation1], 3
        %v2498 = vld [vmem:[%s2497] ss:$9 sm:$0xff]
        %2500 = vst.msk [vmem:[%s1233] ss:$8 sm:$0x3] %vm2477, %v2498
        %2501 = vst.msk [vmem:[%s1233] ss:$8 sm:$0x0] %vm2477, %v2498
        %2502 = vst [vmem:[#allocation1] sm:$0xff] %v2469
        %2503 = vst [vmem:[#allocation1 + $0x9] sm:$0xff] %v2470
        %s2504 = scalar_lea.vmem [#allocation1], 5
        %v2505 = vld [vmem:[%s2504] ss:$9 sm:$0xff]
        %2507 = vst.msk [vmem:[%s1242] ss:$8 sm:$0x3] %vm2477, %v2505
        %2508 = vst.msk [vmem:[%s1242] ss:$8 sm:$0x0] %vm2477, %v2505
        %v2509 = vld [vmem:[#allocation2] sm:$0xf]
        %vm2510 = vcmask 191488
        %2511 = vst.msk [vmem:[#allocation3] sm:$0xf] %vm2510, %v2509
        %v2512 = vld [vmem:[#allocation2] sm:$0xf]
        %2514 = vrot.lane.b32.xlu0 %v2512, 104
        %v2515 = vpop.permute.xlu0 %2514
        %v2517 = vmax.f32 %v2512, %v2515
        %vm2518 = vcmask 388288
        %2519 = vst.msk [vmem:[#allocation3] sm:$0xf] %vm2518, %v2517
        %v2520 = vld [vmem:[#allocation2] sm:$0xf]
        %2522 = vrot.lane.b32.xlu0 %v2520, 104
        %v2523 = vpop.permute.xlu0 %2522
        %v2525 = vmax.f32 %v2520, %v2523
        %2527 = vrot.lane.b32.xlu0 %v2525, 104
        %v2528 = vpop.permute.xlu0 %2527
        %vm2530 = vcmask 585088
        %2531 = vst.msk [vmem:[#allocation3] sm:$0xf] %vm2530, %v2528
        %v2532 = vld [vmem:[#allocation2] sm:$0xf]
        %v2533 = vld [vmem:[#allocation2 + $0x8] sm:$0xf]
        %2536 = vrot.lane.b32.xlu0 %v2532, 80
        %v2537 = vpop.permute.xlu0 %2536
        %2538 = vrot.lane.b32.xlu0 %v2533, 80
        %v2539 = vpop.permute.xlu0 %2538
        %v2540 = vsel %vm1339, %v2537, %v2539
        %vm2542 = vcmask 781888
        %2543 = vst.msk [vmem:[#allocation3] sm:$0xf] %vm2542, %v2540
        %v2544 = vld [vmem:[#allocation3] sm:$0xf]
        %v2546 = vrot.slane %v2544, 7
        %v2548 = vsel %vm478, 0.0, %v2546
        %vm2549 = vcmask 1044480
        %v2550 = vsel %vm2549, %v2548, 0.0
        %v2551 = vpack.c.bf16 %v2550, %v2550
        %v2552 = vld [vmem:[#allocation7] sm:$0xf]
        %v2553 = vld [vmem:[#allocation7 + $0x4] sm:$0xf]
        %v2554 = vld [vmem:[#allocation7 + $0x8] sm:$0xf]
        %v2555 = vld [vmem:[#allocation7 + $0xc] sm:$0xf]
        %v2556 = vld [vmem:[#allocation7 + $0x10] sm:$0xf]
        %v2557 = vld [vmem:[#allocation7 + $0x14] sm:$0xf]
        %v2558 = vld [vmem:[#allocation7 + $0x18] sm:$0xf]
        %v2559 = vld [vmem:[#allocation7 + $0x1c] sm:$0xf]
        %v2560 = vld [vmem:[#allocation7 + $0x20] sm:$0xf]
        %v2561 = vld [vmem:[#allocation7 + $0x24] sm:$0xf]
        %v2562 = vld [vmem:[#allocation7 + $0x28] sm:$0xf]
        %v2563 = vld [vmem:[#allocation7 + $0x2c] sm:$0xf]
        %s2564 = scalar_lea.vmem [#allocation7], 48
        %v2565 = vld [vmem:[%s2564] sm:$0xf]
        %v2566 = vld [vmem:[%s2564 + $0x4] sm:$0xf]
        %v2567 = vld [vmem:[%s2564 + $0x8] sm:$0xf]
        %v2568 = vld [vmem:[%s2564 + $0xc] sm:$0xf]
        %v2569 = vld [vmem:[%s2564 + $0x10] sm:$0xf]
        %v2570 = vld [vmem:[%s2564 + $0x14] sm:$0xf]
        %v2571 = vld [vmem:[%s2564 + $0x18] sm:$0xf]
        %v2572 = vld [vmem:[%s2564 + $0x1c] sm:$0xf]
        %v2573 = vld [vmem:[%s2564 + $0x20] sm:$0xf]
        %v2574 = vld [vmem:[%s2564 + $0x24] sm:$0xf]
        %v2575 = vld [vmem:[%s2564 + $0x28] sm:$0xf]
        %v2576 = vld [vmem:[%s2564 + $0x2c] sm:$0xf]
        %v2578 = vshrl.u32 %v2551, 16
        %v2580 = vshll.u32 %v2551, 16
        %v2582 = vrot.slane %v2580, 1
        %v2583 = vor.u32 %v2578, %v2582
        %v2596 = vunpack.c.l.b16 %v2565
        %v2597 = vunpack.c.l.b16 %v2566
        %v2598 = vunpack.c.l.b16 %v2567
        %v2599 = vunpack.c.l.b16 %v2568
        %v2600 = vunpack.c.l.b16 %v2569
        %v2601 = vunpack.c.l.b16 %v2570
        %v2602 = vunpack.c.l.b16 %v2571
        %v2603 = vunpack.c.l.b16 %v2572
        %v2604 = vunpack.c.l.b16 %v2573
        %v2605 = vunpack.c.l.b16 %v2574
        %v2606 = vunpack.c.l.b16 %v2575
        %v2607 = vunpack.c.l.b16 %v2576
        %v2608 = vpack.c.b16 %v2597, %v2596
        %v2609 = vpack.c.b16 %v2599, %v2598
        %v2610 = vpack.c.b16 %v2601, %v2600
        %v2611 = vpack.c.b16 %v2603, %v2602
        %v2612 = vpack.c.b16 %v2605, %v2604
        %v2613 = vpack.c.b16 %v2607, %v2606
        %vm2620 = vcmask 785408
        %v2622 = vsel %vm2620, %v2583, 0
        %2624 = vmatpush.bf16.msra.mxu0 0
        %2625 = vmatpush.bf16.msra.mxu0 0
        %2626 = vmatpush.bf16.msra.mxu0 %v2613
        %2627 = vmatpush.bf16.msra.mxu0 %v2612
        %2628 = vmatpush.bf16.msra.mxu0 %v2611
        %2629 = vmatpush.bf16.msra.mxu0 %v2610
        %2630 = vmatpush.bf16.msra.mxu0 %v2609
        %2631 = vmatpush.bf16.msra.mxu0 %v2608
        %2632 = vmatmul.bf16.gmra.mxu0 %v2622
        %v2633 = vpop.f32.mrf.mxu0
        %v2634 = vadd.f32 0.0, %v2633
        %v2635 = vpop.f32.mrf.mxu0
        %2636 = vdwg.mxu0
        %v2649 = vunpack.c.l.b16 %v2552
        %v2650 = vunpack.c.l.b16 %v2553
        %v2651 = vunpack.c.l.b16 %v2554
        %v2652 = vunpack.c.l.b16 %v2555
        %v2653 = vunpack.c.l.b16 %v2556
        %v2654 = vunpack.c.l.b16 %v2557
        %v2655 = vunpack.c.l.b16 %v2558
        %v2656 = vunpack.c.l.b16 %v2559
        %v2657 = vunpack.c.l.b16 %v2560
        %v2658 = vunpack.c.l.b16 %v2561
        %v2659 = vunpack.c.l.b16 %v2562
        %v2660 = vunpack.c.l.b16 %v2563
        %v2661 = vpack.c.b16 %v2650, %v2649
        %v2662 = vpack.c.b16 %v2652, %v2651
        %v2663 = vpack.c.b16 %v2654, %v2653
        %v2664 = vpack.c.b16 %v2656, %v2655
        %v2665 = vpack.c.b16 %v2658, %v2657
        %v2666 = vpack.c.b16 %v2660, %v2659
        %v2673 = vsel %vm2620, %v2551, 0
        %2675 = vmatpush.bf16.msra.mxu0 0
        %2676 = vmatpush.bf16.msra.mxu0 0
        %2677 = vmatpush.bf16.msra.mxu0 %v2666
        %2678 = vmatpush.bf16.msra.mxu0 %v2665
        %2679 = vmatpush.bf16.msra.mxu0 %v2664
        %2680 = vmatpush.bf16.msra.mxu0 %v2663
        %2681 = vmatpush.bf16.msra.mxu0 %v2662
        %2682 = vmatpush.bf16.msra.mxu0 %v2661
        %2683 = vmatmul.bf16.gmra.mxu0 %v2673
        %v2684 = vpop.f32.mrf.mxu0
        %v2685 = vadd.f32 %v2634, %v2684
        %v2686 = vpop.f32.mrf.mxu0
        %2687 = vdwg.mxu0
        %s2688 = scalar_lea.vmem [#allocation7], 96
        %v2689 = vld [vmem:[%s2688] sm:$0xf]
        %v2690 = vld [vmem:[%s2688 + $0x4] sm:$0xf]
        %v2691 = vld [vmem:[%s2688 + $0x8] sm:$0xf]
        %v2692 = vld [vmem:[%s2688 + $0xc] sm:$0xf]
        %v2693 = vld [vmem:[%s2688 + $0x10] sm:$0xf]
        %v2694 = vld [vmem:[%s2688 + $0x14] sm:$0xf]
        %v2695 = vld [vmem:[%s2688 + $0x18] sm:$0xf]
        %v2696 = vld [vmem:[%s2688 + $0x1c] sm:$0xf]
        %v2697 = vld [vmem:[%s2688 + $0x20] sm:$0xf]
        %v2698 = vld [vmem:[%s2688 + $0x24] sm:$0xf]
        %v2699 = vld [vmem:[%s2688 + $0x28] sm:$0xf]
        %v2700 = vld [vmem:[%s2688 + $0x2c] sm:$0xf]
        %v2702 = vrot.slane %v2551, 1
        %v2715 = vunpack.c.l.b16 %v2689
        %v2716 = vunpack.c.l.b16 %v2690
        %v2717 = vunpack.c.l.b16 %v2691
        %v2718 = vunpack.c.l.b16 %v2692
        %v2719 = vunpack.c.l.b16 %v2693
        %v2720 = vunpack.c.l.b16 %v2694
        %v2721 = vunpack.c.l.b16 %v2695
        %v2722 = vunpack.c.l.b16 %v2696
        %v2723 = vunpack.c.l.b16 %v2697
        %v2724 = vunpack.c.l.b16 %v2698
        %v2725 = vunpack.c.l.b16 %v2699
        %v2726 = vunpack.c.l.b16 %v2700
        %v2727 = vpack.c.b16 %v2716, %v2715
        %v2728 = vpack.c.b16 %v2718, %v2717
        %v2729 = vpack.c.b16 %v2720, %v2719
        %v2730 = vpack.c.b16 %v2722, %v2721
        %v2731 = vpack.c.b16 %v2724, %v2723
        %v2732 = vpack.c.b16 %v2726, %v2725
        %v2740 = vsel %vm2620, %v2702, 0
        %2742 = vmatpush.bf16.msra.mxu0 0
        %2743 = vmatpush.bf16.msra.mxu0 0
        %2744 = vmatpush.bf16.msra.mxu0 %v2732
        %2745 = vmatpush.bf16.msra.mxu0 %v2731
        %2746 = vmatpush.bf16.msra.mxu0 %v2730
        %2747 = vmatpush.bf16.msra.mxu0 %v2729
        %2748 = vmatpush.bf16.msra.mxu0 %v2728
        %2749 = vmatpush.bf16.msra.mxu0 %v2727
        %2750 = vmatmul.bf16.gmra.mxu0 %v2740
        %v2751 = vpop.f32.mrf.mxu0
        %v2752 = vadd.f32 0.0, %v2751
        %v2753 = vpop.f32.mrf.mxu0
        %2754 = vdwg.mxu0
        %v2755 = vadd.f32 %v2685, %v2752
        %s2756 = scalar_lea.vmem [#allocation7], 144
        %v2757 = vld [vmem:[%s2756] sm:$0xf]
        %v2758 = vld [vmem:[%s2756 + $0x4] sm:$0xf]
        %v2759 = vld [vmem:[%s2756 + $0x8] sm:$0xf]
        %v2760 = vld [vmem:[%s2756 + $0xc] sm:$0xf]
        %v2761 = vld [vmem:[%s2756 + $0x10] sm:$0xf]
        %v2762 = vld [vmem:[%s2756 + $0x14] sm:$0xf]
        %v2763 = vld [vmem:[%s2756 + $0x18] sm:$0xf]
        %v2764 = vld [vmem:[%s2756 + $0x1c] sm:$0xf]
        %v2765 = vld [vmem:[%s2756 + $0x20] sm:$0xf]
        %v2766 = vld [vmem:[%s2756 + $0x24] sm:$0xf]
        %v2767 = vld [vmem:[%s2756 + $0x28] sm:$0xf]
        %v2768 = vld [vmem:[%s2756 + $0x2c] sm:$0xf]
        %v2769 = vrot.slane %v2578, 1
        %v2770 = vrot.slane %v2580, 2
        %v2771 = vor.u32 %v2769, %v2770
        %v2784 = vunpack.c.l.b16 %v2757
        %v2785 = vunpack.c.l.b16 %v2758
        %v2786 = vunpack.c.l.b16 %v2759
        %v2787 = vunpack.c.l.b16 %v2760
        %v2788 = vunpack.c.l.b16 %v2761
        %v2789 = vunpack.c.l.b16 %v2762
        %v2790 = vunpack.c.l.b16 %v2763
        %v2791 = vunpack.c.l.b16 %v2764
        %v2792 = vunpack.c.l.b16 %v2765
        %v2793 = vunpack.c.l.b16 %v2766
        %v2794 = vunpack.c.l.b16 %v2767
        %v2795 = vunpack.c.l.b16 %v2768
        %v2796 = vpack.c.b16 %v2785, %v2784
        %v2797 = vpack.c.b16 %v2787, %v2786
        %v2798 = vpack.c.b16 %v2789, %v2788
        %v2799 = vpack.c.b16 %v2791, %v2790
        %v2800 = vpack.c.b16 %v2793, %v2792
        %v2801 = vpack.c.b16 %v2795, %v2794
        %v2809 = vsel %vm2620, %v2771, 0
        %2811 = vmatpush.bf16.msra.mxu0 0
        %2812 = vmatpush.bf16.msra.mxu0 0
        %2813 = vmatpush.bf16.msra.mxu0 %v2801
        %2814 = vmatpush.bf16.msra.mxu0 %v2800
        %2815 = vmatpush.bf16.msra.mxu0 %v2799
        %2816 = vmatpush.bf16.msra.mxu0 %v2798
        %2817 = vmatpush.bf16.msra.mxu0 %v2797
        %2818 = vmatpush.bf16.msra.mxu0 %v2796
        %2819 = vmatmul.bf16.gmra.mxu0 %v2809
        %v2820 = vpop.f32.mrf.mxu0
        %v2821 = vadd.f32 0.0, %v2820
        %v2822 = vpop.f32.mrf.mxu0
        %2823 = vdwg.mxu0
        %v2824 = vadd.f32 %v2755, %v2821
        %s2825 = scalar_lea.vmem [#allocation7], 192
        %v2826 = vld [vmem:[%s2825] sm:$0xf]
        %v2827 = vld [vmem:[%s2825 + $0x4] sm:$0xf]
        %v2828 = vld [vmem:[%s2825 + $0x8] sm:$0xf]
        %v2829 = vld [vmem:[%s2825 + $0xc] sm:$0xf]
        %v2830 = vld [vmem:[%s2825 + $0x10] sm:$0xf]
        %v2831 = vld [vmem:[%s2825 + $0x14] sm:$0xf]
        %v2832 = vld [vmem:[%s2825 + $0x18] sm:$0xf]
        %v2833 = vld [vmem:[%s2825 + $0x1c] sm:$0xf]
        %v2834 = vld [vmem:[%s2825 + $0x20] sm:$0xf]
        %v2835 = vld [vmem:[%s2825 + $0x24] sm:$0xf]
        %v2836 = vld [vmem:[%s2825 + $0x28] sm:$0xf]
        %v2837 = vld [vmem:[%s2825 + $0x2c] sm:$0xf]
        %v2838 = vrot.slane %v2551, 2
        %v2851 = vunpack.c.l.b16 %v2826
        %v2852 = vunpack.c.l.b16 %v2827
        %v2853 = vunpack.c.l.b16 %v2828
        %v2854 = vunpack.c.l.b16 %v2829
        %v2855 = vunpack.c.l.b16 %v2830
        %v2856 = vunpack.c.l.b16 %v2831
        %v2857 = vunpack.c.l.b16 %v2832
        %v2858 = vunpack.c.l.b16 %v2833
        %v2859 = vunpack.c.l.b16 %v2834
        %v2860 = vunpack.c.l.b16 %v2835
        %v2861 = vunpack.c.l.b16 %v2836
        %v2862 = vunpack.c.l.b16 %v2837
        %v2863 = vpack.c.b16 %v2852, %v2851
        %v2864 = vpack.c.b16 %v2854, %v2853
        %v2865 = vpack.c.b16 %v2856, %v2855
        %v2866 = vpack.c.b16 %v2858, %v2857
        %v2867 = vpack.c.b16 %v2860, %v2859
        %v2868 = vpack.c.b16 %v2862, %v2861
        %v2876 = vsel %vm2620, %v2838, 0
        %2878 = vmatpush.bf16.msra.mxu0 0
        %2879 = vmatpush.bf16.msra.mxu0 0
        %2880 = vmatpush.bf16.msra.mxu0 %v2868
        %2881 = vmatpush.bf16.msra.mxu0 %v2867
        %2882 = vmatpush.bf16.msra.mxu0 %v2866
        %2883 = vmatpush.bf16.msra.mxu0 %v2865
        %2884 = vmatpush.bf16.msra.mxu0 %v2864
        %2885 = vmatpush.bf16.msra.mxu0 %v2863
        %2886 = vmatmul.bf16.gmra.mxu0 %v2876
        %v2887 = vpop.f32.mrf.mxu0
        %v2888 = vadd.f32 0.0, %v2887
        %v2889 = vpop.f32.mrf.mxu0
        %2890 = vdwg.mxu0
        %v2891 = vadd.f32 %v2824, %v2888
        %v2892 = vld [vmem:[%s6] sm:$0x1]
        %v2894 = vperm.slane %v2892, 0
        %v2896 = vadd.f32 %v2891, %v2894
        %vm2897 = vcmp.gt.f32.partialorder %v2896, 0.0
        %v2898 = vmul.f32 %v2896, 0.1
        %v2899 = vsel %vm2897, %v2896, %v2898
        %vm2900 = vcmask 778240
        %2901 = vst.msk [vmem:[#allocation2] sm:$0x1] %vm2900, %v2899
        %v2903 = vrot.slane %v2899, 1
        %2905 = vst.msk [vmem:[#allocation2 + $0x1] sm:$0x1] %vm2900, %v2903
        %v2906 = vld [vmem:[#allocation2] sm:$0x3]
        %vm2907 = vcmask 386048
        %2908 = vst.msk [vmem:[#allocation3] sm:$0x3] %vm2907, %v2906
        %v2909 = vld [vmem:[#allocation2] sm:$0x3]
        %vm2910 = vcmask 779648
        %2911 = vst.msk [vmem:[#allocation3] sm:$0x3] %vm2910, %v2909
        %v2912 = vld [vmem:[#allocation3] sm:$0x3]
        %v2913 = vld [vmem:[%s8] sm:$0x1]
        %v2914 = vpack.c.bf16 %v2912, %v2912
        %v2915 = vld [vmem:[%s7] sm:$0xf]
        %v2916 = vld [vmem:[%s7 + $0x4] sm:$0xf]
        %v2917 = vld [vmem:[%s7 + $0x8] sm:$0xf]
        %v2918 = vld [vmem:[%s7 + $0xc] sm:$0xf]
        %v2919 = vld [vmem:[%s7 + $0x10] sm:$0xf]
        %v2920 = vld [vmem:[%s7 + $0x14] sm:$0xf]
        %v2921 = vld [vmem:[%s7 + $0x18] sm:$0xf]
        %v2922 = vld [vmem:[%s7 + $0x1c] sm:$0xf]
        %v2923 = vld [vmem:[%s7 + $0x20] sm:$0xf]
        %v2924 = vld [vmem:[%s7 + $0x24] sm:$0xf]
        %v2925 = vld [vmem:[%s7 + $0x28] sm:$0xf]
        %v2926 = vld [vmem:[%s7 + $0x2c] sm:$0xf]
        %v2939 = vunpack.c.l.b16 %v2915
        %v2940 = vunpack.c.l.b16 %v2916
        %v2941 = vunpack.c.l.b16 %v2917
        %v2942 = vunpack.c.l.b16 %v2918
        %v2943 = vunpack.c.l.b16 %v2919
        %v2944 = vunpack.c.l.b16 %v2920
        %v2945 = vunpack.c.l.b16 %v2921
        %v2946 = vunpack.c.l.b16 %v2922
        %v2947 = vunpack.c.l.b16 %v2923
        %v2948 = vunpack.c.l.b16 %v2924
        %v2949 = vunpack.c.l.b16 %v2925
        %v2950 = vunpack.c.l.b16 %v2926
        %v2951 = vpack.c.b16 %v2940, %v2939
        %v2952 = vpack.c.b16 %v2942, %v2941
        %v2953 = vpack.c.b16 %v2944, %v2943
        %v2954 = vpack.c.b16 %v2946, %v2945
        %v2955 = vpack.c.b16 %v2948, %v2947
        %v2956 = vpack.c.b16 %v2950, %v2949
        %v2964 = vsel %vm2620, %v2914, 0
        %2966 = vmatpush.bf16.msra.mxu0 0
        %2967 = vmatpush.bf16.msra.mxu0 0
        %2968 = vmatpush.bf16.msra.mxu0 %v2956
        %2969 = vmatpush.bf16.msra.mxu0 %v2955
        %2970 = vmatpush.bf16.msra.mxu0 %v2954
        %2971 = vmatpush.bf16.msra.mxu0 %v2953
        %2972 = vmatpush.bf16.msra.mxu0 %v2952
        %2973 = vmatpush.bf16.msra.mxu0 %v2951
        %2974 = vmatmul.bf16.gmra.mxu0 %v2964
        %v2975 = vpop.f32.mrf.mxu0
        %v2976 = vadd.f32 0.0, %v2975
        %v2977 = vpop.f32.mrf.mxu0
        %2978 = vdwg.mxu0
        %v2979 = vadd.f32 %v2913, %v2976
        %s2980 = scalar_lea.vmem %s7, 48
        %v2981 = vld [vmem:[%s2980] sm:$0xf]
        %v2982 = vld [vmem:[%s2980 + $0x4] sm:$0xf]
        %v2983 = vld [vmem:[%s2980 + $0x8] sm:$0xf]
        %v2984 = vld [vmem:[%s2980 + $0xc] sm:$0xf]
        %v2985 = vld [vmem:[%s2980 + $0x10] sm:$0xf]
        %v2986 = vld [vmem:[%s2980 + $0x14] sm:$0xf]
        %v2987 = vld [vmem:[%s2980 + $0x18] sm:$0xf]
        %v2988 = vld [vmem:[%s2980 + $0x1c] sm:$0xf]
        %v2989 = vld [vmem:[%s2980 + $0x20] sm:$0xf]
        %v2990 = vld [vmem:[%s2980 + $0x24] sm:$0xf]
        %v2991 = vld [vmem:[%s2980 + $0x28] sm:$0xf]
        %v2992 = vld [vmem:[%s2980 + $0x2c] sm:$0xf]
        %v2993 = vshrl.u32 %v2914, 16
        %v3007 = vunpack.c.l.b16 %v2981
        %v3008 = vunpack.c.l.b16 %v2982
        %v3009 = vunpack.c.l.b16 %v2983
        %v3010 = vunpack.c.l.b16 %v2984
        %v3011 = vunpack.c.l.b16 %v2985
        %v3012 = vunpack.c.l.b16 %v2986
        %v3013 = vunpack.c.l.b16 %v2987
        %v3014 = vunpack.c.l.b16 %v2988
        %v3015 = vunpack.c.l.b16 %v2989
        %v3016 = vunpack.c.l.b16 %v2990
        %v3017 = vunpack.c.l.b16 %v2991
        %v3018 = vunpack.c.l.b16 %v2992
        %v3019 = vpack.c.b16 %v3008, %v3007
        %v3020 = vpack.c.b16 %v3010, %v3009
        %v3021 = vpack.c.b16 %v3012, %v3011
        %v3022 = vpack.c.b16 %v3014, %v3013
        %v3023 = vpack.c.b16 %v3016, %v3015
        %v3024 = vpack.c.b16 %v3018, %v3017
        %v3032 = vsel %vm2620, %v2993, 0
        %3034 = vmatpush.bf16.msra.mxu0 0
        %3035 = vmatpush.bf16.msra.mxu0 0
        %3036 = vmatpush.bf16.msra.mxu0 %v3024
        %3037 = vmatpush.bf16.msra.mxu0 %v3023
        %3038 = vmatpush.bf16.msra.mxu0 %v3022
        %3039 = vmatpush.bf16.msra.mxu0 %v3021
        %3040 = vmatpush.bf16.msra.mxu0 %v3020
        %3041 = vmatpush.bf16.msra.mxu0 %v3019
        %3042 = vmatmul.bf16.gmra.mxu0 %v3032
        %v3043 = vpop.f32.mrf.mxu0
        %v3044 = vadd.f32 0.0, %v3043
        %v3045 = vpop.f32.mrf.mxu0
        %3046 = vdwg.mxu0
        %v3047 = vadd.f32 %v2979, %v3044
        %vm3048 = vcmp.gt.f32.partialorder %v3047, 0.0
        %v3049 = vmul.f32 %v3047, 0.1
        %v3050 = vsel %vm3048, %v3047, %v3049
        %v3051 = vld [vmem:[%s9] sm:$0xf]
        %v3052 = vld [vmem:[%s9 + $0x4] sm:$0xf]
        %v3053 = vld [vmem:[%s9 + $0x8] sm:$0xf]
        %v3054 = vld [vmem:[%s9 + $0xc] sm:$0xf]
        %v3055 = vld [vmem:[%s10] sm:$0x1]
        %v3056 = vpack.c.bf16 %v3050, %v3050
        %v3061 = vunpack.c.l.b16 %v3051
        %v3062 = vunpack.c.l.b16 %v3052
        %v3063 = vunpack.c.l.b16 %v3053
        %v3064 = vunpack.c.l.b16 %v3054
        %v3065 = vpack.c.b16 %v3062, %v3061
        %v3066 = vpack.c.b16 %v3064, %v3063
        %vm3069 = vcmask 261120
        %v3071 = vsel %vm3069, %v3056, 0
        %3073 = vmatpush.bf16.msra.mxu0 0
        %3074 = vmatpush.bf16.msra.mxu0 0
        %3075 = vmatpush.bf16.msra.mxu0 0
        %3076 = vmatpush.bf16.msra.mxu0 0
        %3077 = vmatpush.bf16.msra.mxu0 0
        %3078 = vmatpush.bf16.msra.mxu0 0
        %3079 = vmatpush.bf16.msra.mxu0 %v3066
        %3080 = vmatpush.bf16.msra.mxu0 %v3065
        %3081 = vmatmul.bf16.gmra.mxu0 %v3071
        %v3082 = vpop.f32.mrf.mxu0
        %v3083 = vadd.f32 %v3055, %v3082
        %v3084 = vpop.f32.mrf.mxu0
        %3085 = vdwg.mxu0
        %vm3086 = vcmp.gt.f32.partialorder %v3083, 0.0
        %v3087 = vmul.f32 %v3083, 0.1
        %v3088 = vsel %vm3086, %v3083, %v3087
        %v3089 = vld [vmem:[%s11] sm:$0xf]
        %v3090 = vld [vmem:[%s11 + $0x4] sm:$0xf]
        %v3091 = vld [vmem:[%s11 + $0x8] sm:$0xf]
        %v3092 = vld [vmem:[%s11 + $0xc] sm:$0xf]
        %v3093 = vld [vmem:[%s11 + $0x10] sm:$0xf]
        %v3094 = vld [vmem:[%s11 + $0x14] sm:$0xf]
        %v3095 = vld [vmem:[%s11 + $0x18] sm:$0xf]
        %v3096 = vld [vmem:[%s11 + $0x1c] sm:$0xf]
        %v3097 = vld [vmem:[#allocation4] sm:$0x1]
        %v3098 = vpack.c.bf16 %v3088, %v3088
        %v3107 = vunpack.c.l.b16 %v3089
        %v3108 = vunpack.c.l.b16 %v3090
        %v3109 = vunpack.c.l.b16 %v3091
        %v3110 = vunpack.c.l.b16 %v3092
        %v3111 = vunpack.c.l.b16 %v3093
        %v3112 = vunpack.c.l.b16 %v3094
        %v3113 = vunpack.c.l.b16 %v3095
        %v3114 = vunpack.c.l.b16 %v3096
        %v3115 = vpack.c.b16 %v3108, %v3107
        %v3116 = vpack.c.b16 %v3110, %v3109
        %v3117 = vpack.c.b16 %v3112, %v3111
        %v3118 = vpack.c.b16 %v3114, %v3113
        %v3124 = vsel %vm592, %v3098, 0
        %3126 = vmatpush.bf16.msra.mxu0 0
        %3127 = vmatpush.bf16.msra.mxu0 0
        %3128 = vmatpush.bf16.msra.mxu0 0
        %3129 = vmatpush.bf16.msra.mxu0 0
        %3130 = vmatpush.bf16.msra.mxu0 %v3118
        %3131 = vmatpush.bf16.msra.mxu0 %v3117
        %3132 = vmatpush.bf16.msra.mxu0 %v3116
        %3133 = vmatpush.bf16.msra.mxu0 %v3115
        %3134 = vmatmul.bf16.gmra.mxu0 %v3124
        %v3135 = vpop.f32.mrf.mxu0
        %v3136 = vadd.f32 %v3097, %v3135
        %v3137 = vpop.f32.mrf.mxu0
        %3138 = vdwg.mxu0
        %v3139 = vxor.u32 %v3136, 2147483648
        %v3140 = vmul.f32 %v3139, 1.442695
        %v3141 = vpow.pop %v3140
        %v3142 = vadd.f32 %v3141, 1.0
        %v3143 = vrcp.pop %v3142
        %v3144 = vmul.f32 %v3142, %v3143
        %v3145 = vsub.f32 1.0, %v3144
        %v3146 = vmul.f32 %v3143, %v3145
        %v3147 = vadd.f32 %v3143, %v3146
        %vm3148 = vweird.f32 %v3142
        %vm3149 = vweird.f32 %v3143
        %vm3150 = vmor %vm3148, %vm3149
        %v3151 = vsel %vm3150, %v3143, %v3147
        %v3152 = vand.u32 2147483647, %v3142
        %vm3153 = vcmp.eq.f32.partialorder %v3152, 8.507059e+37
        %v3154 = vand.u32 %v3142, 2147483648
        %v3155 = vor.u32 1.1754944e-38, %v3154
        %v3156 = vsel %vm3153, %v3155, %v3151
        %v3157 = vmul.f32 1.0, %v3156
        %vm3158 = vcmask 0
        %3159 = vst.msk [vmem:[%s472] sm:$0x1] %vm3158, %v3157
        %p3160 = scmp.lt.s32.totalorder %s28, 1
        %s3161 = scalar_select %p3160, %s28, 1
        %s3162 = scalar_lea.vmem %s13, %s3161
        // Predicated region
        $region81: #{ribcage_forward.1} parent=71 // pred_check
          %p3163 = pneg %p324
        $region82: #{ribcage_forward.1} parent=71 // pred_check_branch
          %3165 = sbr.rel (%p3163) target = $region84
        $region83: #{ribcage_forward.1} parent=71 // pred_region
          _
        $region84: #{ribcage_forward.1} parent=71 // pred_fallthru
          _
      $region72: #{ribcage_forward.1} parent=5 // pred_fallthru
        _
      %p3166 = scmp.le.s32.totalorder 2, %s23
      // Predicated region
      $region85: #{ribcage_forward.1} parent=5 // pred_check
        %p3167 = pneg %p3166
      $region86: #{ribcage_forward.1} parent=5 // pred_check_branch
        %3169 = sbr.rel (%p3167) target = $region88
      $region87: #{ribcage_forward.1} parent=5 // pred_region
        %s3170 = ssub.s32 %s23, 2
        // Predicated region
        $region89: #{ribcage_forward.1} parent=87 // pred_check
          %p3171 = pneg %p330
        $region90: #{ribcage_forward.1} parent=87 // pred_check_branch
          %3173 = sbr.rel (%p3171) target = $region92
        $region91: #{ribcage_forward.1} parent=87 // pred_region
          %p3174 = scmp.lt.s32.totalorder %s29, 1
          %s3175 = scalar_select %p3174, %s29, 1
          %s3176 = scalar_lea.vmem %s13, %s3175
        $region92: #{ribcage_forward.1} parent=87 // pred_fallthru
          _
      $region88: #{ribcage_forward.1} parent=5 // pred_fallthru
        _
    $region6: #{ribcage_forward.1} parent=1 // loop_footer
      %s27 = sadd.s32 1, %s23
    $region7: #{ribcage_forward.1} parent=1 // loop_footer_branch
      %22 = sbr.rel target = $region3
    $region8: #{ribcage_forward.1} parent=1 // loop_exit
      _
    %3177 = vsyncpa [#allocation6], 1
    %s3178 = scalar_lea.sflag [#allocation6], 1
    %3179 = vsyncpa %s3178, 1
    %3180 = vsyncpa [#allocation8], 1

</llo_original>
